<compile_context>
chip_gen: v7x
topology: tpu7x:2x2x1
jax: 0.10.0
libtpu: 0.0.40
codegen_flags: <defaults>
</compile_context>

<pallas_src>
import jax
import jax.numpy as jnp
import numpy as np
from jax import lax
from jax.experimental import pallas as pl
from jax.experimental.pallas import tpu as pltpu

D_STATE = 16
D_CONV = 4
EXPAND = 2
LN_EPS = 1e-5
SUB = 8           # tokens per inner scan step (sublane quantum)


def _silu(x):
    return x * jax.nn.sigmoid(x)


def _softplus(x):
    return jnp.maximum(x, 0.0) + jnp.log(1.0 + jnp.exp(-jnp.abs(x)))


def _dt_rank(d_model):
    return max(1, (d_model + 15) // 16)   # math.ceil(d_model / 16)


def _pick_chunk(L, max_chunk=512):
    assert L % SUB == 0, "token count must be a multiple of 8"
    if L <= max_chunk:
        return L                     # single chunk: block == full dim is always legal
    c = (max_chunk // 128) * 128     # chunk is the lane dim of the in/out blocks
    while c >= 128:
        if L % c == 0:
            return c
        c -= 128
    return L                         # fallback: one chunk covering everything


def _make_kernel(chunk, d_model, d_inner, d_state, d_conv):
    num_sub = chunk // SUB
    base = 8 - (d_conv - 1)   # offset of the first conv tap inside the padded slab

    def kernel(x_ref, ln_g_ref, ln_b_ref, w_in_ref, conv_wt_ref, conv_b_ref,
               w_dt_ref, b_dt_ref, w_bc_ref, a_log_t_ref, d_skip_ref, w_out_t_ref,
               o_ref,
               h_ref, tail_ref, u_ref, z_ref, dy_ref, bc_ref):
        c_idx = pl.program_id(1)

        # ---- new batch element: reset carried SSM state and conv tail ----
        @pl.when(c_idx == 0)
        def _():
            h_ref[...] = jnp.zeros_like(h_ref)
            tail_ref[...] = jnp.zeros_like(tail_ref)

        # ---- lane-dense input block: (d_model, chunk) ----
        xt = x_ref[0].astype(jnp.float32)

        # ---- LayerNorm over the feature (sublane) dim (eps=1e-5, affine) ----
        mean = jnp.mean(xt, axis=0, keepdims=True)
        var = jnp.mean(jnp.square(xt - mean), axis=0, keepdims=True)
        xn = (xt - mean) * lax.rsqrt(var + LN_EPS)
        xn = xn * ln_g_ref[...] + ln_b_ref[...]          # (d_model,1) broadcast over lanes

        # ---- in_proj: bf16 trans-A matmul turns (d_model, chunk) into (chunk, 2*d_inner) ----
        xz = lax.dot_general(xn.astype(jnp.bfloat16), w_in_ref[...],
                             (((0,), (0,)), ((), ())),
                             preferred_element_type=jnp.float32)
        x_in = xz[:, :d_inner]                            # (chunk, d_inner)
        z_ref[...] = xz[:, d_inner:]                      # gate kept in scratch

        # ---- causal depthwise conv1d + SiLU (tail carried across chunks) ----
        xpad = jnp.concatenate([tail_ref[...], x_in], axis=0)     # (chunk+8, d_inner)
        conv_w = conv_wt_ref[...]                                  # (d_conv, d_inner)
        conv_out = conv_b_ref[...] + lax.slice(
            xpad, (base, 0), (base + chunk, d_inner)) * conv_w[0:1, :]
        for k in range(1, d_conv):
            conv_out = conv_out + lax.slice(
                xpad, (base + k, 0), (base + k + chunk, d_inner)) * conv_w[k:k + 1, :]
        u = _silu(conv_out)                                        # (chunk, d_inner)
        u_ref[...] = u
        tail_ref[...] = x_in[chunk - 8:, :]                        # aligned 8-row tail

        u_bf = u.astype(jnp.bfloat16)

        # ---- delta: fused (x_proj_dt @ dt_proj) bf16 matmul + softplus ----
        dt = jnp.dot(u_bf, w_dt_ref[...],
                     preferred_element_type=jnp.float32) + b_dt_ref[...]
        dy_ref[...] = _softplus(dt)                                # (chunk, d_inner)

        # ---- B|C: dedicated bf16 matmul, written directly (no unaligned slice) ----
        bc_ref[...] = jnp.dot(u_bf, w_bc_ref[...],
                              preferred_element_type=jnp.float32)  # (chunk, 2*d_state)

        a_t = -jnp.exp(a_log_t_ref[...])                           # (d_state, d_inner)

        # identity used to transpose (SUB, 2*d_state) tiles on the MXU (once / 8 tokens)
        rows = lax.broadcasted_iota(jnp.int32, (SUB, SUB), 0)
        cols = lax.broadcasted_iota(jnp.int32, (SUB, SUB), 1)
        eye_sub = jnp.where(rows == cols, 1.0, 0.0).astype(jnp.float32)

        # ---- chunked selective scan: SUB tokens per iteration, h carried in vregs ----
        def body(s, h):
            t0 = pl.multiple_of(s * SUB, SUB)
            dl = dy_ref[pl.ds(t0, SUB), :]                      # (SUB, d_inner) delta
            ut = u_ref[pl.ds(t0, SUB), :]                       # (SUB, d_inner)
            du = dl * ut
            bc = bc_ref[pl.ds(t0, SUB), :]                      # (SUB, 2*d_state)
            bcT = lax.dot_general(bc, eye_sub, (((0,), (0,)), ((), ())),
                                  preferred_element_type=jnp.float32)  # (2*d_state, SUB)
            ys = []
            for i in range(SUB):                                # unrolled, static
                d_a = jnp.exp(dl[i:i + 1, :] * a_t)             # (d_state, d_inner)
                b_col = bcT[0:d_state, i:i + 1]                 # (d_state, 1)
                c_col = bcT[d_state:2 * d_state, i:i + 1]       # (d_state, 1)
                h = d_a * h + b_col * du[i:i + 1, :]            # rank-1 update on VPU
                ys.append(jnp.sum(c_col * h, axis=0, keepdims=True))  # sublane reduce
            dy_ref[pl.ds(t0, SUB), :] = jnp.concatenate(ys, axis=0)   # aligned 8-row store
            return h

        h = lax.fori_loop(0, num_sub, body, h_ref[...])
        h_ref[...] = h                                          # carry across chunks

        # ---- D skip, SiLU(z) gate, lane-dense out_proj ----
        y = dy_ref[...] + u_ref[...] * d_skip_ref[...]
        y = y * _silu(z_ref[...])
        # (d_model, chunk) = W_out^T (stored as (d_model, d_inner)) contracted with y on d_inner
        out_t = lax.dot_general(w_out_t_ref[...], y.astype(jnp.bfloat16),
                                (((1,), (1,)), ((), ())),
                                preferred_element_type=jnp.float32)
        o_ref[0] = out_t.astype(o_ref.dtype)

    return kernel


def mamba_block_forward(x_nchw, params, max_chunk=512):
    B, C, H, W = x_nchw.shape
    L = H * W
    d_model = C
    d_inner = EXPAND * d_model
    d_state = D_STATE
    d_conv = D_CONV
    chunk = _pick_chunk(L, max_chunk)
    num_chunks = L // chunk

    # lane-dense tokens: (B, d_model, L) — no HBM transpose, just a free reshape
    x_flat = x_nchw.reshape(B, C, L).astype(jnp.float32)

    kernel = _make_kernel(chunk, d_model, d_inner, d_state, d_conv)

    def rep(shape):
        nd = len(shape)
        return pl.BlockSpec(shape, lambda b, c, _nd=nd: (0,) * _nd)

    grid_spec = pltpu.PrefetchScalarGridSpec(
        num_scalar_prefetch=0,
        grid=(B, num_chunks),
        in_specs=[
            pl.BlockSpec((1, d_model, chunk), lambda b, c: (b, 0, c)),  # tokens (lane-dense)
            rep((d_model, 1)),                                   # ln gamma (per-sublane)
            rep((d_model, 1)),                                   # ln beta
            rep((d_model, 2 * d_inner)),                         # in_proj W^T (bf16)
            rep((d_conv, d_inner)),                              # conv weight (k, d)
            rep((1, d_inner)),                                   # conv bias
            rep((d_inner, d_inner)),                             # fused dt matrix (bf16)
            rep((1, d_inner)),                                   # dt_proj bias
            rep((d_inner, 2 * d_state)),                         # x_proj B|C slice (bf16)
            rep((d_state, d_inner)),                             # A_log^T
            rep((1, d_inner)),                                   # D
            rep((d_model, d_inner)),                             # out_proj W (transposed, bf16)
        ],
        out_specs=pl.BlockSpec((1, d_model, chunk), lambda b, c: (b, 0, c)),
        scratch_shapes=[
            pltpu.VMEM((d_state, d_inner), jnp.float32),         # h (carried)
            pltpu.VMEM((8, d_inner), jnp.float32),               # conv tail (carried)
            pltpu.VMEM((chunk, d_inner), jnp.float32),           # u
            pltpu.VMEM((chunk, d_inner), jnp.float32),           # z
            pltpu.VMEM((chunk, d_inner), jnp.float32),           # delta -> y (reused)
            pltpu.VMEM((chunk, 2 * d_state), jnp.float32),       # [B | C]
        ],
    )

    out_flat = pl.pallas_call(
        kernel,
        out_shape=jax.ShapeDtypeStruct((B, d_model, L), jnp.float32),
        grid_spec=grid_spec,
        compiler_params=pltpu.CompilerParams(
            dimension_semantics=("parallel", "arbitrary"),
            vmem_limit_bytes=48 * 1024 * 1024),
    )(x_flat,
      params["ln_g"], params["ln_b"], params["w_in"], params["conv_wt"],
      params["conv_b"], params["w_dt_fused"], params["b_dt"], params["w_x_bc"],
      params["a_log_t"], params["d_skip"], params["w_out_t"])

    return out_flat.reshape(B, C, H, W)


def init_params(key, d_model):
    d_inner = EXPAND * d_model
    d_state = D_STATE
    d_conv = D_CONV
    dt_rank = _dt_rank(d_model)
    ks = jax.random.split(key, 8)

    w_in = 0.2 * jax.random.normal(ks[0], (d_model, 2 * d_inner), jnp.float32)
    w_x_dt = 0.2 * jax.random.normal(ks[3], (d_inner, dt_rank), jnp.float32)
    w_x_bc = 0.2 * jax.random.normal(ks[7], (d_inner, 2 * d_state), jnp.float32)
    w_dt = 0.5 * jax.random.normal(ks[4], (dt_rank, d_inner), jnp.float32)
    w_out = 0.2 * jax.random.normal(ks[6], (d_inner, d_model), jnp.float32)

    return {
        "ln_g": jnp.ones((d_model, 1), jnp.float32),
        "ln_b": jnp.zeros((d_model, 1), jnp.float32),
        "w_in": w_in.astype(jnp.bfloat16),
        "conv_wt": 0.3 * jax.random.normal(ks[1], (d_conv, d_inner), jnp.float32),
        "conv_b": 0.1 * jax.random.normal(ks[2], (1, d_inner), jnp.float32),
        # dt path of x_proj fused with dt_proj (linear maps compose; exact same math)
        "w_dt_fused": (w_x_dt @ w_dt).astype(jnp.bfloat16),
        "b_dt": 0.1 * jax.random.normal(ks[5], (1, d_inner), jnp.float32),
        "w_x_bc": w_x_bc.astype(jnp.bfloat16),
        # mamba_ssm init: A = arange(1, d_state+1) repeated over d_inner; stored transposed.
        "a_log_t": jnp.log(jnp.tile(
            jnp.arange(1, d_state + 1, dtype=jnp.float32)[:, None], (1, d_inner))),
        "d_skip": jnp.ones((1, d_inner), jnp.float32),
        "w_out_t": w_out.T.astype(jnp.bfloat16),
    }


def mamba_block_reference(x_nchw, p):
    """Pure-JAX reference reproducing the same math (bf16 projections, fp32 scan)."""
    B, C, H, W = x_nchw.shape
    L = H * W
    d_inner = EXPAND * C
    d_state = D_STATE
    d_conv = D_CONV

    t = jnp.transpose(x_nchw.reshape(B, C, L), (0, 2, 1)).astype(jnp.float32)  # (B,L,C)
    mean = t.mean(-1, keepdims=True)
    var = jnp.square(t - mean).mean(-1, keepdims=True)
    xn = (t - mean) / jnp.sqrt(var + LN_EPS) * p["ln_g"][:, 0] + p["ln_b"][:, 0]

    xz = jnp.dot(xn.astype(jnp.bfloat16), p["w_in"], preferred_element_type=jnp.float32)
    x_in, z = xz[..., :d_inner], xz[..., d_inner:]
    x_pad = jnp.pad(x_in, ((0, 0), (d_conv - 1, 0), (0, 0)))
    conv = sum(x_pad[:, k:k + L, :] * p["conv_wt"][k] for k in range(d_conv))
    conv = conv + p["conv_b"][0]
    u = conv * jax.nn.sigmoid(conv)

    u_bf = u.astype(jnp.bfloat16)
    delta = _softplus(jnp.dot(u_bf, p["w_dt_fused"],
                              preferred_element_type=jnp.float32) + p["b_dt"][0])
    bc = jnp.dot(u_bf, p["w_x_bc"], preferred_element_type=jnp.float32)
    bmat, cmat = bc[..., :d_state], bc[..., d_state:]

    a = -jnp.exp(p["a_log_t"]).T                                 # (d_inner, d_state)

    def step(h, inp):
        dl, ut, bt, ct = inp
        d_a = jnp.exp(dl[..., None] * a[None])
        h = d_a * h + (dl * ut)[..., None] * bt[:, None, :]
        y = jnp.einsum("bdn,bn->bd", h, ct)
        return h, y

    h0 = jnp.zeros((B, d_inner, d_state), jnp.float32)
    _, ys = lax.scan(step, h0,
                     (jnp.swapaxes(delta, 0, 1), jnp.swapaxes(u, 0, 1),
                      jnp.swapaxes(bmat, 0, 1), jnp.swapaxes(cmat, 0, 1)))
    y = jnp.swapaxes(ys, 0, 1)
    y = y + u * p["d_skip"][0]
    y = y * (z * jax.nn.sigmoid(z))
    out = jnp.einsum("bld,cd->blc", y.astype(jnp.bfloat16), p["w_out_t"],
                     preferred_element_type=jnp.float32)
    return jnp.transpose(out, (0, 2, 1)).reshape(B, C, H, W)


if __name__ == "__main__":
    key = jax.random.PRNGKey(0)
    k_x, k_p = jax.random.split(key)
    B, C, H, W = 2, 4, 16, 16
    x = jax.random.normal(k_x, (B, C, H, W), jnp.float32)
    params = init_params(k_p, C)

    out = jax.block_until_ready(mamba_block_forward(x, params))
    ref = jax.block_until_ready(mamba_block_reference(x, params))
    np.testing.assert_allclose(np.asarray(out), np.asarray(ref), rtol=5e-3, atol=5e-3)

    print("KERNEL_OK")
</pallas_src>

<mosaic_0001>
module attributes {stable_mosaic.version = 11 : i64} {
  func.func @kernel(%arg0: i32, %arg1: i32, %arg2: memref<1x4x256xf32, #tpu.memory_space<vmem>>, %arg3: memref<4x1xf32, #tpu.memory_space<vmem>>, %arg4: memref<4x1xf32, #tpu.memory_space<vmem>>, %arg5: memref<4x16xbf16, #tpu.memory_space<vmem>>, %arg6: memref<4x8xf32, #tpu.memory_space<vmem>>, %arg7: memref<1x8xf32, #tpu.memory_space<vmem>>, %arg8: memref<8x8xbf16, #tpu.memory_space<vmem>>, %arg9: memref<1x8xf32, #tpu.memory_space<vmem>>, %arg10: memref<8x32xbf16, #tpu.memory_space<vmem>>, %arg11: memref<16x8xf32, #tpu.memory_space<vmem>>, %arg12: memref<1x8xf32, #tpu.memory_space<vmem>>, %arg13: memref<4x8xbf16, #tpu.memory_space<vmem>>, %arg14: memref<1x4x256xf32, #tpu.memory_space<vmem>>, %arg15: memref<16x8xf32, #tpu.memory_space<vmem>>, %arg16: memref<8x8xf32, #tpu.memory_space<vmem>>, %arg17: memref<256x8xf32, #tpu.memory_space<vmem>>, %arg18: memref<256x8xf32, #tpu.memory_space<vmem>>, %arg19: memref<256x8xf32, #tpu.memory_space<vmem>>, %arg20: memref<256x32xf32, #tpu.memory_space<vmem>>) attributes {dimension_semantics = [#tpu.dimension_semantics<parallel>, #tpu.dimension_semantics<arbitrary>], iteration_bounds = array<i64: 2, 1>, scalar_prefetch = 0 : i64, scratch_operands = 6 : i64, tpu.core_type = #tpu.core_type<tc>, window_params = [{transform_indices = @transform_0, window_bounds = array<i64: 1, 4, 256>}, {pipeline_mode = #tpu.pipeline_mode<synchronous>, transform_indices = @transform_1, window_bounds = array<i64: 4, 1>}, {pipeline_mode = #tpu.pipeline_mode<synchronous>, transform_indices = @transform_2, window_bounds = array<i64: 4, 1>}, {pipeline_mode = #tpu.pipeline_mode<synchronous>, transform_indices = @transform_3, window_bounds = array<i64: 4, 16>}, {pipeline_mode = #tpu.pipeline_mode<synchronous>, transform_indices = @transform_4, window_bounds = array<i64: 4, 8>}, {pipeline_mode = #tpu.pipeline_mode<synchronous>, transform_indices = @transform_5, window_bounds = array<i64: 1, 8>}, {pipeline_mode = #tpu.pipeline_mode<synchronous>, transform_indices = @transform_6, window_bounds = array<i64: 8, 8>}, {pipeline_mode = #tpu.pipeline_mode<synchronous>, transform_indices = @transform_7, window_bounds = array<i64: 1, 8>}, {pipeline_mode = #tpu.pipeline_mode<synchronous>, transform_indices = @transform_8, window_bounds = array<i64: 8, 32>}, {pipeline_mode = #tpu.pipeline_mode<synchronous>, transform_indices = @transform_9, window_bounds = array<i64: 16, 8>}, {pipeline_mode = #tpu.pipeline_mode<synchronous>, transform_indices = @transform_10, window_bounds = array<i64: 1, 8>}, {pipeline_mode = #tpu.pipeline_mode<synchronous>, transform_indices = @transform_11, window_bounds = array<i64: 4, 8>}, {transform_indices = @transform_12, window_bounds = array<i64: 1, 4, 256>}]} {
    %c0_i32 = arith.constant 0 : i32
    %0 = arith.cmpi eq, %arg1, %c0_i32 : i32
    %1 = arith.extui %0 : i1 to i32
    %c0_i32_0 = arith.constant 0 : i32
    %2 = arith.cmpi ne, %1, %c0_i32_0 : i32
    scf.if %2 {
      %cst_68 = arith.constant 0.000000e+00 : f32
      %123 = vector.broadcast %cst_68 : f32 to vector<16x8xf32>
      %c0_69 = arith.constant 0 : index
      %c0_70 = arith.constant 0 : index
      %124 = vector.load %arg15[%c0_69, %c0_70] : memref<16x8xf32, #tpu.memory_space<vmem>>, vector<16x8xf32>
      tpu.vector_store %arg15[%c0_69, %c0_70], %123 {strides = array<i32>} : memref<16x8xf32, #tpu.memory_space<vmem>>, vector<16x8xf32>,
      %cst_71 = arith.constant 0.000000e+00 : f32
      %125 = vector.broadcast %cst_71 : f32 to vector<8x8xf32>
      %c0_72 = arith.constant 0 : index
      %c0_73 = arith.constant 0 : index
      %126 = vector.load %arg16[%c0_72, %c0_73] : memref<8x8xf32, #tpu.memory_space<vmem>>, vector<8x8xf32>
      tpu.vector_store %arg16[%c0_72, %c0_73], %125 {strides = array<i32>} : memref<8x8xf32, #tpu.memory_space<vmem>>, vector<8x8xf32>,
    } else {
    }
    %c0 = arith.constant 0 : index
    %c0_1 = arith.constant 0 : index
    %c0_2 = arith.constant 0 : index
    %3 = vector.load %arg2[%c0, %c0_1, %c0_2] : memref<1x4x256xf32, #tpu.memory_space<vmem>>, vector<1x4x256xf32>
    %4 = vector.shape_cast %3 : vector<1x4x256xf32> to vector<4x256xf32>
    %cst = arith.constant dense<0.000000e+00> : vector<256xf32>
    %5 = vector.multi_reduction <add>, %4, %cst [0] : vector<4x256xf32> to vector<256xf32>
    %6 = vector.shape_cast %5 : vector<256xf32> to vector<1x256xf32>
    %cst_3 = arith.constant 4.000000e+00 : f32
    %7 = vector.broadcast %cst_3 : f32 to vector<1x256xf32>
    %8 = arith.divf %6, %7 : vector<1x256xf32>
    %9 = vector.broadcast %8 : vector<1x256xf32> to vector<4x256xf32>
    %10 = arith.subf %4, %9 : vector<4x256xf32>
    %11 = arith.mulf %10, %10 : vector<4x256xf32>
    %cst_4 = arith.constant dense<0.000000e+00> : vector<256xf32>
    %12 = vector.multi_reduction <add>, %11, %cst_4 [0] : vector<4x256xf32> to vector<256xf32>
    %13 = vector.shape_cast %12 : vector<256xf32> to vector<1x256xf32>
    %cst_5 = arith.constant 4.000000e+00 : f32
    %14 = vector.broadcast %cst_5 : f32 to vector<1x256xf32>
    %15 = arith.divf %13, %14 : vector<1x256xf32>
    %16 = vector.broadcast %8 : vector<1x256xf32> to vector<4x256xf32>
    %17 = arith.subf %4, %16 : vector<4x256xf32>
    %cst_6 = arith.constant 9.99999974E-6 : f32
    %18 = vector.broadcast %cst_6 : f32 to vector<1x256xf32>
    %19 = arith.addf %15, %18 : vector<1x256xf32>
    %20 = math.rsqrt %19 : vector<1x256xf32>
    %21 = vector.broadcast %20 : vector<1x256xf32> to vector<4x256xf32>
    %22 = arith.mulf %17, %21 : vector<4x256xf32>
    %c0_7 = arith.constant 0 : index
    %c0_8 = arith.constant 0 : index
    %23 = vector.load %arg3[%c0_7, %c0_8] : memref<4x1xf32, #tpu.memory_space<vmem>>, vector<4x1xf32>
    %24 = vector.broadcast %23 : vector<4x1xf32> to vector<4x256xf32>
    %25 = arith.mulf %22, %24 : vector<4x256xf32>
    %c0_9 = arith.constant 0 : index
    %c0_10 = arith.constant 0 : index
    %26 = vector.load %arg4[%c0_9, %c0_10] : memref<4x1xf32, #tpu.memory_space<vmem>>, vector<4x1xf32>
    %27 = vector.broadcast %26 : vector<4x1xf32> to vector<4x256xf32>
    %28 = arith.addf %25, %27 : vector<4x256xf32>
    %29 = arith.truncf %28 : vector<4x256xf32> to vector<4x256xbf16>
    %c0_11 = arith.constant 0 : index
    %c0_12 = arith.constant 0 : index
    %30 = vector.load %arg5[%c0_11, %c0_12] : memref<4x16xbf16, #tpu.memory_space<vmem>>, vector<4x16xbf16>
    %cst_13 = arith.constant dense<0.000000e+00> : vector<256x16xf32>
    %31 = tpu.matmul %29, %30, %cst_13 {dimension_numbers = #tpu.dot_dimension_numbers<[0], [0], [1], [1], [0, 1, 1, 1], [], []>} : vector<4x256xbf16>, vector<4x16xbf16>, vector<256x16xf32> -> vector<256x16xf32>
    %32 = vector.extract_strided_slice %31 {offsets = [0, 0], sizes = [256, 8], strides = [1, 1]} : vector<256x16xf32> to vector<256x8xf32>
    %33 = vector.extract_strided_slice %31 {offsets = [0, 8], sizes = [256, 8], strides = [1, 1]} : vector<256x16xf32> to vector<256x8xf32>
    %c0_14 = arith.constant 0 : index
    %c0_15 = arith.constant 0 : index
    %34 = vector.load %arg18[%c0_14, %c0_15] : memref<256x8xf32, #tpu.memory_space<vmem>>, vector<256x8xf32>
    tpu.vector_store %arg18[%c0_14, %c0_15], %33 {strides = array<i32>} : memref<256x8xf32, #tpu.memory_space<vmem>>, vector<256x8xf32>,
    %c0_16 = arith.constant 0 : index
    %c0_17 = arith.constant 0 : index
    %35 = vector.load %arg16[%c0_16, %c0_17] : memref<8x8xf32, #tpu.memory_space<vmem>>, vector<8x8xf32>
    %36 = tpu.concatenate %35, %32 in 0 : vector<8x8xf32>, vector<256x8xf32> -> vector<264x8xf32>
    %c0_18 = arith.constant 0 : index
    %c0_19 = arith.constant 0 : index
    %37 = vector.load %arg6[%c0_18, %c0_19] : memref<4x8xf32, #tpu.memory_space<vmem>>, vector<4x8xf32>
    %c0_20 = arith.constant 0 : index
    %c0_21 = arith.constant 0 : index
    %38 = vector.load %arg7[%c0_20, %c0_21] : memref<1x8xf32, #tpu.memory_space<vmem>>, vector<1x8xf32>
    %39 = vector.extract_strided_slice %36 {offsets = [5, 0], sizes = [256, 8], strides = [1, 1]} : vector<264x8xf32> to vector<256x8xf32>
    %40 = vector.extract_strided_slice %37 {offsets = [0, 0], sizes = [1, 8], strides = [1, 1]} : vector<4x8xf32> to vector<1x8xf32>
    %41 = vector.broadcast %40 : vector<1x8xf32> to vector<256x8xf32>
    %42 = arith.mulf %39, %41 : vector<256x8xf32>
    %43 = vector.broadcast %38 : vector<1x8xf32> to vector<256x8xf32>
    %44 = arith.addf %43, %42 : vector<256x8xf32>
    %45 = vector.extract_strided_slice %36 {offsets = [6, 0], sizes = [256, 8], strides = [1, 1]} : vector<264x8xf32> to vector<256x8xf32>
    %46 = vector.extract_strided_slice %37 {offsets = [1, 0], sizes = [1, 8], strides = [1, 1]} : vector<4x8xf32> to vector<1x8xf32>
    %47 = vector.broadcast %46 : vector<1x8xf32> to vector<256x8xf32>
    %48 = arith.mulf %45, %47 : vector<256x8xf32>
    %49 = arith.addf %44, %48 : vector<256x8xf32>
    %50 = vector.extract_strided_slice %36 {offsets = [7, 0], sizes = [256, 8], strides = [1, 1]} : vector<264x8xf32> to vector<256x8xf32>
    %51 = vector.extract_strided_slice %37 {offsets = [2, 0], sizes = [1, 8], strides = [1, 1]} : vector<4x8xf32> to vector<1x8xf32>
    %52 = vector.broadcast %51 : vector<1x8xf32> to vector<256x8xf32>
    %53 = arith.mulf %50, %52 : vector<256x8xf32>
    %54 = arith.addf %49, %53 : vector<256x8xf32>
    %55 = vector.extract_strided_slice %36 {offsets = [8, 0], sizes = [256, 8], strides = [1, 1]} : vector<264x8xf32> to vector<256x8xf32>
    %56 = vector.extract_strided_slice %37 {offsets = [3, 0], sizes = [1, 8], strides = [1, 1]} : vector<4x8xf32> to vector<1x8xf32>
    %57 = vector.broadcast %56 : vector<1x8xf32> to vector<256x8xf32>
    %58 = arith.mulf %55, %57 : vector<256x8xf32>
    %59 = arith.addf %54, %58 : vector<256x8xf32>
    %60 = arith.negf %59 : vector<256x8xf32>
    %61 = math.exp %60 : vector<256x8xf32>
    %cst_22 = arith.constant 1.000000e+00 : f32
    %62 = vector.broadcast %cst_22 : f32 to vector<256x8xf32>
    %63 = arith.addf %62, %61 : vector<256x8xf32>
    %64 = arith.divf %62, %63 : vector<256x8xf32>
    %65 = arith.mulf %59, %64 : vector<256x8xf32>
    %c0_23 = arith.constant 0 : index
    %c0_24 = arith.constant 0 : index
    %66 = vector.load %arg17[%c0_23, %c0_24] : memref<256x8xf32, #tpu.memory_space<vmem>>, vector<256x8xf32>
    tpu.vector_store %arg17[%c0_23, %c0_24], %65 {strides = array<i32>} : memref<256x8xf32, #tpu.memory_space<vmem>>, vector<256x8xf32>,
    %67 = vector.extract_strided_slice %32 {offsets = [248, 0], sizes = [8, 8], strides = [1, 1]} : vector<256x8xf32> to vector<8x8xf32>
    %c0_25 = arith.constant 0 : index
    %c0_26 = arith.constant 0 : index
    %68 = vector.load %arg16[%c0_25, %c0_26] : memref<8x8xf32, #tpu.memory_space<vmem>>, vector<8x8xf32>
    tpu.vector_store %arg16[%c0_25, %c0_26], %67 {strides = array<i32>} : memref<8x8xf32, #tpu.memory_space<vmem>>, vector<8x8xf32>,
    %69 = arith.truncf %65 : vector<256x8xf32> to vector<256x8xbf16>
    %c0_27 = arith.constant 0 : index
    %c0_28 = arith.constant 0 : index
    %70 = vector.load %arg8[%c0_27, %c0_28] : memref<8x8xbf16, #tpu.memory_space<vmem>>, vector<8x8xbf16>
    %cst_29 = arith.constant dense<0.000000e+00> : vector<256x8xf32>
    %71 = tpu.matmul %69, %70, %cst_29 {dimension_numbers = #tpu.dot_dimension_numbers<[1], [0], [0], [1], [0, 0, 1, 1], [], []>} : vector<256x8xbf16>, vector<8x8xbf16>, vector<256x8xf32> -> vector<256x8xf32>
    %c0_30 = arith.constant 0 : index
    %c0_31 = arith.constant 0 : index
    %72 = vector.load %arg9[%c0_30, %c0_31] : memref<1x8xf32, #tpu.memory_space<vmem>>, vector<1x8xf32>
    %73 = vector.broadcast %72 : vector<1x8xf32> to vector<256x8xf32>
    %74 = arith.addf %71, %73 : vector<256x8xf32>
    %cst_32 = arith.constant 0.000000e+00 : f32
    %75 = vector.broadcast %cst_32 : f32 to vector<256x8xf32>
    %76 = arith.maximumf %74, %75 : vector<256x8xf32>
    %77 = math.absf %74 : vector<256x8xf32>
    %cst_33 = arith.constant 0.000000e+00 : f32
    %78 = vector.broadcast %cst_33 : f32 to vector<256x8xf32>
    %79 = arith.subf %78, %77 : vector<256x8xf32>
    %80 = math.exp %79 : vector<256x8xf32>
    %cst_34 = arith.constant 1.000000e+00 : f32
    %81 = vector.broadcast %cst_34 : f32 to vector<256x8xf32>
    %82 = arith.addf %81, %80 : vector<256x8xf32>
    %83 = math.log %82 : vector<256x8xf32>
    %84 = arith.addf %76, %83 : vector<256x8xf32>
    %c0_35 = arith.constant 0 : index
    %c0_36 = arith.constant 0 : index
    %85 = vector.load %arg19[%c0_35, %c0_36] : memref<256x8xf32, #tpu.memory_space<vmem>>, vector<256x8xf32>
    tpu.vector_store %arg19[%c0_35, %c0_36], %84 {strides = array<i32>} : memref<256x8xf32, #tpu.memory_space<vmem>>, vector<256x8xf32>,
    %c0_37 = arith.constant 0 : index
    %c0_38 = arith.constant 0 : index
    %86 = vector.load %arg10[%c0_37, %c0_38] : memref<8x32xbf16, #tpu.memory_space<vmem>>, vector<8x32xbf16>
    %cst_39 = arith.constant dense<0.000000e+00> : vector<256x32xf32>
    %87 = tpu.matmul %69, %86, %cst_39 {dimension_numbers = #tpu.dot_dimension_numbers<[1], [0], [0], [1], [0, 0, 1, 1], [], []>} : vector<256x8xbf16>, vector<8x32xbf16>, vector<256x32xf32> -> vector<256x32xf32>
    %c0_40 = arith.constant 0 : index
    %c0_41 = arith.constant 0 : index
    %88 = vector.load %arg20[%c0_40, %c0_41] : memref<256x32xf32, #tpu.memory_space<vmem>>, vector<256x32xf32>
    tpu.vector_store %arg20[%c0_40, %c0_41], %87 {strides = array<i32>} : memref<256x32xf32, #tpu.memory_space<vmem>>, vector<256x32xf32>,
    %c0_42 = arith.constant 0 : index
    %c0_43 = arith.constant 0 : index
    %89 = vector.load %arg11[%c0_42, %c0_43] : memref<16x8xf32, #tpu.memory_space<vmem>>, vector<16x8xf32>
    %90 = math.exp %89 : vector<16x8xf32>
    %cst_44 = arith.constant 0.000000e+00 : f32
    %91 = vector.broadcast %cst_44 : f32 to vector<16x8xf32>
    %92 = arith.subf %91, %90 : vector<16x8xf32>
    %93 = tpu.iota {dimensions = array<i32: 0>} : vector<8x8xi32>
    %94 = tpu.iota {dimensions = array<i32: 1>} : vector<8x8xi32>
    %95 = arith.cmpi eq, %93, %94 : vector<8x8xi32>
    %cst_45 = arith.constant 1.000000e+00 : f32
    %cst_46 = arith.constant 0.000000e+00 : f32
    %96 = vector.broadcast %cst_45 : f32 to vector<8x8xf32>
    %97 = vector.broadcast %cst_46 : f32 to vector<8x8xf32>
    %98 = arith.select %95, %96, %97 : vector<8x8xi1>, vector<8x8xf32>
    %c0_47 = arith.constant 0 : index
    %c0_48 = arith.constant 0 : index
    %99 = vector.load %arg15[%c0_47, %c0_48] : memref<16x8xf32, #tpu.memory_space<vmem>>, vector<16x8xf32>
    %c0_i32_49 = arith.constant 0 : i32
    %c32_i32 = arith.constant 32 : i32
    %100 = arith.addi %c0_i32_49, %c32_i32 : i32
    %c1_i32 = arith.constant 1 : i32
    %101 = scf.for %arg21 = %c0_i32_49 to %100 step %c1_i32 iter_args(%arg22 = %99) -> (vector<16x8xf32>)  : i32 {
      %c8_i32 = arith.constant 8 : i32
      %123 = arith.muli %arg21, %c8_i32 : i32
      %124 = tpu.assume_multiple %123, 8 : i32
      %125 = arith.index_cast %124 : i32 to index
      %c0_68 = arith.constant 0 : index
      %126 = vector.load %arg19[%125, %c0_68] : memref<256x8xf32, #tpu.memory_space<vmem>>, vector<8x8xf32>
      %127 = arith.index_cast %124 : i32 to index
      %c0_69 = arith.constant 0 : index
      %128 = vector.load %arg17[%127, %c0_69] : memref<256x8xf32, #tpu.memory_space<vmem>>, vector<8x8xf32>
      %129 = arith.mulf %126, %128 : vector<8x8xf32>
      %130 = arith.index_cast %124 : i32 to index
      %c0_70 = arith.constant 0 : index
      %131 = vector.load %arg20[%130, %c0_70] : memref<256x32xf32, #tpu.memory_space<vmem>>, vector<8x32xf32>
      %cst_71 = arith.constant dense<0.000000e+00> : vector<32x8xf32>
      %132 = tpu.matmul %131, %98, %cst_71 {dimension_numbers = #tpu.dot_dimension_numbers<[0], [0], [1], [1], [0, 1, 1, 1], [], []>} : vector<8x32xf32>, vector<8x8xf32>, vector<32x8xf32> -> vector<32x8xf32>
      %133 = vector.extract_strided_slice %126 {offsets = [0, 0], sizes = [1, 8], strides = [1, 1]} : vector<8x8xf32> to vector<1x8xf32>
      %134 = vector.broadcast %133 : vector<1x8xf32> to vector<16x8xf32>
      %135 = arith.mulf %134, %92 : vector<16x8xf32>
      %136 = math.exp %135 : vector<16x8xf32>
      %137 = vector.extract_strided_slice %132 {offsets = [0, 0], sizes = [16, 1], strides = [1, 1]} : vector<32x8xf32> to vector<16x1xf32>
      %138 = vector.extract_strided_slice %132 {offsets = [16, 0], sizes = [16, 1], strides = [1, 1]} : vector<32x8xf32> to vector<16x1xf32>
      %139 = arith.mulf %136, %arg22 : vector<16x8xf32>
      %140 = vector.extract_strided_slice %129 {offsets = [0, 0], sizes = [1, 8], strides = [1, 1]} : vector<8x8xf32> to vector<1x8xf32>
      %141 = vector.broadcast %137 : vector<16x1xf32> to vector<16x8xf32>
      %142 = vector.broadcast %140 : vector<1x8xf32> to vector<16x8xf32>
      %143 = arith.mulf %141, %142 : vector<16x8xf32>
      %144 = arith.addf %139, %143 : vector<16x8xf32>
      %145 = vector.broadcast %138 : vector<16x1xf32> to vector<16x8xf32>
      %146 = arith.mulf %145, %144 : vector<16x8xf32>
      %cst_72 = arith.constant dense<0.000000e+00> : vector<8xf32>
      %147 = vector.multi_reduction <add>, %146, %cst_72 [0] : vector<16x8xf32> to vector<8xf32>
      %148 = vector.shape_cast %147 : vector<8xf32> to vector<1x8xf32>
      %149 = vector.extract_strided_slice %126 {offsets = [1, 0], sizes = [1, 8], strides = [1, 1]} : vector<8x8xf32> to vector<1x8xf32>
      %150 = vector.broadcast %149 : vector<1x8xf32> to vector<16x8xf32>
      %151 = arith.mulf %150, %92 : vector<16x8xf32>
      %152 = math.exp %151 : vector<16x8xf32>
      %153 = vector.extract_strided_slice %132 {offsets = [0, 1], sizes = [16, 1], strides = [1, 1]} : vector<32x8xf32> to vector<16x1xf32>
      %154 = vector.extract_strided_slice %132 {offsets = [16, 1], sizes = [16, 1], strides = [1, 1]} : vector<32x8xf32> to vector<16x1xf32>
      %155 = arith.mulf %152, %144 : vector<16x8xf32>
      %156 = vector.extract_strided_slice %129 {offsets = [1, 0], sizes = [1, 8], strides = [1, 1]} : vector<8x8xf32> to vector<1x8xf32>
      %157 = vector.broadcast %153 : vector<16x1xf32> to vector<16x8xf32>
      %158 = vector.broadcast %156 : vector<1x8xf32> to vector<16x8xf32>
      %159 = arith.mulf %157, %158 : vector<16x8xf32>
      %160 = arith.addf %155, %159 : vector<16x8xf32>
      %161 = vector.broadcast %154 : vector<16x1xf32> to vector<16x8xf32>
      %162 = arith.mulf %161, %160 : vector<16x8xf32>
      %cst_73 = arith.constant dense<0.000000e+00> : vector<8xf32>
      %163 = vector.multi_reduction <add>, %162, %cst_73 [0] : vector<16x8xf32> to vector<8xf32>
      %164 = vector.shape_cast %163 : vector<8xf32> to vector<1x8xf32>
      %165 = vector.extract_strided_slice %126 {offsets = [2, 0], sizes = [1, 8], strides = [1, 1]} : vector<8x8xf32> to vector<1x8xf32>
      %166 = vector.broadcast %165 : vector<1x8xf32> to vector<16x8xf32>
      %167 = arith.mulf %166, %92 : vector<16x8xf32>
      %168 = math.exp %167 : vector<16x8xf32>
      %169 = vector.extract_strided_slice %132 {offsets = [0, 2], sizes = [16, 1], strides = [1, 1]} : vector<32x8xf32> to vector<16x1xf32>
      %170 = vector.extract_strided_slice %132 {offsets = [16, 2], sizes = [16, 1], strides = [1, 1]} : vector<32x8xf32> to vector<16x1xf32>
      %171 = arith.mulf %168, %160 : vector<16x8xf32>
      %172 = vector.extract_strided_slice %129 {offsets = [2, 0], sizes = [1, 8], strides = [1, 1]} : vector<8x8xf32> to vector<1x8xf32>
      %173 = vector.broadcast %169 : vector<16x1xf32> to vector<16x8xf32>
      %174 = vector.broadcast %172 : vector<1x8xf32> to vector<16x8xf32>
      %175 = arith.mulf %173, %174 : vector<16x8xf32>
      %176 = arith.addf %171, %175 : vector<16x8xf32>
      %177 = vector.broadcast %170 : vector<16x1xf32> to vector<16x8xf32>
      %178 = arith.mulf %177, %176 : vector<16x8xf32>
      %cst_74 = arith.constant dense<0.000000e+00> : vector<8xf32>
      %179 = vector.multi_reduction <add>, %178, %cst_74 [0] : vector<16x8xf32> to vector<8xf32>
      %180 = vector.shape_cast %179 : vector<8xf32> to vector<1x8xf32>
      %181 = vector.extract_strided_slice %126 {offsets = [3, 0], sizes = [1, 8], strides = [1, 1]} : vector<8x8xf32> to vector<1x8xf32>
      %182 = vector.broadcast %181 : vector<1x8xf32> to vector<16x8xf32>
      %183 = arith.mulf %182, %92 : vector<16x8xf32>
      %184 = math.exp %183 : vector<16x8xf32>
      %185 = vector.extract_strided_slice %132 {offsets = [0, 3], sizes = [16, 1], strides = [1, 1]} : vector<32x8xf32> to vector<16x1xf32>
      %186 = vector.extract_strided_slice %132 {offsets = [16, 3], sizes = [16, 1], strides = [1, 1]} : vector<32x8xf32> to vector<16x1xf32>
      %187 = arith.mulf %184, %176 : vector<16x8xf32>
      %188 = vector.extract_strided_slice %129 {offsets = [3, 0], sizes = [1, 8], strides = [1, 1]} : vector<8x8xf32> to vector<1x8xf32>
      %189 = vector.broadcast %185 : vector<16x1xf32> to vector<16x8xf32>
      %190 = vector.broadcast %188 : vector<1x8xf32> to vector<16x8xf32>
      %191 = arith.mulf %189, %190 : vector<16x8xf32>
      %192 = arith.addf %187, %191 : vector<16x8xf32>
      %193 = vector.broadcast %186 : vector<16x1xf32> to vector<16x8xf32>
      %194 = arith.mulf %193, %192 : vector<16x8xf32>
      %cst_75 = arith.constant dense<0.000000e+00> : vector<8xf32>
      %195 = vector.multi_reduction <add>, %194, %cst_75 [0] : vector<16x8xf32> to vector<8xf32>
      %196 = vector.shape_cast %195 : vector<8xf32> to vector<1x8xf32>
      %197 = vector.extract_strided_slice %126 {offsets = [4, 0], sizes = [1, 8], strides = [1, 1]} : vector<8x8xf32> to vector<1x8xf32>
      %198 = vector.broadcast %197 : vector<1x8xf32> to vector<16x8xf32>
      %199 = arith.mulf %198, %92 : vector<16x8xf32>
      %200 = math.exp %199 : vector<16x8xf32>
      %201 = vector.extract_strided_slice %132 {offsets = [0, 4], sizes = [16, 1], strides = [1, 1]} : vector<32x8xf32> to vector<16x1xf32>
      %202 = vector.extract_strided_slice %132 {offsets = [16, 4], sizes = [16, 1], strides = [1, 1]} : vector<32x8xf32> to vector<16x1xf32>
      %203 = arith.mulf %200, %192 : vector<16x8xf32>
      %204 = vector.extract_strided_slice %129 {offsets = [4, 0], sizes = [1, 8], strides = [1, 1]} : vector<8x8xf32> to vector<1x8xf32>
      %205 = vector.broadcast %201 : vector<16x1xf32> to vector<16x8xf32>
      %206 = vector.broadcast %204 : vector<1x8xf32> to vector<16x8xf32>
      %207 = arith.mulf %205, %206 : vector<16x8xf32>
      %208 = arith.addf %203, %207 : vector<16x8xf32>
      %209 = vector.broadcast %202 : vector<16x1xf32> to vector<16x8xf32>
      %210 = arith.mulf %209, %208 : vector<16x8xf32>
      %cst_76 = arith.constant dense<0.000000e+00> : vector<8xf32>
      %211 = vector.multi_reduction <add>, %210, %cst_76 [0] : vector<16x8xf32> to vector<8xf32>
      %212 = vector.shape_cast %211 : vector<8xf32> to vector<1x8xf32>
      %213 = vector.extract_strided_slice %126 {offsets = [5, 0], sizes = [1, 8], strides = [1, 1]} : vector<8x8xf32> to vector<1x8xf32>
      %214 = vector.broadcast %213 : vector<1x8xf32> to vector<16x8xf32>
      %215 = arith.mulf %214, %92 : vector<16x8xf32>
      %216 = math.exp %215 : vector<16x8xf32>
      %217 = vector.extract_strided_slice %132 {offsets = [0, 5], sizes = [16, 1], strides = [1, 1]} : vector<32x8xf32> to vector<16x1xf32>
      %218 = vector.extract_strided_slice %132 {offsets = [16, 5], sizes = [16, 1], strides = [1, 1]} : vector<32x8xf32> to vector<16x1xf32>
      %219 = arith.mulf %216, %208 : vector<16x8xf32>
      %220 = vector.extract_strided_slice %129 {offsets = [5, 0], sizes = [1, 8], strides = [1, 1]} : vector<8x8xf32> to vector<1x8xf32>
      %221 = vector.broadcast %217 : vector<16x1xf32> to vector<16x8xf32>
      %222 = vector.broadcast %220 : vector<1x8xf32> to vector<16x8xf32>
      %223 = arith.mulf %221, %222 : vector<16x8xf32>
      %224 = arith.addf %219, %223 : vector<16x8xf32>
      %225 = vector.broadcast %218 : vector<16x1xf32> to vector<16x8xf32>
      %226 = arith.mulf %225, %224 : vector<16x8xf32>
      %cst_77 = arith.constant dense<0.000000e+00> : vector<8xf32>
      %227 = vector.multi_reduction <add>, %226, %cst_77 [0] : vector<16x8xf32> to vector<8xf32>
      %228 = vector.shape_cast %227 : vector<8xf32> to vector<1x8xf32>
      %229 = vector.extract_strided_slice %126 {offsets = [6, 0], sizes = [1, 8], strides = [1, 1]} : vector<8x8xf32> to vector<1x8xf32>
      %230 = vector.broadcast %229 : vector<1x8xf32> to vector<16x8xf32>
      %231 = arith.mulf %230, %92 : vector<16x8xf32>
      %232 = math.exp %231 : vector<16x8xf32>
      %233 = vector.extract_strided_slice %132 {offsets = [0, 6], sizes = [16, 1], strides = [1, 1]} : vector<32x8xf32> to vector<16x1xf32>
      %234 = vector.extract_strided_slice %132 {offsets = [16, 6], sizes = [16, 1], strides = [1, 1]} : vector<32x8xf32> to vector<16x1xf32>
      %235 = arith.mulf %232, %224 : vector<16x8xf32>
      %236 = vector.extract_strided_slice %129 {offsets = [6, 0], sizes = [1, 8], strides = [1, 1]} : vector<8x8xf32> to vector<1x8xf32>
      %237 = vector.broadcast %233 : vector<16x1xf32> to vector<16x8xf32>
      %238 = vector.broadcast %236 : vector<1x8xf32> to vector<16x8xf32>
      %239 = arith.mulf %237, %238 : vector<16x8xf32>
      %240 = arith.addf %235, %239 : vector<16x8xf32>
      %241 = vector.broadcast %234 : vector<16x1xf32> to vector<16x8xf32>
      %242 = arith.mulf %241, %240 : vector<16x8xf32>
      %cst_78 = arith.constant dense<0.000000e+00> : vector<8xf32>
      %243 = vector.multi_reduction <add>, %242, %cst_78 [0] : vector<16x8xf32> to vector<8xf32>
      %244 = vector.shape_cast %243 : vector<8xf32> to vector<1x8xf32>
      %245 = vector.extract_strided_slice %126 {offsets = [7, 0], sizes = [1, 8], strides = [1, 1]} : vector<8x8xf32> to vector<1x8xf32>
      %246 = vector.broadcast %245 : vector<1x8xf32> to vector<16x8xf32>
      %247 = arith.mulf %246, %92 : vector<16x8xf32>
      %248 = math.exp %247 : vector<16x8xf32>
      %249 = vector.extract_strided_slice %132 {offsets = [0, 7], sizes = [16, 1], strides = [1, 1]} : vector<32x8xf32> to vector<16x1xf32>
      %250 = vector.extract_strided_slice %132 {offsets = [16, 7], sizes = [16, 1], strides = [1, 1]} : vector<32x8xf32> to vector<16x1xf32>
      %251 = arith.mulf %248, %240 : vector<16x8xf32>
      %252 = vector.extract_strided_slice %129 {offsets = [7, 0], sizes = [1, 8], strides = [1, 1]} : vector<8x8xf32> to vector<1x8xf32>
      %253 = vector.broadcast %249 : vector<16x1xf32> to vector<16x8xf32>
      %254 = vector.broadcast %252 : vector<1x8xf32> to vector<16x8xf32>
      %255 = arith.mulf %253, %254 : vector<16x8xf32>
      %256 = arith.addf %251, %255 : vector<16x8xf32>
      %257 = vector.broadcast %250 : vector<16x1xf32> to vector<16x8xf32>
      %258 = arith.mulf %257, %256 : vector<16x8xf32>
      %cst_79 = arith.constant dense<0.000000e+00> : vector<8xf32>
      %259 = vector.multi_reduction <add>, %258, %cst_79 [0] : vector<16x8xf32> to vector<8xf32>
      %260 = vector.shape_cast %259 : vector<8xf32> to vector<1x8xf32>
      %261 = tpu.concatenate %148, %164, %180, %196, %212, %228, %244, %260 in 0 : vector<1x8xf32>, vector<1x8xf32>, vector<1x8xf32>, vector<1x8xf32>, vector<1x8xf32>, vector<1x8xf32>, vector<1x8xf32>, vector<1x8xf32> -> vector<8x8xf32>
      %262 = arith.index_cast %124 : i32 to index
      %c0_80 = arith.constant 0 : index
      %263 = vector.load %arg19[%262, %c0_80] : memref<256x8xf32, #tpu.memory_space<vmem>>, vector<8x8xf32>
      tpu.vector_store %arg19[%262, %c0_80], %261 {strides = array<i32>} : memref<256x8xf32, #tpu.memory_space<vmem>>, vector<8x8xf32>,
      scf.yield %256 : vector<16x8xf32>
    }
    %c32_i32_50 = arith.constant 32 : i32
    %c0_51 = arith.constant 0 : index
    %c0_52 = arith.constant 0 : index
    %102 = vector.load %arg15[%c0_51, %c0_52] : memref<16x8xf32, #tpu.memory_space<vmem>>, vector<16x8xf32>
    tpu.vector_store %arg15[%c0_51, %c0_52], %101 {strides = array<i32>} : memref<16x8xf32, #tpu.memory_space<vmem>>, vector<16x8xf32>,
    %c0_53 = arith.constant 0 : index
    %c0_54 = arith.constant 0 : index
    %103 = vector.load %arg19[%c0_53, %c0_54] : memref<256x8xf32, #tpu.memory_space<vmem>>, vector<256x8xf32>
    %c0_55 = arith.constant 0 : index
    %c0_56 = arith.constant 0 : index
    %104 = vector.load %arg17[%c0_55, %c0_56] : memref<256x8xf32, #tpu.memory_space<vmem>>, vector<256x8xf32>
    %c0_57 = arith.constant 0 : index
    %c0_58 = arith.constant 0 : index
    %105 = vector.load %arg12[%c0_57, %c0_58] : memref<1x8xf32, #tpu.memory_space<vmem>>, vector<1x8xf32>
    %106 = vector.broadcast %105 : vector<1x8xf32> to vector<256x8xf32>
    %107 = arith.mulf %104, %106 : vector<256x8xf32>
    %108 = arith.addf %103, %107 : vector<256x8xf32>
    %c0_59 = arith.constant 0 : index
    %c0_60 = arith.constant 0 : index
    %109 = vector.load %arg18[%c0_59, %c0_60] : memref<256x8xf32, #tpu.memory_space<vmem>>, vector<256x8xf32>
    %110 = arith.negf %109 : vector<256x8xf32>
    %111 = math.exp %110 : vector<256x8xf32>
    %cst_61 = arith.constant 1.000000e+00 : f32
    %112 = vector.broadcast %cst_61 : f32 to vector<256x8xf32>
    %113 = arith.addf %112, %111 : vector<256x8xf32>
    %114 = arith.divf %112, %113 : vector<256x8xf32>
    %115 = arith.mulf %109, %114 : vector<256x8xf32>
    %116 = arith.mulf %108, %115 : vector<256x8xf32>
    %c0_62 = arith.constant 0 : index
    %c0_63 = arith.constant 0 : index
    %117 = vector.load %arg13[%c0_62, %c0_63] : memref<4x8xbf16, #tpu.memory_space<vmem>>, vector<4x8xbf16>
    %118 = arith.truncf %116 : vector<256x8xf32> to vector<256x8xbf16>
    %cst_64 = arith.constant dense<0.000000e+00> : vector<4x256xf32>
    %119 = tpu.matmul %117, %118, %cst_64 {dimension_numbers = #tpu.dot_dimension_numbers<[1], [1], [0], [0], [0, 0, 1, 0], [], []>} : vector<4x8xbf16>, vector<256x8xbf16>, vector<4x256xf32> -> vector<4x256xf32>
    %c0_65 = arith.constant 0 : index
    %c0_66 = arith.constant 0 : index
    %c0_67 = arith.constant 0 : index
    %120 = vector.load %arg14[%c0_65, %c0_66, %c0_67] : memref<1x4x256xf32, #tpu.memory_space<vmem>>, vector<1x4x256xf32>
    %121 = vector.shape_cast %120 : vector<1x4x256xf32> to vector<4x256xf32>
    %122 = vector.shape_cast %119 : vector<4x256xf32> to vector<1x4x256xf32>
    tpu.vector_store %arg14[%c0_65, %c0_66, %c0_67], %122 {strides = array<i32>} : memref<1x4x256xf32, #tpu.memory_space<vmem>>, vector<1x4x256xf32>,
    return
  }
  func.func @transform_0(%arg0: i32, %arg1: i32) -> (i32, i32, i32) {
    %c0_i32 = arith.constant 0 : i32
    %c0_i32_0 = arith.constant 0 : i32
    return %arg0, %c0_i32, %arg1 : i32, i32, i32
  }
  func.func @transform_1(%arg0: i32, %arg1: i32) -> (i32, i32) {
    %c0_i32 = arith.constant 0 : i32
    %c0_i32_0 = arith.constant 0 : i32
    %c0_i32_1 = arith.constant 0 : i32
    return %c0_i32, %c0_i32_0 : i32, i32
  }
  func.func @transform_2(%arg0: i32, %arg1: i32) -> (i32, i32) {
    %c0_i32 = arith.constant 0 : i32
    %c0_i32_0 = arith.constant 0 : i32
    %c0_i32_1 = arith.constant 0 : i32
    return %c0_i32, %c0_i32_0 : i32, i32
  }
  func.func @transform_3(%arg0: i32, %arg1: i32) -> (i32, i32) {
    %c0_i32 = arith.constant 0 : i32
    %c0_i32_0 = arith.constant 0 : i32
    %c0_i32_1 = arith.constant 0 : i32
    return %c0_i32, %c0_i32_0 : i32, i32
  }
  func.func @transform_4(%arg0: i32, %arg1: i32) -> (i32, i32) {
    %c0_i32 = arith.constant 0 : i32
    %c0_i32_0 = arith.constant 0 : i32
    %c0_i32_1 = arith.constant 0 : i32
    return %c0_i32, %c0_i32_0 : i32, i32
  }
  func.func @transform_5(%arg0: i32, %arg1: i32) -> (i32, i32) {
    %c0_i32 = arith.constant 0 : i32
    %c0_i32_0 = arith.constant 0 : i32
    %c0_i32_1 = arith.constant 0 : i32
    return %c0_i32, %c0_i32_0 : i32, i32
  }
  func.func @transform_6(%arg0: i32, %arg1: i32) -> (i32, i32) {
    %c0_i32 = arith.constant 0 : i32
    %c0_i32_0 = arith.constant 0 : i32
    %c0_i32_1 = arith.constant 0 : i32
    return %c0_i32, %c0_i32_0 : i32, i32
  }
  func.func @transform_7(%arg0: i32, %arg1: i32) -> (i32, i32) {
    %c0_i32 = arith.constant 0 : i32
    %c0_i32_0 = arith.constant 0 : i32
    %c0_i32_1 = arith.constant 0 : i32
    return %c0_i32, %c0_i32_0 : i32, i32
  }
  func.func @transform_8(%arg0: i32, %arg1: i32) -> (i32, i32) {
    %c0_i32 = arith.constant 0 : i32
    %c0_i32_0 = arith.constant 0 : i32
    %c0_i32_1 = arith.constant 0 : i32
    return %c0_i32, %c0_i32_0 : i32, i32
  }
  func.func @transform_9(%arg0: i32, %arg1: i32) -> (i32, i32) {
    %c0_i32 = arith.constant 0 : i32
    %c0_i32_0 = arith.constant 0 : i32
    %c0_i32_1 = arith.constant 0 : i32
    return %c0_i32, %c0_i32_0 : i32, i32
  }
  func.func @transform_10(%arg0: i32, %arg1: i32) -> (i32, i32) {
    %c0_i32 = arith.constant 0 : i32
    %c0_i32_0 = arith.constant 0 : i32
    %c0_i32_1 = arith.constant 0 : i32
    return %c0_i32, %c0_i32_0 : i32, i32
  }
  func.func @transform_11(%arg0: i32, %arg1: i32) -> (i32, i32) {
    %c0_i32 = arith.constant 0 : i32
    %c0_i32_0 = arith.constant 0 : i32
    %c0_i32_1 = arith.constant 0 : i32
    return %c0_i32, %c0_i32_0 : i32, i32
  }
  func.func @transform_12(%arg0: i32, %arg1: i32) -> (i32, i32, i32) {
    %c0_i32 = arith.constant 0 : i32
    %c0_i32_0 = arith.constant 0 : i32
    return %arg0, %c0_i32, %arg1 : i32, i32, i32
  }
}

</mosaic_0001>

<llo_original>
// kernel: tpu_custom_call.1
$region0: #{tpu_custom_call.1}
  #allocation0 [shape = 'u32[]', space=smem, size = 0x4, offset = 0x4, fixed_abs, tag = 'smem constant byte address 0x4 - core index']
  #allocation1 [shape = 'u32[144,128]{1,0:T(1,128)}', space=vmem, size = 0x12000, scoped, tag = 'internal scratch']
  #allocation2 [shape = 'f32[16,8]{1,0:T(8,128)}', space=vmem, size = 0x2000, scoped, tag = 'scratch operand']
  #allocation3 [shape = 'f32[8,8]{1,0:T(8,128)}', space=vmem, size = 0x1000, scoped, tag = 'scratch operand']
  #allocation4 [shape = 'f32[256,8]{1,0:T(8,128)}', space=vmem, size = 0x20000, scoped, tag = 'scratch operand']
  #allocation5 [shape = 'f32[256,8]{1,0:T(8,128)}', space=vmem, size = 0x20000, scoped, tag = 'scratch operand']
  #allocation6 [shape = 'f32[256,8]{1,0:T(8,128)}', space=vmem, size = 0x20000, scoped, tag = 'scratch operand']
  #allocation7 [shape = 'f32[256,32]{1,0:T(8,128)}', space=vmem, size = 0x20000, scoped, tag = 'scratch operand']
  %s0 = inlined_call_operand.vmem [shape: f32[2,4,256], index: 0, kind: input, shape index: {}]
  %s1 = inlined_call_operand.vmem [shape: f32[4,1], index: 1, kind: input, shape index: {}]
  %s2 = inlined_call_operand.vmem [shape: f32[4,1], index: 2, kind: input, shape index: {}]
  %s3 = inlined_call_operand.vmem [shape: bf16[4,16], index: 3, kind: input, shape index: {}]
  %s4 = inlined_call_operand.vmem [shape: f32[4,8], index: 4, kind: input, shape index: {}]
  %s5 = inlined_call_operand.vmem [shape: f32[1,8], index: 5, kind: input, shape index: {}]
  %s6 = inlined_call_operand.vmem [shape: bf16[8,8], index: 6, kind: input, shape index: {}]
  %s7 = inlined_call_operand.vmem [shape: f32[1,8], index: 7, kind: input, shape index: {}]
  %s8 = inlined_call_operand.vmem [shape: bf16[8,32], index: 8, kind: input, shape index: {}]
  %s9 = inlined_call_operand.vmem [shape: f32[16,8], index: 9, kind: input, shape index: {}]
  %s10 = inlined_call_operand.vmem [shape: f32[1,8], index: 10, kind: input, shape index: {}]
  %s11 = inlined_call_operand.vmem [shape: bf16[4,8], index: 11, kind: input, shape index: {}]
  %s12 = inlined_call_operand.hbm [shape: f32[2,4,256], index: 12, kind: output, shape index: {}]
  %s13 = sld [smem:[#allocation0]]
  $region92: #{tpu_custom_call.1} parent=0
    _
  %s15 = ssub.s32 1, %s13
  %s16 = scalar_select 0, %s15, %s13
  $region1: #{tpu_custom_call.1} parent=0
    #allocation8 [shape = 'u8[8192]{0}', space=vmem, size = 0x2000, scoped, tag = 'output window, operand 0']
    #allocation9 [shape = 's32[2]{0}', space=sflag, size = 0x8, scoped, tag = 'scoped memory for tpu_custom_call.1']
    %17 = vsyncpa [#allocation9], 0
    %s18 = scalar_lea.sflag [#allocation9], 1
    %19 = vsyncpa %s18, 0
    loop: start=0, step=1, limit=4
    $region2: #{tpu_custom_call.1} parent=1 // loop_pre_header
      _
    $region3: #{tpu_custom_call.1} parent=1 // loop_header
      %s21 = sphi 0, %s25
      %p22 = scmp.ge.s32.totalorder %s21, 4
      %s28 = sphi 0, %s40
      %s29 = sphi 0, %s36
      %s30 = sphi 0, %s28
      %s31 = sphi 0, %s29
      %s32 = sphi 0, %s30
      %s33 = sphi 0, %s31
      %s45 = sphi 0, %s47
      %s48 = sphi 0, %s45
      %s49 = sphi 0, %s48
      %s65 = sphi 0, %s49
      %s69 = sphi 0, %s69
      %s71 = sphi 0, %s69
      %s72 = sphi 0, %s71
      %s86 = sphi 0, %s72
      %s90 = sphi 0, %s90
      %s92 = sphi 0, %s90
      %s93 = sphi 0, %s92
      %s107 = sphi 0, %s93
      %s111 = sphi 0, %s111
      %s113 = sphi 0, %s111
      %s114 = sphi 0, %s113
      %s128 = sphi 0, %s114
      %s132 = sphi 0, %s132
      %s134 = sphi 0, %s132
      %s135 = sphi 0, %s134
      %s149 = sphi 0, %s135
      %s153 = sphi 0, %s153
      %s155 = sphi 0, %s153
      %s156 = sphi 0, %s155
      %s170 = sphi 0, %s156
      %s174 = sphi 0, %s174
      %s176 = sphi 0, %s174
      %s177 = sphi 0, %s176
      %s191 = sphi 0, %s177
      %s195 = sphi 0, %s195
      %s197 = sphi 0, %s195
      %s198 = sphi 0, %s197
      %s212 = sphi 0, %s198
      %s216 = sphi 0, %s216
      %s218 = sphi 0, %s216
      %s219 = sphi 0, %s218
      %s233 = sphi 0, %s219
      %s237 = sphi 0, %s237
      %s239 = sphi 0, %s237
      %s240 = sphi 0, %s239
      %s254 = sphi 0, %s240
      %s258 = sphi 0, %s258
      %s260 = sphi 0, %s258
      %s261 = sphi 0, %s260
      %s275 = sphi 0, %s261
      %s279 = sphi 0, %s279
      %s281 = sphi 0, %s279
      %s282 = sphi 0, %s281
      %s296 = sphi 0, %s282
      %s304 = sphi 0, %s306
      %s307 = sphi 0, %s304
      %s308 = sphi 0, %s307
      %s324 = sphi 0, %s308
    $region4: #{tpu_custom_call.1} parent=1 // loop_header_branch
      %24 = sbr.rel (%p22) target = $region8
    $region5: #{tpu_custom_call.1} parent=1 // loop_body
      %s26 = ssub.s32 %s21, 1
      %s27 = ssub.s32 %s21, 2
      %s34 = sadd.s32 1, %s29
      %p35 = scmp.ge.s32.totalorder %s34, 1
      %s36 = scalar_select %p35, 0, %s34
      %s37 = sadd.s32 1, %s28
      %s38 = scalar_select %p35, %s37, %s28
      %p39 = scmp.ge.s32.totalorder %s38, 2
      %s40 = scalar_select %p39, 0, %s38
      %s41 = ssub.s32 %s28, %s40
      %s42 = ssub.s32 %s29, %s36
      %s43 = sor.u32 %s41, %s42
      %p44 = scmp.eq.s32.totalorder %s43, 0
      %s46 = sadd.s32 %s45, 1
      %s47 = scalar_select %p44, %s45, %s46
      %p50 = pneg %p44
      %p51 = scmp.eq.s32.totalorder %s21, 1
      %p52 = por %p50, %p51
      %p53 = scmp.ne.s32.totalorder %s45, %s48
      %p54 = scmp.eq.s32.totalorder %s21, 0
      %p55 = por %p53, %p54
      %p56 = scmp.ne.s32.totalorder %s45, %s48
      %p57 = scmp.eq.s32.totalorder %s26, 1
      %p58 = por %p56, %p57
      %p59 = scmp.ne.s32.totalorder %s48, %s49
      %p60 = scmp.eq.s32.totalorder %s26, 0
      %p61 = por %p59, %p60
      %p62 = scmp.ne.s32.totalorder %s48, %s49
      %p63 = scmp.eq.s32.totalorder %s27, 1
      %p64 = por %p62, %p63
      %p66 = scmp.ne.s32.totalorder %s49, %s65
      %p67 = scmp.eq.s32.totalorder %s27, 0
      %p68 = por %p66, %p67
      %s70 = sadd.s32 %s69, 1
      %p73 = scmp.eq.s32.totalorder %s21, 1
      %p74 = scmp.ne.s32.totalorder %s69, %s71
      %p75 = scmp.eq.s32.totalorder %s21, 0
      %p76 = por %p74, %p75
      %p77 = scmp.ne.s32.totalorder %s69, %s71
      %p78 = scmp.eq.s32.totalorder %s26, 1
      %p79 = por %p77, %p78
      %p80 = scmp.ne.s32.totalorder %s71, %s72
      %p81 = scmp.eq.s32.totalorder %s26, 0
      %p82 = por %p80, %p81
      %p83 = scmp.ne.s32.totalorder %s71, %s72
      %p84 = scmp.eq.s32.totalorder %s27, 1
      %p85 = por %p83, %p84
      %p87 = scmp.ne.s32.totalorder %s72, %s86
      %p88 = scmp.eq.s32.totalorder %s27, 0
      %p89 = por %p87, %p88
      %s91 = sadd.s32 %s90, 1
      %p94 = scmp.eq.s32.totalorder %s21, 1
      %p95 = scmp.ne.s32.totalorder %s90, %s92
      %p96 = scmp.eq.s32.totalorder %s21, 0
      %p97 = por %p95, %p96
      %p98 = scmp.ne.s32.totalorder %s90, %s92
      %p99 = scmp.eq.s32.totalorder %s26, 1
      %p100 = por %p98, %p99
      %p101 = scmp.ne.s32.totalorder %s92, %s93
      %p102 = scmp.eq.s32.totalorder %s26, 0
      %p103 = por %p101, %p102
      %p104 = scmp.ne.s32.totalorder %s92, %s93
      %p105 = scmp.eq.s32.totalorder %s27, 1
      %p106 = por %p104, %p105
      %p108 = scmp.ne.s32.totalorder %s93, %s107
      %p109 = scmp.eq.s32.totalorder %s27, 0
      %p110 = por %p108, %p109
      %s112 = sadd.s32 %s111, 1
      %p115 = scmp.eq.s32.totalorder %s21, 1
      %p116 = scmp.ne.s32.totalorder %s111, %s113
      %p117 = scmp.eq.s32.totalorder %s21, 0
      %p118 = por %p116, %p117
      %p119 = scmp.ne.s32.totalorder %s111, %s113
      %p120 = scmp.eq.s32.totalorder %s26, 1
      %p121 = por %p119, %p120
      %p122 = scmp.ne.s32.totalorder %s113, %s114
      %p123 = scmp.eq.s32.totalorder %s26, 0
      %p124 = por %p122, %p123
      %p125 = scmp.ne.s32.totalorder %s113, %s114
      %p126 = scmp.eq.s32.totalorder %s27, 1
      %p127 = por %p125, %p126
      %p129 = scmp.ne.s32.totalorder %s114, %s128
      %p130 = scmp.eq.s32.totalorder %s27, 0
      %p131 = por %p129, %p130
      %s133 = sadd.s32 %s132, 1
      %p136 = scmp.eq.s32.totalorder %s21, 1
      %p137 = scmp.ne.s32.totalorder %s132, %s134
      %p138 = scmp.eq.s32.totalorder %s21, 0
      %p139 = por %p137, %p138
      %p140 = scmp.ne.s32.totalorder %s132, %s134
      %p141 = scmp.eq.s32.totalorder %s26, 1
      %p142 = por %p140, %p141
      %p143 = scmp.ne.s32.totalorder %s134, %s135
      %p144 = scmp.eq.s32.totalorder %s26, 0
      %p145 = por %p143, %p144
      %p146 = scmp.ne.s32.totalorder %s134, %s135
      %p147 = scmp.eq.s32.totalorder %s27, 1
      %p148 = por %p146, %p147
      %p150 = scmp.ne.s32.totalorder %s135, %s149
      %p151 = scmp.eq.s32.totalorder %s27, 0
      %p152 = por %p150, %p151
      %s154 = sadd.s32 %s153, 1
      %p157 = scmp.eq.s32.totalorder %s21, 1
      %p158 = scmp.ne.s32.totalorder %s153, %s155
      %p159 = scmp.eq.s32.totalorder %s21, 0
      %p160 = por %p158, %p159
      %p161 = scmp.ne.s32.totalorder %s153, %s155
      %p162 = scmp.eq.s32.totalorder %s26, 1
      %p163 = por %p161, %p162
      %p164 = scmp.ne.s32.totalorder %s155, %s156
      %p165 = scmp.eq.s32.totalorder %s26, 0
      %p166 = por %p164, %p165
      %p167 = scmp.ne.s32.totalorder %s155, %s156
      %p168 = scmp.eq.s32.totalorder %s27, 1
      %p169 = por %p167, %p168
      %p171 = scmp.ne.s32.totalorder %s156, %s170
      %p172 = scmp.eq.s32.totalorder %s27, 0
      %p173 = por %p171, %p172
      %s175 = sadd.s32 %s174, 1
      %p178 = scmp.eq.s32.totalorder %s21, 1
      %p179 = scmp.ne.s32.totalorder %s174, %s176
      %p180 = scmp.eq.s32.totalorder %s21, 0
      %p181 = por %p179, %p180
      %p182 = scmp.ne.s32.totalorder %s174, %s176
      %p183 = scmp.eq.s32.totalorder %s26, 1
      %p184 = por %p182, %p183
      %p185 = scmp.ne.s32.totalorder %s176, %s177
      %p186 = scmp.eq.s32.totalorder %s26, 0
      %p187 = por %p185, %p186
      %p188 = scmp.ne.s32.totalorder %s176, %s177
      %p189 = scmp.eq.s32.totalorder %s27, 1
      %p190 = por %p188, %p189
      %p192 = scmp.ne.s32.totalorder %s177, %s191
      %p193 = scmp.eq.s32.totalorder %s27, 0
      %p194 = por %p192, %p193
      %s196 = sadd.s32 %s195, 1
      %p199 = scmp.eq.s32.totalorder %s21, 1
      %p200 = scmp.ne.s32.totalorder %s195, %s197
      %p201 = scmp.eq.s32.totalorder %s21, 0
      %p202 = por %p200, %p201
      %p203 = scmp.ne.s32.totalorder %s195, %s197
      %p204 = scmp.eq.s32.totalorder %s26, 1
      %p205 = por %p203, %p204
      %p206 = scmp.ne.s32.totalorder %s197, %s198
      %p207 = scmp.eq.s32.totalorder %s26, 0
      %p208 = por %p206, %p207
      %p209 = scmp.ne.s32.totalorder %s197, %s198
      %p210 = scmp.eq.s32.totalorder %s27, 1
      %p211 = por %p209, %p210
      %p213 = scmp.ne.s32.totalorder %s198, %s212
      %p214 = scmp.eq.s32.totalorder %s27, 0
      %p215 = por %p213, %p214
      %s217 = sadd.s32 %s216, 1
      %p220 = scmp.eq.s32.totalorder %s21, 1
      %p221 = scmp.ne.s32.totalorder %s216, %s218
      %p222 = scmp.eq.s32.totalorder %s21, 0
      %p223 = por %p221, %p222
      %p224 = scmp.ne.s32.totalorder %s216, %s218
      %p225 = scmp.eq.s32.totalorder %s26, 1
      %p226 = por %p224, %p225
      %p227 = scmp.ne.s32.totalorder %s218, %s219
      %p228 = scmp.eq.s32.totalorder %s26, 0
      %p229 = por %p227, %p228
      %p230 = scmp.ne.s32.totalorder %s218, %s219
      %p231 = scmp.eq.s32.totalorder %s27, 1
      %p232 = por %p230, %p231
      %p234 = scmp.ne.s32.totalorder %s219, %s233
      %p235 = scmp.eq.s32.totalorder %s27, 0
      %p236 = por %p234, %p235
      %s238 = sadd.s32 %s237, 1
      %p241 = scmp.eq.s32.totalorder %s21, 1
      %p242 = scmp.ne.s32.totalorder %s237, %s239
      %p243 = scmp.eq.s32.totalorder %s21, 0
      %p244 = por %p242, %p243
      %p245 = scmp.ne.s32.totalorder %s237, %s239
      %p246 = scmp.eq.s32.totalorder %s26, 1
      %p247 = por %p245, %p246
      %p248 = scmp.ne.s32.totalorder %s239, %s240
      %p249 = scmp.eq.s32.totalorder %s26, 0
      %p250 = por %p248, %p249
      %p251 = scmp.ne.s32.totalorder %s239, %s240
      %p252 = scmp.eq.s32.totalorder %s27, 1
      %p253 = por %p251, %p252
      %p255 = scmp.ne.s32.totalorder %s240, %s254
      %p256 = scmp.eq.s32.totalorder %s27, 0
      %p257 = por %p255, %p256
      %s259 = sadd.s32 %s258, 1
      %p262 = scmp.eq.s32.totalorder %s21, 1
      %p263 = scmp.ne.s32.totalorder %s258, %s260
      %p264 = scmp.eq.s32.totalorder %s21, 0
      %p265 = por %p263, %p264
      %p266 = scmp.ne.s32.totalorder %s258, %s260
      %p267 = scmp.eq.s32.totalorder %s26, 1
      %p268 = por %p266, %p267
      %p269 = scmp.ne.s32.totalorder %s260, %s261
      %p270 = scmp.eq.s32.totalorder %s26, 0
      %p271 = por %p269, %p270
      %p272 = scmp.ne.s32.totalorder %s260, %s261
      %p273 = scmp.eq.s32.totalorder %s27, 1
      %p274 = por %p272, %p273
      %p276 = scmp.ne.s32.totalorder %s261, %s275
      %p277 = scmp.eq.s32.totalorder %s27, 0
      %p278 = por %p276, %p277
      %s280 = sadd.s32 %s279, 1
      %p283 = scmp.eq.s32.totalorder %s21, 1
      %p284 = scmp.ne.s32.totalorder %s279, %s281
      %p285 = scmp.eq.s32.totalorder %s21, 0
      %p286 = por %p284, %p285
      %p287 = scmp.ne.s32.totalorder %s279, %s281
      %p288 = scmp.eq.s32.totalorder %s26, 1
      %p289 = por %p287, %p288
      %p290 = scmp.ne.s32.totalorder %s281, %s282
      %p291 = scmp.eq.s32.totalorder %s26, 0
      %p292 = por %p290, %p291
      %p293 = scmp.ne.s32.totalorder %s281, %s282
      %p294 = scmp.eq.s32.totalorder %s27, 1
      %p295 = por %p293, %p294
      %p297 = scmp.ne.s32.totalorder %s282, %s296
      %p298 = scmp.eq.s32.totalorder %s27, 0
      %p299 = por %p297, %p298
      %s300 = ssub.s32 %s28, %s40
      %s301 = ssub.s32 %s29, %s36
      %s302 = sor.u32 %s300, %s301
      %p303 = scmp.eq.s32.totalorder %s302, 0
      %s305 = sadd.s32 %s304, 1
      %s306 = scalar_select %p303, %s304, %s305
      %p309 = pneg %p303
      %p310 = scmp.eq.s32.totalorder %s21, 1
      %p311 = por %p309, %p310
      %p312 = scmp.ne.s32.totalorder %s304, %s307
      %p313 = scmp.eq.s32.totalorder %s21, 0
      %p314 = por %p312, %p313
      %p315 = scmp.ne.s32.totalorder %s304, %s307
      %p316 = scmp.eq.s32.totalorder %s26, 1
      %p317 = por %p315, %p316
      %p318 = scmp.ne.s32.totalorder %s307, %s308
      %p319 = scmp.eq.s32.totalorder %s26, 0
      %p320 = por %p318, %p319
      %p321 = scmp.ne.s32.totalorder %s307, %s308
      %p322 = scmp.eq.s32.totalorder %s27, 1
      %p323 = por %p321, %p322
      %p325 = scmp.ne.s32.totalorder %s308, %s324
      %p326 = scmp.eq.s32.totalorder %s27, 0
      %p327 = por %p325, %p326
      %p328 = scmp.le.s32.totalorder 1, %s21
      %p329 = scmp.lt.s32.totalorder %s21, 3
      %p330 = pnand %p328, %p329
      %p331 = pneg %p330
      // Predicated region
      $region9: #{tpu_custom_call.1} parent=5 // pred_check
        _
      $region10: #{tpu_custom_call.1} parent=5 // pred_check_branch
        %333 = sbr.rel (%p330) target = $region12
      $region11: #{tpu_custom_call.1} parent=5 // pred_region
        %s334 = ssub.s32 %s21, 1
        // Predicated region
        $region13: #{tpu_custom_call.1} parent=11 // pred_check
          %p335 = pneg %p82
        $region14: #{tpu_custom_call.1} parent=11 // pred_check_branch
          %337 = sbr.rel (%p335) target = $region16
        $region15: #{tpu_custom_call.1} parent=11 // pred_region
          _
        $region16: #{tpu_custom_call.1} parent=11 // pred_fallthru
          _
        // Predicated region
        $region17: #{tpu_custom_call.1} parent=11 // pred_check
          %p338 = pneg %p103
        $region18: #{tpu_custom_call.1} parent=11 // pred_check_branch
          %340 = sbr.rel (%p338) target = $region20
        $region19: #{tpu_custom_call.1} parent=11 // pred_region
          _
        $region20: #{tpu_custom_call.1} parent=11 // pred_fallthru
          _
        // Predicated region
        $region21: #{tpu_custom_call.1} parent=11 // pred_check
          %p341 = pneg %p124
        $region22: #{tpu_custom_call.1} parent=11 // pred_check_branch
          %343 = sbr.rel (%p341) target = $region24
        $region23: #{tpu_custom_call.1} parent=11 // pred_region
          _
        $region24: #{tpu_custom_call.1} parent=11 // pred_fallthru
          _
        // Predicated region
        $region25: #{tpu_custom_call.1} parent=11 // pred_check
          %p344 = pneg %p145
        $region26: #{tpu_custom_call.1} parent=11 // pred_check_branch
          %346 = sbr.rel (%p344) target = $region28
        $region27: #{tpu_custom_call.1} parent=11 // pred_region
          _
        $region28: #{tpu_custom_call.1} parent=11 // pred_fallthru
          _
        // Predicated region
        $region29: #{tpu_custom_call.1} parent=11 // pred_check
          %p347 = pneg %p166
        $region30: #{tpu_custom_call.1} parent=11 // pred_check_branch
          %349 = sbr.rel (%p347) target = $region32
        $region31: #{tpu_custom_call.1} parent=11 // pred_region
          _
        $region32: #{tpu_custom_call.1} parent=11 // pred_fallthru
          _
        // Predicated region
        $region33: #{tpu_custom_call.1} parent=11 // pred_check
          %p350 = pneg %p187
        $region34: #{tpu_custom_call.1} parent=11 // pred_check_branch
          %352 = sbr.rel (%p350) target = $region36
        $region35: #{tpu_custom_call.1} parent=11 // pred_region
          _
        $region36: #{tpu_custom_call.1} parent=11 // pred_fallthru
          _
        // Predicated region
        $region37: #{tpu_custom_call.1} parent=11 // pred_check
          %p353 = pneg %p208
        $region38: #{tpu_custom_call.1} parent=11 // pred_check_branch
          %355 = sbr.rel (%p353) target = $region40
        $region39: #{tpu_custom_call.1} parent=11 // pred_region
          _
        $region40: #{tpu_custom_call.1} parent=11 // pred_fallthru
          _
        // Predicated region
        $region41: #{tpu_custom_call.1} parent=11 // pred_check
          %p356 = pneg %p229
        $region42: #{tpu_custom_call.1} parent=11 // pred_check_branch
          %358 = sbr.rel (%p356) target = $region44
        $region43: #{tpu_custom_call.1} parent=11 // pred_region
          _
        $region44: #{tpu_custom_call.1} parent=11 // pred_fallthru
          _
        // Predicated region
        $region45: #{tpu_custom_call.1} parent=11 // pred_check
          %p359 = pneg %p250
        $region46: #{tpu_custom_call.1} parent=11 // pred_check_branch
          %361 = sbr.rel (%p359) target = $region48
        $region47: #{tpu_custom_call.1} parent=11 // pred_region
          _
        $region48: #{tpu_custom_call.1} parent=11 // pred_fallthru
          _
        // Predicated region
        $region49: #{tpu_custom_call.1} parent=11 // pred_check
          %p362 = pneg %p271
        $region50: #{tpu_custom_call.1} parent=11 // pred_check_branch
          %364 = sbr.rel (%p362) target = $region52
        $region51: #{tpu_custom_call.1} parent=11 // pred_region
          _
        $region52: #{tpu_custom_call.1} parent=11 // pred_fallthru
          _
        // Predicated region
        $region53: #{tpu_custom_call.1} parent=11 // pred_check
          %p365 = pneg %p292
        $region54: #{tpu_custom_call.1} parent=11 // pred_check_branch
          %367 = sbr.rel (%p365) target = $region56
        $region55: #{tpu_custom_call.1} parent=11 // pred_region
          _
        $region56: #{tpu_custom_call.1} parent=11 // pred_fallthru
          _
      $region12: #{tpu_custom_call.1} parent=5 // pred_fallthru
        _
      %p368 = scmp.lt.s32.totalorder %s21, 2
      // Predicated region
      $region57: #{tpu_custom_call.1} parent=5 // pred_check
        %p369 = pneg %p368
      $region58: #{tpu_custom_call.1} parent=5 // pred_check_branch
        %371 = sbr.rel (%p369) target = $region60
      $region59: #{tpu_custom_call.1} parent=5 // pred_region
        // Predicated region
        $region61: #{tpu_custom_call.1} parent=59 // pred_check
          %p372 = pneg %p55
        $region62: #{tpu_custom_call.1} parent=59 // pred_check_branch
          %374 = sbr.rel (%p372) target = $region64
        $region63: #{tpu_custom_call.1} parent=59 // pred_region
          %s375 = smul.u32 2, %s29
          %p376 = scmp.lt.s32.totalorder %s28, 1
          %s377 = scalar_select %p376, %s28, 1
          %p378 = scmp.lt.s32.totalorder %s375, 1
          %s379 = scalar_select %p378, %s375, 1
          %s380 = smul.addr %s377, 2
          %s381 = sadd.s32 %s379, %s380
          %s382 = smul.addr %s381, 4
          %s383 = scalar_lea.vmem %s0, %s382
          %s384 = smul.u32 2, %s29
        $region64: #{tpu_custom_call.1} parent=59 // pred_fallthru
          _
      $region60: #{tpu_custom_call.1} parent=5 // pred_fallthru
        _
      %p385 = scmp.le.s32.totalorder 1, %s21
      %p386 = scmp.lt.s32.totalorder %s21, 3
      %p387 = pnand %p385, %p386
      %p388 = pneg %p387
      // Predicated region
      $region65: #{tpu_custom_call.1} parent=5 // pred_check
        _
      $region66: #{tpu_custom_call.1} parent=5 // pred_check_branch
        %390 = sbr.rel (%p387) target = $region68
      $region67: #{tpu_custom_call.1} parent=5 // pred_region
        %s391 = ssub.s32 %s21, 1
        %s392 = smul.u32 2, %s31
        %p393 = scmp.lt.s32.totalorder %s30, 1
        %s394 = scalar_select %p393, %s30, 1
        %p395 = scmp.lt.s32.totalorder %s392, 1
        %s396 = scalar_select %p395, %s392, 1
        %s397 = smul.addr %s394, 2
        %s398 = sadd.s32 %s396, %s397
        %s399 = smul.addr %s398, 4
        %s400 = scalar_lea.vmem %s0, %s399
        %p401 = pneg %p61
        %p402 = pneg %p58
        %p403 = pneg %p82
        %p404 = pneg %p79
        %p405 = pneg %p103
        %p406 = pneg %p100
        %p407 = pneg %p124
        %p408 = pneg %p121
        %p409 = pneg %p145
        %p410 = pneg %p142
        %p411 = pneg %p166
        %p412 = pneg %p163
        %p413 = pneg %p187
        %p414 = pneg %p184
        %p415 = pneg %p208
        %p416 = pneg %p205
        %p417 = pneg %p229
        %p418 = pneg %p226
        %p419 = pneg %p250
        %p420 = pneg %p247
        %p421 = pneg %p271
        %p422 = pneg %p268
        %p423 = pneg %p292
        %p424 = pneg %p289
        %p425 = pneg %p320
        %p426 = pneg %p317
        %s427 = sand.u32 %s307, 1
        %s428 = scalar_lea.sflag [#allocation9], %s427
        %s429 = sand.u32 %s307, 1
        %s430 = smul.addr %s429, 8
        %s431 = scalar_lea.vmem [#allocation8], %s430
        %s432 = smul.u32 2, %s31
        %p433 = scmp.lt.s32.totalorder %s30, 1
        %s434 = scalar_select %p433, %s30, 1
        %p435 = scmp.lt.s32.totalorder %s432, 1
        %s436 = scalar_select %p435, %s432, 1
        %s437 = smul.addr %s434, 2
        %s438 = sadd.s32 %s436, %s437
        %s439 = smul.addr %s438, 4
        %s440 = scalar_lea.vmem %s0, %s439
        %s441 = smul.u32 2, %s31
        %s442 = smul.u32 2, %s31
        %p444 = scmp.eq.s32.totalorder %s31, 0
        // Predicated region
        $region69: #{tpu_custom_call.1} parent=67 // pred_check
          %p445 = pneg %p444
        $region70: #{tpu_custom_call.1} parent=67 // pred_check_branch
          %447 = sbr.rel (%p445) target = $region72
        $region71: #{tpu_custom_call.1} parent=67 // pred_region
          %vm448 = vcmask 64512
          %449 = vst.msk [vmem:[#allocation2] sm:$0xff] %vm448, 0.0
          %450 = vst.msk [vmem:[#allocation2 + $0x8] sm:$0xff] %vm448, 0.0
          %451 = vst.msk [vmem:[#allocation3] sm:$0xff] %vm448, 0.0
        $region72: #{tpu_custom_call.1} parent=67 // pred_fallthru
          _
        %v452 = vld [vmem:[%s440] sm:$0xff]
        %v454 = vcombine.high %v452, %v452
        %vm456 = vcmask 1043456
        %v457 = vsel %vm456, %v452, 0.0
        %v458 = vrot.slane %v457, 4
        %v459 = vadd.f32 %v457, %v458
        %v460 = vrot.slane %v459, 2
        %v461 = vadd.f32 %v459, %v460
        %v462 = vrot.slane %v461, 1
        %v463 = vadd.f32 %v461, %v462
        %v464 = vsel %vm456, %v454, 0.0
        %v465 = vrot.slane %v464, 4
        %v466 = vadd.f32 %v464, %v465
        %v467 = vrot.slane %v466, 2
        %v468 = vadd.f32 %v466, %v467
        %v469 = vrot.slane %v468, 1
        %v470 = vadd.f32 %v468, %v469
        %v471 = vrcp.pop 4.0
        %v472 = vmul.f32 %v463, %v471
        %v473 = vmul.f32 %v470, %v471
        %v476 = vcombine.low %v472, %v473
        %v478 = vsub.f32 %v452, %v476
        %v479 = vmul.f32 %v478, %v478
        %v481 = vcombine.high %v479, %v479
        %v483 = vsel %vm456, %v479, 0.0
        %v484 = vrot.slane %v483, 4
        %v485 = vadd.f32 %v483, %v484
        %v486 = vrot.slane %v485, 2
        %v487 = vadd.f32 %v485, %v486
        %v488 = vrot.slane %v487, 1
        %v489 = vadd.f32 %v487, %v488
        %v490 = vsel %vm456, %v481, 0.0
        %v491 = vrot.slane %v490, 4
        %v492 = vadd.f32 %v490, %v491
        %v493 = vrot.slane %v492, 2
        %v494 = vadd.f32 %v492, %v493
        %v495 = vrot.slane %v494, 1
        %v496 = vadd.f32 %v494, %v495
        %v497 = vmul.f32 %v489, %v471
        %v498 = vmul.f32 %v496, %v471
        %v499 = vadd.f32 %v497, 1e-05
        %v500 = vadd.f32 %v498, 1e-05
        %v501 = vrsqrt.pop %v499
        %v502 = vrsqrt.pop %v500
        %v505 = vcombine.low %v501, %v502
        %v507 = vmul.f32 %v478, %v505
        %v508 = vld [vmem:[%s1] sm:$0xf]
        %510 = vset.pattern.permute.xlu0 0
        %511 = vperm.xlu0 %510, %v508
        %v512 = vpop.permute.xlu0 %511
        %v514 = vunpack.c.l.s4 839922192
        %v515 = vunpack.c.0.s8 %v514
        %v516 = vlaneseq
        %v517 = vshrl.u32 %v516, 7
        %v518 = vsub.s32 %v515, %v517
        %v519 = vrot.slane %v512, %v518
        %v521 = vmul.f32 %v507, %v519
        %v522 = vld [vmem:[%s2] sm:$0xf]
        %524 = vset.pattern.permute.xlu0 0
        %525 = vperm.xlu0 %524, %v522
        %v526 = vpop.permute.xlu0 %525
        %v528 = vunpack.c.l.s4 839922192
        %v529 = vunpack.c.0.s8 %v528
        %v530 = vlaneseq
        %v531 = vshrl.u32 %v530, 7
        %v532 = vsub.s32 %v529, %v531
        %v533 = vrot.slane %v526, %v532
        %v535 = vadd.f32 %v521, %v533
        %v537 = vcombine.high %v535, %v535
        %v539 = vpack.c.bf16 %v535, %v535
        %v540 = vpack.c.bf16 %v537, %v537
        %v541 = vld [vmem:[%s3] sm:$0x3]
        %542 = vxpose.xlu0.c.b16.start [1/8] %v539, 128
        %543 = vxpose.xlu0.c.b16.cont [2/8] 0, 128
        %544 = vxpose.xlu0.c.b16.cont [3/8] 0, 128
        %545 = vxpose.xlu0.c.b16.cont [4/8] 0, 128
        %546 = vxpose.xlu0.c.b16.cont [5/8] 0, 128
        %547 = vxpose.xlu0.c.b16.cont [6/8] 0, 128
        %548 = vxpose.xlu0.c.b16.cont [7/8] 0, 128
        %549 = vxpose.xlu0.c.b16.end [8/8] 0, 128
        %v550 = vpop.trf.xlu0
        %v551 = vpop.trf.xlu0
        %v552 = vpop.trf.xlu0
        %v553 = vpop.trf.xlu0
        %v554 = vpop.trf.xlu0
        %v555 = vpop.trf.xlu0
        %v556 = vpop.trf.xlu0
        %v557 = vpop.trf.xlu0
        %558 = vxpose.xlu0.c.b16.start [1/8] %v540, 128
        %559 = vxpose.xlu0.c.b16.cont [2/8] 0, 128
        %560 = vxpose.xlu0.c.b16.cont [3/8] 0, 128
        %561 = vxpose.xlu0.c.b16.cont [4/8] 0, 128
        %562 = vxpose.xlu0.c.b16.cont [5/8] 0, 128
        %563 = vxpose.xlu0.c.b16.cont [6/8] 0, 128
        %564 = vxpose.xlu0.c.b16.cont [7/8] 0, 128
        %565 = vxpose.xlu0.c.b16.end [8/8] 0, 128
        %v566 = vpop.trf.xlu0
        %v567 = vpop.trf.xlu0
        %v568 = vpop.trf.xlu0
        %v569 = vpop.trf.xlu0
        %v570 = vpop.trf.xlu0
        %v571 = vpop.trf.xlu0
        %v572 = vpop.trf.xlu0
        %v573 = vpop.trf.xlu0
        %vm574 = vcmask 31744
        %v576 = vsel %vm574, %v550, 0
        %v579 = vsel %vm574, %v551, 0
        %v582 = vsel %vm574, %v552, 0
        %v585 = vsel %vm574, %v553, 0
        %v588 = vsel %vm574, %v554, 0
        %v591 = vsel %vm574, %v555, 0
        %v594 = vsel %vm574, %v556, 0
        %v597 = vsel %vm574, %v557, 0
        %v600 = vsel %vm574, %v566, 0
        %v603 = vsel %vm574, %v567, 0
        %v606 = vsel %vm574, %v568, 0
        %v609 = vsel %vm574, %v569, 0
        %v612 = vsel %vm574, %v570, 0
        %v615 = vsel %vm574, %v571, 0
        %v618 = vsel %vm574, %v572, 0
        %v621 = vsel %vm574, %v573, 0
        %vm623 = vcmask 1041408
        %v625 = vsel %vm623, %v541, 0
        %627 = vmatprep.subr.bf16.mxu0 0
        %628 = vmatpush1.bf16.msra.mxu0 %v625
        %629 = vmatprep.subr.bf16.mxu0 0
        %630 = vmatpush1.bf16.msra.mxu0 0
        %631 = vmatprep.subr.bf16.mxu0 0
        %632 = vmatpush1.bf16.msra.mxu0 0
        %633 = vmatprep.subr.bf16.mxu0 0
        %634 = vmatpush1.bf16.msra.mxu0 0
        %635 = vmatprep.subr.bf16.mxu0 0
        %636 = vmatpush1.bf16.msra.mxu0 0
        %637 = vmatprep.subr.bf16.mxu0 0
        %638 = vmatpush1.bf16.msra.mxu0 0
        %639 = vmatprep.subr.bf16.mxu0 0
        %640 = vmatpush1.bf16.msra.mxu0 0
        %641 = vmatprep.subr.bf16.mxu0 0
        %642 = vmatpush1.bf16.msra.mxu0 0
        %643 = vmatprep.subr.bf16.mxu0 0
        %644 = vmatpush1.bf16.msra.mxu0 0
        %645 = vmatprep.subr.bf16.mxu0 0
        %646 = vmatpush1.bf16.msra.mxu0 0
        %647 = vmatprep.subr.bf16.mxu0 0
        %648 = vmatpush1.bf16.msra.mxu0 0
        %649 = vmatprep.subr.bf16.mxu0 0
        %650 = vmatpush1.bf16.msra.mxu0 0
        %651 = vmatprep.subr.bf16.mxu0 0
        %652 = vmatpush1.bf16.msra.mxu0 0
        %653 = vmatprep.subr.bf16.mxu0 0
        %654 = vmatpush1.bf16.msra.mxu0 0
        %655 = vmatprep.subr.bf16.mxu0 0
        %656 = vmatpush1.bf16.msra.mxu0 0
        %657 = vmatprep.subr.bf16.mxu0 0
        %658 = vmatpush1.bf16.msra.mxu0 0
        %659 = vmatprep.mubr.bf16.mxu0 0
        %660 = vmatmul.mubr.bf16.gmra.mrb[0].mxu0 %v576
        %v661 = vpop.f32.mrb[0].mxu0
        %v662 = vadd.f32 0.0, %v661
        %v663 = vpop.f32.mrb[0].mxu0
        %v664 = vpop.f32.mrb[0].mxu0
        %v665 = vadd.f32 0.0, %v664
        %v666 = vpop.f32.mrb[0].mxu0
        %667 = vmatprep.mubr.bf16.mxu0 0
        %668 = vmatmul.mubr.bf16.gmra.mrb[0].mxu0 %v579
        %v669 = vpop.f32.mrb[0].mxu0
        %v670 = vadd.f32 0.0, %v669
        %v671 = vpop.f32.mrb[0].mxu0
        %v672 = vpop.f32.mrb[0].mxu0
        %v673 = vadd.f32 0.0, %v672
        %v674 = vpop.f32.mrb[0].mxu0
        %675 = vmatprep.mubr.bf16.mxu0 0
        %676 = vmatmul.mubr.bf16.gmra.mrb[0].mxu0 %v582
        %v677 = vpop.f32.mrb[0].mxu0
        %v678 = vadd.f32 0.0, %v677
        %v679 = vpop.f32.mrb[0].mxu0
        %v680 = vpop.f32.mrb[0].mxu0
        %v681 = vadd.f32 0.0, %v680
        %v682 = vpop.f32.mrb[0].mxu0
        %683 = vmatprep.mubr.bf16.mxu0 0
        %684 = vmatmul.mubr.bf16.gmra.mrb[0].mxu0 %v585
        %v685 = vpop.f32.mrb[0].mxu0
        %v686 = vadd.f32 0.0, %v685
        %v687 = vpop.f32.mrb[0].mxu0
        %v688 = vpop.f32.mrb[0].mxu0
        %v689 = vadd.f32 0.0, %v688
        %v690 = vpop.f32.mrb[0].mxu0
        %691 = vmatprep.mubr.bf16.mxu0 0
        %692 = vmatmul.mubr.bf16.gmra.mrb[0].mxu0 %v588
        %v693 = vpop.f32.mrb[0].mxu0
        %v694 = vadd.f32 0.0, %v693
        %v695 = vpop.f32.mrb[0].mxu0
        %v696 = vpop.f32.mrb[0].mxu0
        %v697 = vadd.f32 0.0, %v696
        %v698 = vpop.f32.mrb[0].mxu0
        %699 = vmatprep.mubr.bf16.mxu0 0
        %700 = vmatmul.mubr.bf16.gmra.mrb[0].mxu0 %v591
        %v701 = vpop.f32.mrb[0].mxu0
        %v702 = vadd.f32 0.0, %v701
        %v703 = vpop.f32.mrb[0].mxu0
        %v704 = vpop.f32.mrb[0].mxu0
        %v705 = vadd.f32 0.0, %v704
        %v706 = vpop.f32.mrb[0].mxu0
        %707 = vmatprep.mubr.bf16.mxu0 0
        %708 = vmatmul.mubr.bf16.gmra.mrb[0].mxu0 %v594
        %v709 = vpop.f32.mrb[0].mxu0
        %v710 = vadd.f32 0.0, %v709
        %v711 = vpop.f32.mrb[0].mxu0
        %v712 = vpop.f32.mrb[0].mxu0
        %v713 = vadd.f32 0.0, %v712
        %v714 = vpop.f32.mrb[0].mxu0
        %715 = vmatprep.mubr.bf16.mxu0 0
        %716 = vmatmul.mubr.bf16.gmra.mrb[0].mxu0 %v597
        %v717 = vpop.f32.mrb[0].mxu0
        %v718 = vadd.f32 0.0, %v717
        %v719 = vpop.f32.mrb[0].mxu0
        %v720 = vpop.f32.mrb[0].mxu0
        %v721 = vadd.f32 0.0, %v720
        %v722 = vpop.f32.mrb[0].mxu0
        %723 = vmatprep.mubr.bf16.mxu0 0
        %724 = vmatmul.mubr.bf16.gmra.mrb[0].mxu0 %v600
        %v725 = vpop.f32.mrb[0].mxu0
        %v726 = vadd.f32 0.0, %v725
        %v727 = vpop.f32.mrb[0].mxu0
        %v728 = vpop.f32.mrb[0].mxu0
        %v729 = vadd.f32 0.0, %v728
        %v730 = vpop.f32.mrb[0].mxu0
        %731 = vmatprep.mubr.bf16.mxu0 0
        %732 = vmatmul.mubr.bf16.gmra.mrb[0].mxu0 %v603
        %v733 = vpop.f32.mrb[0].mxu0
        %v734 = vadd.f32 0.0, %v733
        %v735 = vpop.f32.mrb[0].mxu0
        %v736 = vpop.f32.mrb[0].mxu0
        %v737 = vadd.f32 0.0, %v736
        %v738 = vpop.f32.mrb[0].mxu0
        %739 = vmatprep.mubr.bf16.mxu0 0
        %740 = vmatmul.mubr.bf16.gmra.mrb[0].mxu0 %v606
        %v741 = vpop.f32.mrb[0].mxu0
        %v742 = vadd.f32 0.0, %v741
        %v743 = vpop.f32.mrb[0].mxu0
        %v744 = vpop.f32.mrb[0].mxu0
        %v745 = vadd.f32 0.0, %v744
        %v746 = vpop.f32.mrb[0].mxu0
        %747 = vmatprep.mubr.bf16.mxu0 0
        %748 = vmatmul.mubr.bf16.gmra.mrb[0].mxu0 %v609
        %v749 = vpop.f32.mrb[0].mxu0
        %v750 = vadd.f32 0.0, %v749
        %v751 = vpop.f32.mrb[0].mxu0
        %v752 = vpop.f32.mrb[0].mxu0
        %v753 = vadd.f32 0.0, %v752
        %v754 = vpop.f32.mrb[0].mxu0
        %755 = vmatprep.mubr.bf16.mxu0 0
        %756 = vmatmul.mubr.bf16.gmra.mrb[0].mxu0 %v612
        %v757 = vpop.f32.mrb[0].mxu0
        %v758 = vadd.f32 0.0, %v757
        %v759 = vpop.f32.mrb[0].mxu0
        %v760 = vpop.f32.mrb[0].mxu0
        %v761 = vadd.f32 0.0, %v760
        %v762 = vpop.f32.mrb[0].mxu0
        %763 = vmatprep.mubr.bf16.mxu0 0
        %764 = vmatmul.mubr.bf16.gmra.mrb[0].mxu0 %v615
        %v765 = vpop.f32.mrb[0].mxu0
        %v766 = vadd.f32 0.0, %v765
        %v767 = vpop.f32.mrb[0].mxu0
        %v768 = vpop.f32.mrb[0].mxu0
        %v769 = vadd.f32 0.0, %v768
        %v770 = vpop.f32.mrb[0].mxu0
        %771 = vmatprep.mubr.bf16.mxu0 0
        %772 = vmatmul.mubr.bf16.gmra.mrb[0].mxu0 %v618
        %v773 = vpop.f32.mrb[0].mxu0
        %v774 = vadd.f32 0.0, %v773
        %v775 = vpop.f32.mrb[0].mxu0
        %v776 = vpop.f32.mrb[0].mxu0
        %v777 = vadd.f32 0.0, %v776
        %v778 = vpop.f32.mrb[0].mxu0
        %779 = vmatprep.mubr.bf16.mxu0 0
        %780 = vmatmul.mubr.bf16.gmra.mrb[0].mxu0 %v621
        %v781 = vpop.f32.mrb[0].mxu0
        %v782 = vadd.f32 0.0, %v781
        %v783 = vpop.f32.mrb[0].mxu0
        %v784 = vpop.f32.mrb[0].mxu0
        %v785 = vadd.f32 0.0, %v784
        %v786 = vpop.f32.mrb[0].mxu0
        %787 = vdwg.mxu0
        %820 = vrot.lane.b32.xlu0 %v662, 120
        %v821 = vpop.permute.xlu0 %820
        %822 = vrot.lane.b32.xlu0 %v665, 120
        %v823 = vpop.permute.xlu0 %822
        %824 = vrot.lane.b32.xlu0 %v670, 120
        %v825 = vpop.permute.xlu0 %824
        %826 = vrot.lane.b32.xlu0 %v673, 120
        %v827 = vpop.permute.xlu0 %826
        %828 = vrot.lane.b32.xlu0 %v678, 120
        %v829 = vpop.permute.xlu0 %828
        %830 = vrot.lane.b32.xlu0 %v681, 120
        %v831 = vpop.permute.xlu0 %830
        %832 = vrot.lane.b32.xlu0 %v686, 120
        %v833 = vpop.permute.xlu0 %832
        %834 = vrot.lane.b32.xlu0 %v689, 120
        %v835 = vpop.permute.xlu0 %834
        %836 = vrot.lane.b32.xlu0 %v694, 120
        %v837 = vpop.permute.xlu0 %836
        %838 = vrot.lane.b32.xlu0 %v697, 120
        %v839 = vpop.permute.xlu0 %838
        %840 = vrot.lane.b32.xlu0 %v702, 120
        %v841 = vpop.permute.xlu0 %840
        %842 = vrot.lane.b32.xlu0 %v705, 120
        %v843 = vpop.permute.xlu0 %842
        %844 = vrot.lane.b32.xlu0 %v710, 120
        %v845 = vpop.permute.xlu0 %844
        %846 = vrot.lane.b32.xlu0 %v713, 120
        %v847 = vpop.permute.xlu0 %846
        %848 = vrot.lane.b32.xlu0 %v718, 120
        %v849 = vpop.permute.xlu0 %848
        %850 = vrot.lane.b32.xlu0 %v721, 120
        %v851 = vpop.permute.xlu0 %850
        %852 = vrot.lane.b32.xlu0 %v726, 120
        %v853 = vpop.permute.xlu0 %852
        %854 = vrot.lane.b32.xlu0 %v729, 120
        %v855 = vpop.permute.xlu0 %854
        %856 = vrot.lane.b32.xlu0 %v734, 120
        %v857 = vpop.permute.xlu0 %856
        %858 = vrot.lane.b32.xlu0 %v737, 120
        %v859 = vpop.permute.xlu0 %858
        %860 = vrot.lane.b32.xlu0 %v742, 120
        %v861 = vpop.permute.xlu0 %860
        %862 = vrot.lane.b32.xlu0 %v745, 120
        %v863 = vpop.permute.xlu0 %862
        %864 = vrot.lane.b32.xlu0 %v750, 120
        %v865 = vpop.permute.xlu0 %864
        %866 = vrot.lane.b32.xlu0 %v753, 120
        %v867 = vpop.permute.xlu0 %866
        %868 = vrot.lane.b32.xlu0 %v758, 120
        %v869 = vpop.permute.xlu0 %868
        %870 = vrot.lane.b32.xlu0 %v761, 120
        %v871 = vpop.permute.xlu0 %870
        %872 = vrot.lane.b32.xlu0 %v766, 120
        %v873 = vpop.permute.xlu0 %872
        %874 = vrot.lane.b32.xlu0 %v769, 120
        %v875 = vpop.permute.xlu0 %874
        %876 = vrot.lane.b32.xlu0 %v774, 120
        %v877 = vpop.permute.xlu0 %876
        %878 = vrot.lane.b32.xlu0 %v777, 120
        %v879 = vpop.permute.xlu0 %878
        %880 = vrot.lane.b32.xlu0 %v782, 120
        %v881 = vpop.permute.xlu0 %880
        %882 = vrot.lane.b32.xlu0 %v785, 120
        %v883 = vpop.permute.xlu0 %882
        %vm916 = vcmask 64512
        %917 = vst.msk [vmem:[#allocation5] sm:$0xff] %vm916, %v821
        %918 = vst.msk [vmem:[#allocation5 + $0x8] sm:$0xff] %vm916, %v823
        %919 = vst.msk [vmem:[#allocation5 + $0x10] sm:$0xff] %vm916, %v825
        %920 = vst.msk [vmem:[#allocation5 + $0x18] sm:$0xff] %vm916, %v827
        %921 = vst.msk [vmem:[#allocation5 + $0x20] sm:$0xff] %vm916, %v829
        %922 = vst.msk [vmem:[#allocation5 + $0x28] sm:$0xff] %vm916, %v831
        %923 = vst.msk [vmem:[#allocation5 + $0x30] sm:$0xff] %vm916, %v833
        %924 = vst.msk [vmem:[#allocation5 + $0x38] sm:$0xff] %vm916, %v835
        %925 = vst.msk [vmem:[#allocation5 + $0x40] sm:$0xff] %vm916, %v837
        %926 = vst.msk [vmem:[#allocation5 + $0x48] sm:$0xff] %vm916, %v839
        %927 = vst.msk [vmem:[#allocation5 + $0x50] sm:$0xff] %vm916, %v841
        %928 = vst.msk [vmem:[#allocation5 + $0x58] sm:$0xff] %vm916, %v843
        %929 = vst.msk [vmem:[#allocation5 + $0x60] sm:$0xff] %vm916, %v845
        %930 = vst.msk [vmem:[#allocation5 + $0x68] sm:$0xff] %vm916, %v847
        %931 = vst.msk [vmem:[#allocation5 + $0x70] sm:$0xff] %vm916, %v849
        %932 = vst.msk [vmem:[#allocation5 + $0x78] sm:$0xff] %vm916, %v851
        %933 = vst.msk [vmem:[#allocation5 + $0x80] sm:$0xff] %vm916, %v853
        %934 = vst.msk [vmem:[#allocation5 + $0x88] sm:$0xff] %vm916, %v855
        %935 = vst.msk [vmem:[#allocation5 + $0x90] sm:$0xff] %vm916, %v857
        %936 = vst.msk [vmem:[#allocation5 + $0x98] sm:$0xff] %vm916, %v859
        %937 = vst.msk [vmem:[#allocation5 + $0xa0] sm:$0xff] %vm916, %v861
        %938 = vst.msk [vmem:[#allocation5 + $0xa8] sm:$0xff] %vm916, %v863
        %939 = vst.msk [vmem:[#allocation5 + $0xb0] sm:$0xff] %vm916, %v865
        %940 = vst.msk [vmem:[#allocation5 + $0xb8] sm:$0xff] %vm916, %v867
        %941 = vst.msk [vmem:[#allocation5 + $0xc0] sm:$0xff] %vm916, %v869
        %942 = vst.msk [vmem:[#allocation5 + $0xc8] sm:$0xff] %vm916, %v871
        %943 = vst.msk [vmem:[#allocation5 + $0xd0] sm:$0xff] %vm916, %v873
        %944 = vst.msk [vmem:[#allocation5 + $0xd8] sm:$0xff] %vm916, %v875
        %945 = vst.msk [vmem:[#allocation5 + $0xe0] sm:$0xff] %vm916, %v877
        %946 = vst.msk [vmem:[#allocation5 + $0xe8] sm:$0xff] %vm916, %v879
        %947 = vst.msk [vmem:[#allocation5 + $0xf0] sm:$0xff] %vm916, %v881
        %948 = vst.msk [vmem:[#allocation5 + $0xf8] sm:$0xff] %vm916, %v883
        %v949 = vld [vmem:[#allocation3] sm:$0xff]
        %v950 = vld [vmem:[%s4] sm:$0xf]
        %v951 = vld [vmem:[%s5] sm:$0x1]
        %v952 = vlaneseq
        %v953 = vshrl.u32 %v952, 7
        %v954 = vsub.s32 0, %v953
        %v955 = vrot.slane %v950, %v954
        %v956 = vmul.f32 %v949, %v955
        %v957 = vmul.f32 %v662, %v955
        %v958 = vmul.f32 %v665, %v955
        %v959 = vmul.f32 %v670, %v955
        %v960 = vmul.f32 %v673, %v955
        %v961 = vmul.f32 %v678, %v955
        %v962 = vmul.f32 %v681, %v955
        %v963 = vmul.f32 %v686, %v955
        %v964 = vmul.f32 %v689, %v955
        %v965 = vmul.f32 %v694, %v955
        %v966 = vmul.f32 %v697, %v955
        %v967 = vmul.f32 %v702, %v955
        %v968 = vmul.f32 %v705, %v955
        %v969 = vmul.f32 %v710, %v955
        %v970 = vmul.f32 %v713, %v955
        %v971 = vmul.f32 %v718, %v955
        %v972 = vmul.f32 %v721, %v955
        %v973 = vmul.f32 %v726, %v955
        %v974 = vmul.f32 %v729, %v955
        %v975 = vmul.f32 %v734, %v955
        %v976 = vmul.f32 %v737, %v955
        %v977 = vmul.f32 %v742, %v955
        %v978 = vmul.f32 %v745, %v955
        %v979 = vmul.f32 %v750, %v955
        %v980 = vmul.f32 %v753, %v955
        %v981 = vmul.f32 %v758, %v955
        %v982 = vmul.f32 %v761, %v955
        %v983 = vmul.f32 %v766, %v955
        %v984 = vmul.f32 %v769, %v955
        %v985 = vmul.f32 %v774, %v955
        %v986 = vmul.f32 %v777, %v955
        %v987 = vmul.f32 %v782, %v955
        %v988 = vmul.f32 %v785, %v955
        %v990 = vlaneseq
        %v991 = vshrl.u32 %v990, 7
        %v992 = vsub.s32 0, %v991
        %v993 = vrot.slane %v951, %v992
        %v995 = vadd.f32 %v993, %v956
        %v996 = vadd.f32 %v993, %v957
        %v997 = vadd.f32 %v993, %v958
        %v998 = vadd.f32 %v993, %v959
        %v999 = vadd.f32 %v993, %v960
        %v1000 = vadd.f32 %v993, %v961
        %v1001 = vadd.f32 %v993, %v962
        %v1002 = vadd.f32 %v993, %v963
        %v1003 = vadd.f32 %v993, %v964
        %v1004 = vadd.f32 %v993, %v965
        %v1005 = vadd.f32 %v993, %v966
        %v1006 = vadd.f32 %v993, %v967
        %v1007 = vadd.f32 %v993, %v968
        %v1008 = vadd.f32 %v993, %v969
        %v1009 = vadd.f32 %v993, %v970
        %v1010 = vadd.f32 %v993, %v971
        %v1011 = vadd.f32 %v993, %v972
        %v1012 = vadd.f32 %v993, %v973
        %v1013 = vadd.f32 %v993, %v974
        %v1014 = vadd.f32 %v993, %v975
        %v1015 = vadd.f32 %v993, %v976
        %v1016 = vadd.f32 %v993, %v977
        %v1017 = vadd.f32 %v993, %v978
        %v1018 = vadd.f32 %v993, %v979
        %v1019 = vadd.f32 %v993, %v980
        %v1020 = vadd.f32 %v993, %v981
        %v1021 = vadd.f32 %v993, %v982
        %v1022 = vadd.f32 %v993, %v983
        %v1023 = vadd.f32 %v993, %v984
        %v1024 = vadd.f32 %v993, %v985
        %v1025 = vadd.f32 %v993, %v986
        %v1026 = vadd.f32 %v993, %v987
        %v1027 = vadd.f32 %v993, %v988
        %v1028 = vlaneseq
        %v1029 = vshrl.u32 %v1028, 7
        %v1030 = vsub.s32 1, %v1029
        %v1031 = vrot.slane %v950, %v1030
        %v1032 = vmul.f32 %v949, %v1031
        %v1033 = vmul.f32 %v662, %v1031
        %v1034 = vmul.f32 %v665, %v1031
        %v1035 = vmul.f32 %v670, %v1031
        %v1036 = vmul.f32 %v673, %v1031
        %v1037 = vmul.f32 %v678, %v1031
        %v1038 = vmul.f32 %v681, %v1031
        %v1039 = vmul.f32 %v686, %v1031
        %v1040 = vmul.f32 %v689, %v1031
        %v1041 = vmul.f32 %v694, %v1031
        %v1042 = vmul.f32 %v697, %v1031
        %v1043 = vmul.f32 %v702, %v1031
        %v1044 = vmul.f32 %v705, %v1031
        %v1045 = vmul.f32 %v710, %v1031
        %v1046 = vmul.f32 %v713, %v1031
        %v1047 = vmul.f32 %v718, %v1031
        %v1048 = vmul.f32 %v721, %v1031
        %v1049 = vmul.f32 %v726, %v1031
        %v1050 = vmul.f32 %v729, %v1031
        %v1051 = vmul.f32 %v734, %v1031
        %v1052 = vmul.f32 %v737, %v1031
        %v1053 = vmul.f32 %v742, %v1031
        %v1054 = vmul.f32 %v745, %v1031
        %v1055 = vmul.f32 %v750, %v1031
        %v1056 = vmul.f32 %v753, %v1031
        %v1057 = vmul.f32 %v758, %v1031
        %v1058 = vmul.f32 %v761, %v1031
        %v1059 = vmul.f32 %v766, %v1031
        %v1060 = vmul.f32 %v769, %v1031
        %v1061 = vmul.f32 %v774, %v1031
        %v1062 = vmul.f32 %v777, %v1031
        %v1063 = vmul.f32 %v782, %v1031
        %v1064 = vmul.f32 %v785, %v1031
        %vm1098 = vcmask 1046528
        %v1099 = vrot.slane %v1032, 1
        %v1100 = vrot.slane %v1033, 1
        %v1101 = vsel %vm1098, %v1099, %v1100
        %v1102 = vrot.slane %v1034, 1
        %v1103 = vsel %vm1098, %v1100, %v1102
        %v1104 = vrot.slane %v1035, 1
        %v1105 = vsel %vm1098, %v1102, %v1104
        %v1106 = vrot.slane %v1036, 1
        %v1107 = vsel %vm1098, %v1104, %v1106
        %v1108 = vrot.slane %v1037, 1
        %v1109 = vsel %vm1098, %v1106, %v1108
        %v1110 = vrot.slane %v1038, 1
        %v1111 = vsel %vm1098, %v1108, %v1110
        %v1112 = vrot.slane %v1039, 1
        %v1113 = vsel %vm1098, %v1110, %v1112
        %v1114 = vrot.slane %v1040, 1
        %v1115 = vsel %vm1098, %v1112, %v1114
        %v1116 = vrot.slane %v1041, 1
        %v1117 = vsel %vm1098, %v1114, %v1116
        %v1118 = vrot.slane %v1042, 1
        %v1119 = vsel %vm1098, %v1116, %v1118
        %v1120 = vrot.slane %v1043, 1
        %v1121 = vsel %vm1098, %v1118, %v1120
        %v1122 = vrot.slane %v1044, 1
        %v1123 = vsel %vm1098, %v1120, %v1122
        %v1124 = vrot.slane %v1045, 1
        %v1125 = vsel %vm1098, %v1122, %v1124
        %v1126 = vrot.slane %v1046, 1
        %v1127 = vsel %vm1098, %v1124, %v1126
        %v1128 = vrot.slane %v1047, 1
        %v1129 = vsel %vm1098, %v1126, %v1128
        %v1130 = vrot.slane %v1048, 1
        %v1131 = vsel %vm1098, %v1128, %v1130
        %v1132 = vrot.slane %v1049, 1
        %v1133 = vsel %vm1098, %v1130, %v1132
        %v1134 = vrot.slane %v1050, 1
        %v1135 = vsel %vm1098, %v1132, %v1134
        %v1136 = vrot.slane %v1051, 1
        %v1137 = vsel %vm1098, %v1134, %v1136
        %v1138 = vrot.slane %v1052, 1
        %v1139 = vsel %vm1098, %v1136, %v1138
        %v1140 = vrot.slane %v1053, 1
        %v1141 = vsel %vm1098, %v1138, %v1140
        %v1142 = vrot.slane %v1054, 1
        %v1143 = vsel %vm1098, %v1140, %v1142
        %v1144 = vrot.slane %v1055, 1
        %v1145 = vsel %vm1098, %v1142, %v1144
        %v1146 = vrot.slane %v1056, 1
        %v1147 = vsel %vm1098, %v1144, %v1146
        %v1148 = vrot.slane %v1057, 1
        %v1149 = vsel %vm1098, %v1146, %v1148
        %v1150 = vrot.slane %v1058, 1
        %v1151 = vsel %vm1098, %v1148, %v1150
        %v1152 = vrot.slane %v1059, 1
        %v1153 = vsel %vm1098, %v1150, %v1152
        %v1154 = vrot.slane %v1060, 1
        %v1155 = vsel %vm1098, %v1152, %v1154
        %v1156 = vrot.slane %v1061, 1
        %v1157 = vsel %vm1098, %v1154, %v1156
        %v1158 = vrot.slane %v1062, 1
        %v1159 = vsel %vm1098, %v1156, %v1158
        %v1160 = vrot.slane %v1063, 1
        %v1161 = vsel %vm1098, %v1158, %v1160
        %v1162 = vrot.slane %v1064, 1
        %v1163 = vsel %vm1098, %v1160, %v1162
        %v1197 = vadd.f32 %v995, %v1101
        %v1198 = vadd.f32 %v996, %v1103
        %v1199 = vadd.f32 %v997, %v1105
        %v1200 = vadd.f32 %v998, %v1107
        %v1201 = vadd.f32 %v999, %v1109
        %v1202 = vadd.f32 %v1000, %v1111
        %v1203 = vadd.f32 %v1001, %v1113
        %v1204 = vadd.f32 %v1002, %v1115
        %v1205 = vadd.f32 %v1003, %v1117
        %v1206 = vadd.f32 %v1004, %v1119
        %v1207 = vadd.f32 %v1005, %v1121
        %v1208 = vadd.f32 %v1006, %v1123
        %v1209 = vadd.f32 %v1007, %v1125
        %v1210 = vadd.f32 %v1008, %v1127
        %v1211 = vadd.f32 %v1009, %v1129
        %v1212 = vadd.f32 %v1010, %v1131
        %v1213 = vadd.f32 %v1011, %v1133
        %v1214 = vadd.f32 %v1012, %v1135
        %v1215 = vadd.f32 %v1013, %v1137
        %v1216 = vadd.f32 %v1014, %v1139
        %v1217 = vadd.f32 %v1015, %v1141
        %v1218 = vadd.f32 %v1016, %v1143
        %v1219 = vadd.f32 %v1017, %v1145
        %v1220 = vadd.f32 %v1018, %v1147
        %v1221 = vadd.f32 %v1019, %v1149
        %v1222 = vadd.f32 %v1020, %v1151
        %v1223 = vadd.f32 %v1021, %v1153
        %v1224 = vadd.f32 %v1022, %v1155
        %v1225 = vadd.f32 %v1023, %v1157
        %v1226 = vadd.f32 %v1024, %v1159
        %v1227 = vadd.f32 %v1025, %v1161
        %v1228 = vadd.f32 %v1026, %v1163
        %v1229 = vadd.f32 %v1027, %v1162
        %v1230 = vlaneseq
        %v1231 = vshrl.u32 %v1230, 7
        %v1232 = vsub.s32 2, %v1231
        %v1233 = vrot.slane %v950, %v1232
        %v1234 = vmul.f32 %v949, %v1233
        %v1235 = vmul.f32 %v662, %v1233
        %v1236 = vmul.f32 %v665, %v1233
        %v1237 = vmul.f32 %v670, %v1233
        %v1238 = vmul.f32 %v673, %v1233
        %v1239 = vmul.f32 %v678, %v1233
        %v1240 = vmul.f32 %v681, %v1233
        %v1241 = vmul.f32 %v686, %v1233
        %v1242 = vmul.f32 %v689, %v1233
        %v1243 = vmul.f32 %v694, %v1233
        %v1244 = vmul.f32 %v697, %v1233
        %v1245 = vmul.f32 %v702, %v1233
        %v1246 = vmul.f32 %v705, %v1233
        %v1247 = vmul.f32 %v710, %v1233
        %v1248 = vmul.f32 %v713, %v1233
        %v1249 = vmul.f32 %v718, %v1233
        %v1250 = vmul.f32 %v721, %v1233
        %v1251 = vmul.f32 %v726, %v1233
        %v1252 = vmul.f32 %v729, %v1233
        %v1253 = vmul.f32 %v734, %v1233
        %v1254 = vmul.f32 %v737, %v1233
        %v1255 = vmul.f32 %v742, %v1233
        %v1256 = vmul.f32 %v745, %v1233
        %v1257 = vmul.f32 %v750, %v1233
        %v1258 = vmul.f32 %v753, %v1233
        %v1259 = vmul.f32 %v758, %v1233
        %v1260 = vmul.f32 %v761, %v1233
        %v1261 = vmul.f32 %v766, %v1233
        %v1262 = vmul.f32 %v769, %v1233
        %v1263 = vmul.f32 %v774, %v1233
        %v1264 = vmul.f32 %v777, %v1233
        %v1265 = vmul.f32 %v782, %v1233
        %v1266 = vmul.f32 %v785, %v1233
        %vm1300 = vcmask 1045504
        %v1301 = vrot.slane %v1234, 2
        %v1302 = vrot.slane %v1235, 2
        %v1303 = vsel %vm1300, %v1301, %v1302
        %v1304 = vrot.slane %v1236, 2
        %v1305 = vsel %vm1300, %v1302, %v1304
        %v1306 = vrot.slane %v1237, 2
        %v1307 = vsel %vm1300, %v1304, %v1306
        %v1308 = vrot.slane %v1238, 2
        %v1309 = vsel %vm1300, %v1306, %v1308
        %v1310 = vrot.slane %v1239, 2
        %v1311 = vsel %vm1300, %v1308, %v1310
        %v1312 = vrot.slane %v1240, 2
        %v1313 = vsel %vm1300, %v1310, %v1312
        %v1314 = vrot.slane %v1241, 2
        %v1315 = vsel %vm1300, %v1312, %v1314
        %v1316 = vrot.slane %v1242, 2
        %v1317 = vsel %vm1300, %v1314, %v1316
        %v1318 = vrot.slane %v1243, 2
        %v1319 = vsel %vm1300, %v1316, %v1318
        %v1320 = vrot.slane %v1244, 2
        %v1321 = vsel %vm1300, %v1318, %v1320
        %v1322 = vrot.slane %v1245, 2
        %v1323 = vsel %vm1300, %v1320, %v1322
        %v1324 = vrot.slane %v1246, 2
        %v1325 = vsel %vm1300, %v1322, %v1324
        %v1326 = vrot.slane %v1247, 2
        %v1327 = vsel %vm1300, %v1324, %v1326
        %v1328 = vrot.slane %v1248, 2
        %v1329 = vsel %vm1300, %v1326, %v1328
        %v1330 = vrot.slane %v1249, 2
        %v1331 = vsel %vm1300, %v1328, %v1330
        %v1332 = vrot.slane %v1250, 2
        %v1333 = vsel %vm1300, %v1330, %v1332
        %v1334 = vrot.slane %v1251, 2
        %v1335 = vsel %vm1300, %v1332, %v1334
        %v1336 = vrot.slane %v1252, 2
        %v1337 = vsel %vm1300, %v1334, %v1336
        %v1338 = vrot.slane %v1253, 2
        %v1339 = vsel %vm1300, %v1336, %v1338
        %v1340 = vrot.slane %v1254, 2
        %v1341 = vsel %vm1300, %v1338, %v1340
        %v1342 = vrot.slane %v1255, 2
        %v1343 = vsel %vm1300, %v1340, %v1342
        %v1344 = vrot.slane %v1256, 2
        %v1345 = vsel %vm1300, %v1342, %v1344
        %v1346 = vrot.slane %v1257, 2
        %v1347 = vsel %vm1300, %v1344, %v1346
        %v1348 = vrot.slane %v1258, 2
        %v1349 = vsel %vm1300, %v1346, %v1348
        %v1350 = vrot.slane %v1259, 2
        %v1351 = vsel %vm1300, %v1348, %v1350
        %v1352 = vrot.slane %v1260, 2
        %v1353 = vsel %vm1300, %v1350, %v1352
        %v1354 = vrot.slane %v1261, 2
        %v1355 = vsel %vm1300, %v1352, %v1354
        %v1356 = vrot.slane %v1262, 2
        %v1357 = vsel %vm1300, %v1354, %v1356
        %v1358 = vrot.slane %v1263, 2
        %v1359 = vsel %vm1300, %v1356, %v1358
        %v1360 = vrot.slane %v1264, 2
        %v1361 = vsel %vm1300, %v1358, %v1360
        %v1362 = vrot.slane %v1265, 2
        %v1363 = vsel %vm1300, %v1360, %v1362
        %v1364 = vrot.slane %v1266, 2
        %v1365 = vsel %vm1300, %v1362, %v1364
        %v1399 = vadd.f32 %v1197, %v1303
        %v1400 = vadd.f32 %v1198, %v1305
        %v1401 = vadd.f32 %v1199, %v1307
        %v1402 = vadd.f32 %v1200, %v1309
        %v1403 = vadd.f32 %v1201, %v1311
        %v1404 = vadd.f32 %v1202, %v1313
        %v1405 = vadd.f32 %v1203, %v1315
        %v1406 = vadd.f32 %v1204, %v1317
        %v1407 = vadd.f32 %v1205, %v1319
        %v1408 = vadd.f32 %v1206, %v1321
        %v1409 = vadd.f32 %v1207, %v1323
        %v1410 = vadd.f32 %v1208, %v1325
        %v1411 = vadd.f32 %v1209, %v1327
        %v1412 = vadd.f32 %v1210, %v1329
        %v1413 = vadd.f32 %v1211, %v1331
        %v1414 = vadd.f32 %v1212, %v1333
        %v1415 = vadd.f32 %v1213, %v1335
        %v1416 = vadd.f32 %v1214, %v1337
        %v1417 = vadd.f32 %v1215, %v1339
        %v1418 = vadd.f32 %v1216, %v1341
        %v1419 = vadd.f32 %v1217, %v1343
        %v1420 = vadd.f32 %v1218, %v1345
        %v1421 = vadd.f32 %v1219, %v1347
        %v1422 = vadd.f32 %v1220, %v1349
        %v1423 = vadd.f32 %v1221, %v1351
        %v1424 = vadd.f32 %v1222, %v1353
        %v1425 = vadd.f32 %v1223, %v1355
        %v1426 = vadd.f32 %v1224, %v1357
        %v1427 = vadd.f32 %v1225, %v1359
        %v1428 = vadd.f32 %v1226, %v1361
        %v1429 = vadd.f32 %v1227, %v1363
        %v1430 = vadd.f32 %v1228, %v1365
        %v1431 = vadd.f32 %v1229, %v1364
        %v1432 = vlaneseq
        %v1433 = vshrl.u32 %v1432, 7
        %v1434 = vsub.s32 3, %v1433
        %v1435 = vrot.slane %v950, %v1434
        %v1436 = vmul.f32 %v662, %v1435
        %v1437 = vmul.f32 %v665, %v1435
        %v1438 = vmul.f32 %v670, %v1435
        %v1439 = vmul.f32 %v673, %v1435
        %v1440 = vmul.f32 %v678, %v1435
        %v1441 = vmul.f32 %v681, %v1435
        %v1442 = vmul.f32 %v686, %v1435
        %v1443 = vmul.f32 %v689, %v1435
        %v1444 = vmul.f32 %v694, %v1435
        %v1445 = vmul.f32 %v697, %v1435
        %v1446 = vmul.f32 %v702, %v1435
        %v1447 = vmul.f32 %v705, %v1435
        %v1448 = vmul.f32 %v710, %v1435
        %v1449 = vmul.f32 %v713, %v1435
        %v1450 = vmul.f32 %v718, %v1435
        %v1451 = vmul.f32 %v721, %v1435
        %v1452 = vmul.f32 %v726, %v1435
        %v1453 = vmul.f32 %v729, %v1435
        %v1454 = vmul.f32 %v734, %v1435
        %v1455 = vmul.f32 %v737, %v1435
        %v1456 = vmul.f32 %v742, %v1435
        %v1457 = vmul.f32 %v745, %v1435
        %v1458 = vmul.f32 %v750, %v1435
        %v1459 = vmul.f32 %v753, %v1435
        %v1460 = vmul.f32 %v758, %v1435
        %v1461 = vmul.f32 %v761, %v1435
        %v1462 = vmul.f32 %v766, %v1435
        %v1463 = vmul.f32 %v769, %v1435
        %v1464 = vmul.f32 %v774, %v1435
        %v1465 = vmul.f32 %v777, %v1435
        %v1466 = vmul.f32 %v782, %v1435
        %v1467 = vmul.f32 %v785, %v1435
        %vm1500 = vcmask 1044480
        %v1501 = vrot.slane %v1436, 3
        %v1502 = vrot.slane %v1437, 3
        %v1503 = vsel %vm1500, %v1501, %v1502
        %v1504 = vrot.slane %v1438, 3
        %v1505 = vsel %vm1500, %v1502, %v1504
        %v1506 = vrot.slane %v1439, 3
        %v1507 = vsel %vm1500, %v1504, %v1506
        %v1508 = vrot.slane %v1440, 3
        %v1509 = vsel %vm1500, %v1506, %v1508
        %v1510 = vrot.slane %v1441, 3
        %v1511 = vsel %vm1500, %v1508, %v1510
        %v1512 = vrot.slane %v1442, 3
        %v1513 = vsel %vm1500, %v1510, %v1512
        %v1514 = vrot.slane %v1443, 3
        %v1515 = vsel %vm1500, %v1512, %v1514
        %v1516 = vrot.slane %v1444, 3
        %v1517 = vsel %vm1500, %v1514, %v1516
        %v1518 = vrot.slane %v1445, 3
        %v1519 = vsel %vm1500, %v1516, %v1518
        %v1520 = vrot.slane %v1446, 3
        %v1521 = vsel %vm1500, %v1518, %v1520
        %v1522 = vrot.slane %v1447, 3
        %v1523 = vsel %vm1500, %v1520, %v1522
        %v1524 = vrot.slane %v1448, 3
        %v1525 = vsel %vm1500, %v1522, %v1524
        %v1526 = vrot.slane %v1449, 3
        %v1527 = vsel %vm1500, %v1524, %v1526
        %v1528 = vrot.slane %v1450, 3
        %v1529 = vsel %vm1500, %v1526, %v1528
        %v1530 = vrot.slane %v1451, 3
        %v1531 = vsel %vm1500, %v1528, %v1530
        %v1532 = vrot.slane %v1452, 3
        %v1533 = vsel %vm1500, %v1530, %v1532
        %v1534 = vrot.slane %v1453, 3
        %v1535 = vsel %vm1500, %v1532, %v1534
        %v1536 = vrot.slane %v1454, 3
        %v1537 = vsel %vm1500, %v1534, %v1536
        %v1538 = vrot.slane %v1455, 3
        %v1539 = vsel %vm1500, %v1536, %v1538
        %v1540 = vrot.slane %v1456, 3
        %v1541 = vsel %vm1500, %v1538, %v1540
        %v1542 = vrot.slane %v1457, 3
        %v1543 = vsel %vm1500, %v1540, %v1542
        %v1544 = vrot.slane %v1458, 3
        %v1545 = vsel %vm1500, %v1542, %v1544
        %v1546 = vrot.slane %v1459, 3
        %v1547 = vsel %vm1500, %v1544, %v1546
        %v1548 = vrot.slane %v1460, 3
        %v1549 = vsel %vm1500, %v1546, %v1548
        %v1550 = vrot.slane %v1461, 3
        %v1551 = vsel %vm1500, %v1548, %v1550
        %v1552 = vrot.slane %v1462, 3
        %v1553 = vsel %vm1500, %v1550, %v1552
        %v1554 = vrot.slane %v1463, 3
        %v1555 = vsel %vm1500, %v1552, %v1554
        %v1556 = vrot.slane %v1464, 3
        %v1557 = vsel %vm1500, %v1554, %v1556
        %v1558 = vrot.slane %v1465, 3
        %v1559 = vsel %vm1500, %v1556, %v1558
        %v1560 = vrot.slane %v1466, 3
        %v1561 = vsel %vm1500, %v1558, %v1560
        %v1562 = vrot.slane %v1467, 3
        %v1563 = vsel %vm1500, %v1560, %v1562
        %v1597 = vadd.f32 %v1399, %v1501
        %v1598 = vadd.f32 %v1400, %v1503
        %v1599 = vadd.f32 %v1401, %v1505
        %v1600 = vadd.f32 %v1402, %v1507
        %v1601 = vadd.f32 %v1403, %v1509
        %v1602 = vadd.f32 %v1404, %v1511
        %v1603 = vadd.f32 %v1405, %v1513
        %v1604 = vadd.f32 %v1406, %v1515
        %v1605 = vadd.f32 %v1407, %v1517
        %v1606 = vadd.f32 %v1408, %v1519
        %v1607 = vadd.f32 %v1409, %v1521
        %v1608 = vadd.f32 %v1410, %v1523
        %v1609 = vadd.f32 %v1411, %v1525
        %v1610 = vadd.f32 %v1412, %v1527
        %v1611 = vadd.f32 %v1413, %v1529
        %v1612 = vadd.f32 %v1414, %v1531
        %v1613 = vadd.f32 %v1415, %v1533
        %v1614 = vadd.f32 %v1416, %v1535
        %v1615 = vadd.f32 %v1417, %v1537
        %v1616 = vadd.f32 %v1418, %v1539
        %v1617 = vadd.f32 %v1419, %v1541
        %v1618 = vadd.f32 %v1420, %v1543
        %v1619 = vadd.f32 %v1421, %v1545
        %v1620 = vadd.f32 %v1422, %v1547
        %v1621 = vadd.f32 %v1423, %v1549
        %v1622 = vadd.f32 %v1424, %v1551
        %v1623 = vadd.f32 %v1425, %v1553
        %v1624 = vadd.f32 %v1426, %v1555
        %v1625 = vadd.f32 %v1427, %v1557
        %v1626 = vadd.f32 %v1428, %v1559
        %v1627 = vadd.f32 %v1429, %v1561
        %v1628 = vadd.f32 %v1430, %v1563
        %v1629 = vadd.f32 %v1431, %v1562
        %v1630 = vxor.u32 %v1597, 2147483648
        %v1631 = vxor.u32 %v1598, 2147483648
        %v1632 = vxor.u32 %v1599, 2147483648
        %v1633 = vxor.u32 %v1600, 2147483648
        %v1634 = vxor.u32 %v1601, 2147483648
        %v1635 = vxor.u32 %v1602, 2147483648
        %v1636 = vxor.u32 %v1603, 2147483648
        %v1637 = vxor.u32 %v1604, 2147483648
        %v1638 = vxor.u32 %v1605, 2147483648
        %v1639 = vxor.u32 %v1606, 2147483648
        %v1640 = vxor.u32 %v1607, 2147483648
        %v1641 = vxor.u32 %v1608, 2147483648
        %v1642 = vxor.u32 %v1609, 2147483648
        %v1643 = vxor.u32 %v1610, 2147483648
        %v1644 = vxor.u32 %v1611, 2147483648
        %v1645 = vxor.u32 %v1612, 2147483648
        %v1646 = vxor.u32 %v1613, 2147483648
        %v1647 = vxor.u32 %v1614, 2147483648
        %v1648 = vxor.u32 %v1615, 2147483648
        %v1649 = vxor.u32 %v1616, 2147483648
        %v1650 = vxor.u32 %v1617, 2147483648
        %v1651 = vxor.u32 %v1618, 2147483648
        %v1652 = vxor.u32 %v1619, 2147483648
        %v1653 = vxor.u32 %v1620, 2147483648
        %v1654 = vxor.u32 %v1621, 2147483648
        %v1655 = vxor.u32 %v1622, 2147483648
        %v1656 = vxor.u32 %v1623, 2147483648
        %v1657 = vxor.u32 %v1624, 2147483648
        %v1658 = vxor.u32 %v1625, 2147483648
        %v1659 = vxor.u32 %v1626, 2147483648
        %v1660 = vxor.u32 %v1627, 2147483648
        %v1661 = vxor.u32 %v1628, 2147483648
        %v1662 = vxor.u32 %v1629, 2147483648
        %v1663 = vmul.f32 %v1630, 1.442695
        %v1664 = vpow.pop %v1663
        %v1665 = vmul.f32 %v1631, 1.442695
        %v1666 = vpow.pop %v1665
        %v1667 = vmul.f32 %v1632, 1.442695
        %v1668 = vpow.pop %v1667
        %v1669 = vmul.f32 %v1633, 1.442695
        %v1670 = vpow.pop %v1669
        %v1671 = vmul.f32 %v1634, 1.442695
        %v1672 = vpow.pop %v1671
        %v1673 = vmul.f32 %v1635, 1.442695
        %v1674 = vpow.pop %v1673
        %v1675 = vmul.f32 %v1636, 1.442695
        %v1676 = vpow.pop %v1675
        %v1677 = vmul.f32 %v1637, 1.442695
        %v1678 = vpow.pop %v1677
        %v1679 = vmul.f32 %v1638, 1.442695
        %v1680 = vpow.pop %v1679
        %v1681 = vmul.f32 %v1639, 1.442695
        %v1682 = vpow.pop %v1681
        %v1683 = vmul.f32 %v1640, 1.442695
        %v1684 = vpow.pop %v1683
        %v1685 = vmul.f32 %v1641, 1.442695
        %v1686 = vpow.pop %v1685
        %v1687 = vmul.f32 %v1642, 1.442695
        %v1688 = vpow.pop %v1687
        %v1689 = vmul.f32 %v1643, 1.442695
        %v1690 = vpow.pop %v1689
        %v1691 = vmul.f32 %v1644, 1.442695
        %v1692 = vpow.pop %v1691
        %v1693 = vmul.f32 %v1645, 1.442695
        %v1694 = vpow.pop %v1693
        %v1695 = vmul.f32 %v1646, 1.442695
        %v1696 = vpow.pop %v1695
        %v1697 = vmul.f32 %v1647, 1.442695
        %v1698 = vpow.pop %v1697
        %v1699 = vmul.f32 %v1648, 1.442695
        %v1700 = vpow.pop %v1699
        %v1701 = vmul.f32 %v1649, 1.442695
        %v1702 = vpow.pop %v1701
        %v1703 = vmul.f32 %v1650, 1.442695
        %v1704 = vpow.pop %v1703
        %v1705 = vmul.f32 %v1651, 1.442695
        %v1706 = vpow.pop %v1705
        %v1707 = vmul.f32 %v1652, 1.442695
        %v1708 = vpow.pop %v1707
        %v1709 = vmul.f32 %v1653, 1.442695
        %v1710 = vpow.pop %v1709
        %v1711 = vmul.f32 %v1654, 1.442695
        %v1712 = vpow.pop %v1711
        %v1713 = vmul.f32 %v1655, 1.442695
        %v1714 = vpow.pop %v1713
        %v1715 = vmul.f32 %v1656, 1.442695
        %v1716 = vpow.pop %v1715
        %v1717 = vmul.f32 %v1657, 1.442695
        %v1718 = vpow.pop %v1717
        %v1719 = vmul.f32 %v1658, 1.442695
        %v1720 = vpow.pop %v1719
        %v1721 = vmul.f32 %v1659, 1.442695
        %v1722 = vpow.pop %v1721
        %v1723 = vmul.f32 %v1660, 1.442695
        %v1724 = vpow.pop %v1723
        %v1725 = vmul.f32 %v1661, 1.442695
        %v1726 = vpow.pop %v1725
        %v1727 = vmul.f32 %v1662, 1.442695
        %v1728 = vpow.pop %v1727
        %v1729 = vadd.f32 %v1664, 1.0
        %v1730 = vadd.f32 %v1666, 1.0
        %v1731 = vadd.f32 %v1668, 1.0
        %v1732 = vadd.f32 %v1670, 1.0
        %v1733 = vadd.f32 %v1672, 1.0
        %v1734 = vadd.f32 %v1674, 1.0
        %v1735 = vadd.f32 %v1676, 1.0
        %v1736 = vadd.f32 %v1678, 1.0
        %v1737 = vadd.f32 %v1680, 1.0
        %v1738 = vadd.f32 %v1682, 1.0
        %v1739 = vadd.f32 %v1684, 1.0
        %v1740 = vadd.f32 %v1686, 1.0
        %v1741 = vadd.f32 %v1688, 1.0
        %v1742 = vadd.f32 %v1690, 1.0
        %v1743 = vadd.f32 %v1692, 1.0
        %v1744 = vadd.f32 %v1694, 1.0
        %v1745 = vadd.f32 %v1696, 1.0
        %v1746 = vadd.f32 %v1698, 1.0
        %v1747 = vadd.f32 %v1700, 1.0
        %v1748 = vadd.f32 %v1702, 1.0
        %v1749 = vadd.f32 %v1704, 1.0
        %v1750 = vadd.f32 %v1706, 1.0
        %v1751 = vadd.f32 %v1708, 1.0
        %v1752 = vadd.f32 %v1710, 1.0
        %v1753 = vadd.f32 %v1712, 1.0
        %v1754 = vadd.f32 %v1714, 1.0
        %v1755 = vadd.f32 %v1716, 1.0
        %v1756 = vadd.f32 %v1718, 1.0
        %v1757 = vadd.f32 %v1720, 1.0
        %v1758 = vadd.f32 %v1722, 1.0
        %v1759 = vadd.f32 %v1724, 1.0
        %v1760 = vadd.f32 %v1726, 1.0
        %v1761 = vadd.f32 %v1728, 1.0
        %v1762 = vrcp.pop %v1729
        %v1763 = vmul.f32 1.0, %v1762
        %v1764 = vrcp.pop %v1730
        %v1765 = vmul.f32 1.0, %v1764
        %v1766 = vrcp.pop %v1731
        %v1767 = vmul.f32 1.0, %v1766
        %v1768 = vrcp.pop %v1732
        %v1769 = vmul.f32 1.0, %v1768
        %v1770 = vrcp.pop %v1733
        %v1771 = vmul.f32 1.0, %v1770
        %v1772 = vrcp.pop %v1734
        %v1773 = vmul.f32 1.0, %v1772
        %v1774 = vrcp.pop %v1735
        %v1775 = vmul.f32 1.0, %v1774
        %v1776 = vrcp.pop %v1736
        %v1777 = vmul.f32 1.0, %v1776
        %v1778 = vrcp.pop %v1737
        %v1779 = vmul.f32 1.0, %v1778
        %v1780 = vrcp.pop %v1738
        %v1781 = vmul.f32 1.0, %v1780
        %v1782 = vrcp.pop %v1739
        %v1783 = vmul.f32 1.0, %v1782
        %v1784 = vrcp.pop %v1740
        %v1785 = vmul.f32 1.0, %v1784
        %v1786 = vrcp.pop %v1741
        %v1787 = vmul.f32 1.0, %v1786
        %v1788 = vrcp.pop %v1742
        %v1789 = vmul.f32 1.0, %v1788
        %v1790 = vrcp.pop %v1743
        %v1791 = vmul.f32 1.0, %v1790
        %v1792 = vrcp.pop %v1744
        %v1793 = vmul.f32 1.0, %v1792
        %v1794 = vrcp.pop %v1745
        %v1795 = vmul.f32 1.0, %v1794
        %v1796 = vrcp.pop %v1746
        %v1797 = vmul.f32 1.0, %v1796
        %v1798 = vrcp.pop %v1747
        %v1799 = vmul.f32 1.0, %v1798
        %v1800 = vrcp.pop %v1748
        %v1801 = vmul.f32 1.0, %v1800
        %v1802 = vrcp.pop %v1749
        %v1803 = vmul.f32 1.0, %v1802
        %v1804 = vrcp.pop %v1750
        %v1805 = vmul.f32 1.0, %v1804
        %v1806 = vrcp.pop %v1751
        %v1807 = vmul.f32 1.0, %v1806
        %v1808 = vrcp.pop %v1752
        %v1809 = vmul.f32 1.0, %v1808
        %v1810 = vrcp.pop %v1753
        %v1811 = vmul.f32 1.0, %v1810
        %v1812 = vrcp.pop %v1754
        %v1813 = vmul.f32 1.0, %v1812
        %v1814 = vrcp.pop %v1755
        %v1815 = vmul.f32 1.0, %v1814
        %v1816 = vrcp.pop %v1756
        %v1817 = vmul.f32 1.0, %v1816
        %v1818 = vrcp.pop %v1757
        %v1819 = vmul.f32 1.0, %v1818
        %v1820 = vrcp.pop %v1758
        %v1821 = vmul.f32 1.0, %v1820
        %v1822 = vrcp.pop %v1759
        %v1823 = vmul.f32 1.0, %v1822
        %v1824 = vrcp.pop %v1760
        %v1825 = vmul.f32 1.0, %v1824
        %v1826 = vrcp.pop %v1761
        %v1827 = vmul.f32 1.0, %v1826
        %v1828 = vmul.f32 %v1597, %v1763
        %v1829 = vmul.f32 %v1598, %v1765
        %v1830 = vmul.f32 %v1599, %v1767
        %v1831 = vmul.f32 %v1600, %v1769
        %v1832 = vmul.f32 %v1601, %v1771
        %v1833 = vmul.f32 %v1602, %v1773
        %v1834 = vmul.f32 %v1603, %v1775
        %v1835 = vmul.f32 %v1604, %v1777
        %v1836 = vmul.f32 %v1605, %v1779
        %v1837 = vmul.f32 %v1606, %v1781
        %v1838 = vmul.f32 %v1607, %v1783
        %v1839 = vmul.f32 %v1608, %v1785
        %v1840 = vmul.f32 %v1609, %v1787
        %v1841 = vmul.f32 %v1610, %v1789
        %v1842 = vmul.f32 %v1611, %v1791
        %v1843 = vmul.f32 %v1612, %v1793
        %v1844 = vmul.f32 %v1613, %v1795
        %v1845 = vmul.f32 %v1614, %v1797
        %v1846 = vmul.f32 %v1615, %v1799
        %v1847 = vmul.f32 %v1616, %v1801
        %v1848 = vmul.f32 %v1617, %v1803
        %v1849 = vmul.f32 %v1618, %v1805
        %v1850 = vmul.f32 %v1619, %v1807
        %v1851 = vmul.f32 %v1620, %v1809
        %v1852 = vmul.f32 %v1621, %v1811
        %v1853 = vmul.f32 %v1622, %v1813
        %v1854 = vmul.f32 %v1623, %v1815
        %v1855 = vmul.f32 %v1624, %v1817
        %v1856 = vmul.f32 %v1625, %v1819
        %v1857 = vmul.f32 %v1626, %v1821
        %v1858 = vmul.f32 %v1627, %v1823
        %v1859 = vmul.f32 %v1628, %v1825
        %v1860 = vmul.f32 %v1629, %v1827
        %vm1861 = vcmask 64517
        %1862 = vst.msk [vmem:[#allocation4 - $0x5] sm:$0xe0] %vm1861, %v1828
        %1863 = vst.msk [vmem:[#allocation4 + $0x3] sm:$0xff] %vm916, %v1829
        %1864 = vst.msk [vmem:[#allocation4 + $0xb] sm:$0xff] %vm916, %v1830
        %1865 = vst.msk [vmem:[#allocation4 + $0x13] sm:$0xff] %vm916, %v1831
        %1866 = vst.msk [vmem:[#allocation4 + $0x1b] sm:$0xff] %vm916, %v1832
        %1867 = vst.msk [vmem:[#allocation4 + $0x23] sm:$0xff] %vm916, %v1833
        %1868 = vst.msk [vmem:[#allocation4 + $0x2b] sm:$0xff] %vm916, %v1834
        %1869 = vst.msk [vmem:[#allocation4 + $0x33] sm:$0xff] %vm916, %v1835
        %1870 = vst.msk [vmem:[#allocation4 + $0x3b] sm:$0xff] %vm916, %v1836
        %1871 = vst.msk [vmem:[#allocation4 + $0x43] sm:$0xff] %vm916, %v1837
        %1872 = vst.msk [vmem:[#allocation4 + $0x4b] sm:$0xff] %vm916, %v1838
        %1873 = vst.msk [vmem:[#allocation4 + $0x53] sm:$0xff] %vm916, %v1839
        %1874 = vst.msk [vmem:[#allocation4 + $0x5b] sm:$0xff] %vm916, %v1840
        %1875 = vst.msk [vmem:[#allocation4 + $0x63] sm:$0xff] %vm916, %v1841
        %1876 = vst.msk [vmem:[#allocation4 + $0x6b] sm:$0xff] %vm916, %v1842
        %1877 = vst.msk [vmem:[#allocation4 + $0x73] sm:$0xff] %vm916, %v1843
        %1878 = vst.msk [vmem:[#allocation4 + $0x7b] sm:$0xff] %vm916, %v1844
        %1879 = vst.msk [vmem:[#allocation4 + $0x83] sm:$0xff] %vm916, %v1845
        %1880 = vst.msk [vmem:[#allocation4 + $0x8b] sm:$0xff] %vm916, %v1846
        %1881 = vst.msk [vmem:[#allocation4 + $0x93] sm:$0xff] %vm916, %v1847
        %1882 = vst.msk [vmem:[#allocation4 + $0x9b] sm:$0xff] %vm916, %v1848
        %1883 = vst.msk [vmem:[#allocation4 + $0xa3] sm:$0xff] %vm916, %v1849
        %1884 = vst.msk [vmem:[#allocation4 + $0xab] sm:$0xff] %vm916, %v1850
        %1885 = vst.msk [vmem:[#allocation4 + $0xb3] sm:$0xff] %vm916, %v1851
        %1886 = vst.msk [vmem:[#allocation4 + $0xbb] sm:$0xff] %vm916, %v1852
        %1887 = vst.msk [vmem:[#allocation4 + $0xc3] sm:$0xff] %vm916, %v1853
        %1888 = vst.msk [vmem:[#allocation4 + $0xcb] sm:$0xff] %vm916, %v1854
        %1889 = vst.msk [vmem:[#allocation4 + $0xd3] sm:$0xff] %vm916, %v1855
        %1890 = vst.msk [vmem:[#allocation4 + $0xdb] sm:$0xff] %vm916, %v1856
        %1891 = vst.msk [vmem:[#allocation4 + $0xe3] sm:$0xff] %vm916, %v1857
        %1892 = vst.msk [vmem:[#allocation4 + $0xeb] sm:$0xff] %vm916, %v1858
        %1893 = vst.msk [vmem:[#allocation4 + $0xf3] sm:$0xff] %vm916, %v1859
        %vm1894 = vcmask 61440
        %1895 = vst.msk [vmem:[#allocation4 + $0xfb] sm:$0x1f] %vm1894, %v1860
        %1896 = vst.msk [vmem:[#allocation3] sm:$0xff] %vm916, %v785
        %v1897 = vpack.c.bf16 %v1829, %v1828
        %v1898 = vpack.c.bf16 %v1831, %v1830
        %v1899 = vpack.c.bf16 %v1833, %v1832
        %v1900 = vpack.c.bf16 %v1835, %v1834
        %v1901 = vpack.c.bf16 %v1837, %v1836
        %v1902 = vpack.c.bf16 %v1839, %v1838
        %v1903 = vpack.c.bf16 %v1841, %v1840
        %v1904 = vpack.c.bf16 %v1843, %v1842
        %v1905 = vpack.c.bf16 %v1845, %v1844
        %v1906 = vpack.c.bf16 %v1847, %v1846
        %v1907 = vpack.c.bf16 %v1849, %v1848
        %v1908 = vpack.c.bf16 %v1851, %v1850
        %v1909 = vpack.c.bf16 %v1853, %v1852
        %v1910 = vpack.c.bf16 %v1855, %v1854
        %v1911 = vpack.c.bf16 %v1857, %v1856
        %v1912 = vpack.c.bf16 %v1859, %v1858
        %v1913 = vpack.c.bf16 %v1860, %v1860
        %v1914 = vld [vmem:[%s6] sm:$0xf]
        %v1915 = vld [vmem:[%s7] sm:$0x1]
        %v1917 = vlaneseq
        %v1918 = vshrl.u32 %v1917, 7
        %v1919 = vsub.s32 0, %v1918
        %v1920 = vrot.slane %v1915, %v1919
        %vm1922 = vsmask.f32 5376
        %v1924 = vshrl.u32 %v1897, 16
        %v1926 = vrot.slane %v1924, 2
        %v1927 = vshll.u32 %v1897, 16
        %v1929 = vrot.slane %v1927, 3
        %v1930 = vor.u32 %v1926, %v1929
        %v1932 = vshrl.u32 %v1898, 16
        %v1934 = vrot.slane %v1932, 2
        %v1935 = vshll.u32 %v1898, 16
        %v1937 = vrot.slane %v1935, 3
        %v1938 = vor.u32 %v1934, %v1937
        %v1939 = vsel %vm1922, %v1930, %v1938
        %v1941 = vshrl.u32 %v1899, 16
        %v1943 = vrot.slane %v1941, 2
        %v1944 = vshll.u32 %v1899, 16
        %v1946 = vrot.slane %v1944, 3
        %v1947 = vor.u32 %v1943, %v1946
        %v1948 = vsel %vm1922, %v1938, %v1947
        %v1950 = vshrl.u32 %v1900, 16
        %v1952 = vrot.slane %v1950, 2
        %v1953 = vshll.u32 %v1900, 16
        %v1955 = vrot.slane %v1953, 3
        %v1956 = vor.u32 %v1952, %v1955
        %v1957 = vsel %vm1922, %v1947, %v1956
        %v1959 = vshrl.u32 %v1901, 16
        %v1961 = vrot.slane %v1959, 2
        %v1962 = vshll.u32 %v1901, 16
        %v1964 = vrot.slane %v1962, 3
        %v1965 = vor.u32 %v1961, %v1964
        %v1966 = vsel %vm1922, %v1956, %v1965
        %v1968 = vshrl.u32 %v1902, 16
        %v1970 = vrot.slane %v1968, 2
        %v1971 = vshll.u32 %v1902, 16
        %v1973 = vrot.slane %v1971, 3
        %v1974 = vor.u32 %v1970, %v1973
        %v1975 = vsel %vm1922, %v1965, %v1974
        %v1977 = vshrl.u32 %v1903, 16
        %v1979 = vrot.slane %v1977, 2
        %v1980 = vshll.u32 %v1903, 16
        %v1982 = vrot.slane %v1980, 3
        %v1983 = vor.u32 %v1979, %v1982
        %v1984 = vsel %vm1922, %v1974, %v1983
        %v1986 = vshrl.u32 %v1904, 16
        %v1988 = vrot.slane %v1986, 2
        %v1989 = vshll.u32 %v1904, 16
        %v1991 = vrot.slane %v1989, 3
        %v1992 = vor.u32 %v1988, %v1991
        %v1993 = vsel %vm1922, %v1983, %v1992
        %v1995 = vshrl.u32 %v1905, 16
        %v1997 = vrot.slane %v1995, 2
        %v1998 = vshll.u32 %v1905, 16
        %v2000 = vrot.slane %v1998, 3
        %v2001 = vor.u32 %v1997, %v2000
        %v2002 = vsel %vm1922, %v1992, %v2001
        %v2004 = vshrl.u32 %v1906, 16
        %v2006 = vrot.slane %v2004, 2
        %v2007 = vshll.u32 %v1906, 16
        %v2009 = vrot.slane %v2007, 3
        %v2010 = vor.u32 %v2006, %v2009
        %v2011 = vsel %vm1922, %v2001, %v2010
        %v2013 = vshrl.u32 %v1907, 16
        %v2015 = vrot.slane %v2013, 2
        %v2016 = vshll.u32 %v1907, 16
        %v2018 = vrot.slane %v2016, 3
        %v2019 = vor.u32 %v2015, %v2018
        %v2020 = vsel %vm1922, %v2010, %v2019
        %v2022 = vshrl.u32 %v1908, 16
        %v2024 = vrot.slane %v2022, 2
        %v2025 = vshll.u32 %v1908, 16
        %v2027 = vrot.slane %v2025, 3
        %v2028 = vor.u32 %v2024, %v2027
        %v2029 = vsel %vm1922, %v2019, %v2028
        %v2031 = vshrl.u32 %v1909, 16
        %v2033 = vrot.slane %v2031, 2
        %v2034 = vshll.u32 %v1909, 16
        %v2036 = vrot.slane %v2034, 3
        %v2037 = vor.u32 %v2033, %v2036
        %v2038 = vsel %vm1922, %v2028, %v2037
        %v2040 = vshrl.u32 %v1910, 16
        %v2042 = vrot.slane %v2040, 2
        %v2043 = vshll.u32 %v1910, 16
        %v2045 = vrot.slane %v2043, 3
        %v2046 = vor.u32 %v2042, %v2045
        %v2047 = vsel %vm1922, %v2037, %v2046
        %v2049 = vshrl.u32 %v1911, 16
        %v2051 = vrot.slane %v2049, 2
        %v2052 = vshll.u32 %v1911, 16
        %v2054 = vrot.slane %v2052, 3
        %v2055 = vor.u32 %v2051, %v2054
        %v2056 = vsel %vm1922, %v2046, %v2055
        %v2058 = vshrl.u32 %v1912, 16
        %v2060 = vrot.slane %v2058, 2
        %v2061 = vshll.u32 %v1912, 16
        %v2063 = vrot.slane %v2061, 3
        %v2064 = vor.u32 %v2060, %v2063
        %v2065 = vsel %vm1922, %v2055, %v2064
        %v2067 = vshrl.u32 %v1913, 16
        %v2069 = vrot.slane %v2067, 2
        %v2070 = vshll.u32 %v1913, 16
        %v2072 = vrot.slane %v2070, 3
        %v2073 = vor.u32 %v2069, %v2072
        %v2074 = vsel %vm1922, %v2064, %v2073
        %v2076 = vsel %vm916, %v1939, 0
        %v2079 = vsel %vm916, %v1948, 0
        %v2082 = vsel %vm916, %v1957, 0
        %v2085 = vsel %vm916, %v1966, 0
        %v2088 = vsel %vm916, %v1975, 0
        %v2091 = vsel %vm916, %v1984, 0
        %v2094 = vsel %vm916, %v1993, 0
        %v2097 = vsel %vm916, %v2002, 0
        %v2100 = vsel %vm916, %v2011, 0
        %v2103 = vsel %vm916, %v2020, 0
        %v2106 = vsel %vm916, %v2029, 0
        %v2109 = vsel %vm916, %v2038, 0
        %v2112 = vsel %vm916, %v2047, 0
        %v2115 = vsel %vm916, %v2056, 0
        %v2118 = vsel %vm916, %v2065, 0
        %v2121 = vsel %vm916, %v2074, 0
        %v2124 = vsel %vm456, %v1914, 0
        %2126 = vmatprep.subr.bf16.mxu0 0
        %2127 = vmatpush1.bf16.msra.mxu0 %v2124
        %2128 = vmatprep.subr.bf16.mxu0 0
        %2129 = vmatpush1.bf16.msra.mxu0 0
        %2130 = vmatprep.subr.bf16.mxu0 0
        %2131 = vmatpush1.bf16.msra.mxu0 0
        %2132 = vmatprep.subr.bf16.mxu0 0
        %2133 = vmatpush1.bf16.msra.mxu0 0
        %2134 = vmatprep.subr.bf16.mxu0 0
        %2135 = vmatpush1.bf16.msra.mxu0 0
        %2136 = vmatprep.subr.bf16.mxu0 0
        %2137 = vmatpush1.bf16.msra.mxu0 0
        %2138 = vmatprep.subr.bf16.mxu0 0
        %2139 = vmatpush1.bf16.msra.mxu0 0
        %2140 = vmatprep.subr.bf16.mxu0 0
        %2141 = vmatpush1.bf16.msra.mxu0 0
        %2142 = vmatprep.subr.bf16.mxu0 0
        %2143 = vmatpush1.bf16.msra.mxu0 0
        %2144 = vmatprep.subr.bf16.mxu0 0
        %2145 = vmatpush1.bf16.msra.mxu0 0
        %2146 = vmatprep.subr.bf16.mxu0 0
        %2147 = vmatpush1.bf16.msra.mxu0 0
        %2148 = vmatprep.subr.bf16.mxu0 0
        %2149 = vmatpush1.bf16.msra.mxu0 0
        %2150 = vmatprep.subr.bf16.mxu0 0
        %2151 = vmatpush1.bf16.msra.mxu0 0
        %2152 = vmatprep.subr.bf16.mxu0 0
        %2153 = vmatpush1.bf16.msra.mxu0 0
        %2154 = vmatprep.subr.bf16.mxu0 0
        %2155 = vmatpush1.bf16.msra.mxu0 0
        %2156 = vmatprep.subr.bf16.mxu0 0
        %2157 = vmatpush1.bf16.msra.mxu0 0
        %2158 = vmatprep.mubr.bf16.mxu0 0
        %2159 = vmatmul.mubr.bf16.gmra.mrb[0].mxu0 %v2076
        %v2160 = vpop.f32.mrb[0].mxu0
        %v2161 = vadd.f32 %v1920, %v2160
        %v2162 = vpop.f32.mrb[0].mxu0
        %v2163 = vpop.f32.mrb[0].mxu0
        %v2164 = vadd.f32 %v1920, %v2163
        %v2165 = vpop.f32.mrb[0].mxu0
        %2166 = vmatprep.mubr.bf16.mxu0 0
        %2167 = vmatmul.mubr.bf16.gmra.mrb[0].mxu0 %v2079
        %v2168 = vpop.f32.mrb[0].mxu0
        %v2169 = vadd.f32 %v1920, %v2168
        %v2170 = vpop.f32.mrb[0].mxu0
        %v2171 = vpop.f32.mrb[0].mxu0
        %v2172 = vadd.f32 %v1920, %v2171
        %v2173 = vpop.f32.mrb[0].mxu0
        %2174 = vmatprep.mubr.bf16.mxu0 0
        %2175 = vmatmul.mubr.bf16.gmra.mrb[0].mxu0 %v2082
        %v2176 = vpop.f32.mrb[0].mxu0
        %v2177 = vadd.f32 %v1920, %v2176
        %v2178 = vpop.f32.mrb[0].mxu0
        %v2179 = vpop.f32.mrb[0].mxu0
        %v2180 = vadd.f32 %v1920, %v2179
        %v2181 = vpop.f32.mrb[0].mxu0
        %2182 = vmatprep.mubr.bf16.mxu0 0
        %2183 = vmatmul.mubr.bf16.gmra.mrb[0].mxu0 %v2085
        %v2184 = vpop.f32.mrb[0].mxu0
        %v2185 = vadd.f32 %v1920, %v2184
        %v2186 = vpop.f32.mrb[0].mxu0
        %v2187 = vpop.f32.mrb[0].mxu0
        %v2188 = vadd.f32 %v1920, %v2187
        %v2189 = vpop.f32.mrb[0].mxu0
        %2190 = vmatprep.mubr.bf16.mxu0 0
        %2191 = vmatmul.mubr.bf16.gmra.mrb[0].mxu0 %v2088
        %v2192 = vpop.f32.mrb[0].mxu0
        %v2193 = vadd.f32 %v1920, %v2192
        %v2194 = vpop.f32.mrb[0].mxu0
        %v2195 = vpop.f32.mrb[0].mxu0
        %v2196 = vadd.f32 %v1920, %v2195
        %v2197 = vpop.f32.mrb[0].mxu0
        %2198 = vmatprep.mubr.bf16.mxu0 0
        %2199 = vmatmul.mubr.bf16.gmra.mrb[0].mxu0 %v2091
        %v2200 = vpop.f32.mrb[0].mxu0
        %v2201 = vadd.f32 %v1920, %v2200
        %v2202 = vpop.f32.mrb[0].mxu0
        %v2203 = vpop.f32.mrb[0].mxu0
        %v2204 = vadd.f32 %v1920, %v2203
        %v2205 = vpop.f32.mrb[0].mxu0
        %2206 = vmatprep.mubr.bf16.mxu0 0
        %2207 = vmatmul.mubr.bf16.gmra.mrb[0].mxu0 %v2094
        %v2208 = vpop.f32.mrb[0].mxu0
        %v2209 = vadd.f32 %v1920, %v2208
        %v2210 = vpop.f32.mrb[0].mxu0
        %v2211 = vpop.f32.mrb[0].mxu0
        %v2212 = vadd.f32 %v1920, %v2211
        %v2213 = vpop.f32.mrb[0].mxu0
        %2214 = vmatprep.mubr.bf16.mxu0 0
        %2215 = vmatmul.mubr.bf16.gmra.mrb[0].mxu0 %v2097
        %v2216 = vpop.f32.mrb[0].mxu0
        %v2217 = vadd.f32 %v1920, %v2216
        %v2218 = vpop.f32.mrb[0].mxu0
        %v2219 = vpop.f32.mrb[0].mxu0
        %v2220 = vadd.f32 %v1920, %v2219
        %v2221 = vpop.f32.mrb[0].mxu0
        %2222 = vmatprep.mubr.bf16.mxu0 0
        %2223 = vmatmul.mubr.bf16.gmra.mrb[0].mxu0 %v2100
        %v2224 = vpop.f32.mrb[0].mxu0
        %v2225 = vadd.f32 %v1920, %v2224
        %v2226 = vpop.f32.mrb[0].mxu0
        %v2227 = vpop.f32.mrb[0].mxu0
        %v2228 = vadd.f32 %v1920, %v2227
        %v2229 = vpop.f32.mrb[0].mxu0
        %2230 = vmatprep.mubr.bf16.mxu0 0
        %2231 = vmatmul.mubr.bf16.gmra.mrb[0].mxu0 %v2103
        %v2232 = vpop.f32.mrb[0].mxu0
        %v2233 = vadd.f32 %v1920, %v2232
        %v2234 = vpop.f32.mrb[0].mxu0
        %v2235 = vpop.f32.mrb[0].mxu0
        %v2236 = vadd.f32 %v1920, %v2235
        %v2237 = vpop.f32.mrb[0].mxu0
        %2238 = vmatprep.mubr.bf16.mxu0 0
        %2239 = vmatmul.mubr.bf16.gmra.mrb[0].mxu0 %v2106
        %v2240 = vpop.f32.mrb[0].mxu0
        %v2241 = vadd.f32 %v1920, %v2240
        %v2242 = vpop.f32.mrb[0].mxu0
        %v2243 = vpop.f32.mrb[0].mxu0
        %v2244 = vadd.f32 %v1920, %v2243
        %v2245 = vpop.f32.mrb[0].mxu0
        %2246 = vmatprep.mubr.bf16.mxu0 0
        %2247 = vmatmul.mubr.bf16.gmra.mrb[0].mxu0 %v2109
        %v2248 = vpop.f32.mrb[0].mxu0
        %v2249 = vadd.f32 %v1920, %v2248
        %v2250 = vpop.f32.mrb[0].mxu0
        %v2251 = vpop.f32.mrb[0].mxu0
        %v2252 = vadd.f32 %v1920, %v2251
        %v2253 = vpop.f32.mrb[0].mxu0
        %2254 = vmatprep.mubr.bf16.mxu0 0
        %2255 = vmatmul.mubr.bf16.gmra.mrb[0].mxu0 %v2112
        %v2256 = vpop.f32.mrb[0].mxu0
        %v2257 = vadd.f32 %v1920, %v2256
        %v2258 = vpop.f32.mrb[0].mxu0
        %v2259 = vpop.f32.mrb[0].mxu0
        %v2260 = vadd.f32 %v1920, %v2259
        %v2261 = vpop.f32.mrb[0].mxu0
        %2262 = vmatprep.mubr.bf16.mxu0 0
        %2263 = vmatmul.mubr.bf16.gmra.mrb[0].mxu0 %v2115
        %v2264 = vpop.f32.mrb[0].mxu0
        %v2265 = vadd.f32 %v1920, %v2264
        %v2266 = vpop.f32.mrb[0].mxu0
        %v2267 = vpop.f32.mrb[0].mxu0
        %v2268 = vadd.f32 %v1920, %v2267
        %v2269 = vpop.f32.mrb[0].mxu0
        %2270 = vmatprep.mubr.bf16.mxu0 0
        %2271 = vmatmul.mubr.bf16.gmra.mrb[0].mxu0 %v2118
        %v2272 = vpop.f32.mrb[0].mxu0
        %v2273 = vadd.f32 %v1920, %v2272
        %v2274 = vpop.f32.mrb[0].mxu0
        %v2275 = vpop.f32.mrb[0].mxu0
        %v2276 = vadd.f32 %v1920, %v2275
        %v2277 = vpop.f32.mrb[0].mxu0
        %2278 = vmatprep.mubr.bf16.mxu0 0
        %2279 = vmatmul.mubr.bf16.gmra.mrb[0].mxu0 %v2121
        %v2280 = vpop.f32.mrb[0].mxu0
        %v2281 = vadd.f32 %v1920, %v2280
        %v2282 = vpop.f32.mrb[0].mxu0
        %v2283 = vpop.f32.mrb[0].mxu0
        %v2284 = vadd.f32 %v1920, %v2283
        %v2285 = vpop.f32.mrb[0].mxu0
        %2286 = vdwg.mxu0
        %v2287 = vmax.f32 %v2161, 0.0
        %v2288 = vmax.f32 %v2164, 0.0
        %v2289 = vmax.f32 %v2169, 0.0
        %v2290 = vmax.f32 %v2172, 0.0
        %v2291 = vmax.f32 %v2177, 0.0
        %v2292 = vmax.f32 %v2180, 0.0
        %v2293 = vmax.f32 %v2185, 0.0
        %v2294 = vmax.f32 %v2188, 0.0
        %v2295 = vmax.f32 %v2193, 0.0
        %v2296 = vmax.f32 %v2196, 0.0
        %v2297 = vmax.f32 %v2201, 0.0
        %v2298 = vmax.f32 %v2204, 0.0
        %v2299 = vmax.f32 %v2209, 0.0
        %v2300 = vmax.f32 %v2212, 0.0
        %v2301 = vmax.f32 %v2217, 0.0
        %v2302 = vmax.f32 %v2220, 0.0
        %v2303 = vmax.f32 %v2225, 0.0
        %v2304 = vmax.f32 %v2228, 0.0
        %v2305 = vmax.f32 %v2233, 0.0
        %v2306 = vmax.f32 %v2236, 0.0
        %v2307 = vmax.f32 %v2241, 0.0
        %v2308 = vmax.f32 %v2244, 0.0
        %v2309 = vmax.f32 %v2249, 0.0
        %v2310 = vmax.f32 %v2252, 0.0
        %v2311 = vmax.f32 %v2257, 0.0
        %v2312 = vmax.f32 %v2260, 0.0
        %v2313 = vmax.f32 %v2265, 0.0
        %v2314 = vmax.f32 %v2268, 0.0
        %v2315 = vmax.f32 %v2273, 0.0
        %v2316 = vmax.f32 %v2276, 0.0
        %v2317 = vmax.f32 %v2281, 0.0
        %v2318 = vmax.f32 %v2284, 0.0
        %v2319 = vand.u32 2147483647, %v2161
        %v2320 = vand.u32 2147483647, %v2164
        %v2321 = vand.u32 2147483647, %v2169
        %v2322 = vand.u32 2147483647, %v2172
        %v2323 = vand.u32 2147483647, %v2177
        %v2324 = vand.u32 2147483647, %v2180
        %v2325 = vand.u32 2147483647, %v2185
        %v2326 = vand.u32 2147483647, %v2188
        %v2327 = vand.u32 2147483647, %v2193
        %v2328 = vand.u32 2147483647, %v2196
        %v2329 = vand.u32 2147483647, %v2201
        %v2330 = vand.u32 2147483647, %v2204
        %v2331 = vand.u32 2147483647, %v2209
        %v2332 = vand.u32 2147483647, %v2212
        %v2333 = vand.u32 2147483647, %v2217
        %v2334 = vand.u32 2147483647, %v2220
        %v2335 = vand.u32 2147483647, %v2225
        %v2336 = vand.u32 2147483647, %v2228
        %v2337 = vand.u32 2147483647, %v2233
        %v2338 = vand.u32 2147483647, %v2236
        %v2339 = vand.u32 2147483647, %v2241
        %v2340 = vand.u32 2147483647, %v2244
        %v2341 = vand.u32 2147483647, %v2249
        %v2342 = vand.u32 2147483647, %v2252
        %v2343 = vand.u32 2147483647, %v2257
        %v2344 = vand.u32 2147483647, %v2260
        %v2345 = vand.u32 2147483647, %v2265
        %v2346 = vand.u32 2147483647, %v2268
        %v2347 = vand.u32 2147483647, %v2273
        %v2348 = vand.u32 2147483647, %v2276
        %v2349 = vand.u32 2147483647, %v2281
        %v2350 = vand.u32 2147483647, %v2284
        %v2351 = vsub.f32 0.0, %v2319
        %v2352 = vsub.f32 0.0, %v2320
        %v2353 = vsub.f32 0.0, %v2321
        %v2354 = vsub.f32 0.0, %v2322
        %v2355 = vsub.f32 0.0, %v2323
        %v2356 = vsub.f32 0.0, %v2324
        %v2357 = vsub.f32 0.0, %v2325
        %v2358 = vsub.f32 0.0, %v2326
        %v2359 = vsub.f32 0.0, %v2327
        %v2360 = vsub.f32 0.0, %v2328
        %v2361 = vsub.f32 0.0, %v2329
        %v2362 = vsub.f32 0.0, %v2330
        %v2363 = vsub.f32 0.0, %v2331
        %v2364 = vsub.f32 0.0, %v2332
        %v2365 = vsub.f32 0.0, %v2333
        %v2366 = vsub.f32 0.0, %v2334
        %v2367 = vsub.f32 0.0, %v2335
        %v2368 = vsub.f32 0.0, %v2336
        %v2369 = vsub.f32 0.0, %v2337
        %v2370 = vsub.f32 0.0, %v2338
        %v2371 = vsub.f32 0.0, %v2339
        %v2372 = vsub.f32 0.0, %v2340
        %v2373 = vsub.f32 0.0, %v2341
        %v2374 = vsub.f32 0.0, %v2342
        %v2375 = vsub.f32 0.0, %v2343
        %v2376 = vsub.f32 0.0, %v2344
        %v2377 = vsub.f32 0.0, %v2345
        %v2378 = vsub.f32 0.0, %v2346
        %v2379 = vsub.f32 0.0, %v2347
        %v2380 = vsub.f32 0.0, %v2348
        %v2381 = vsub.f32 0.0, %v2349
        %v2382 = vsub.f32 0.0, %v2350
        %v2383 = vmul.f32 %v2351, 1.442695
        %v2384 = vpow.pop %v2383
        %v2385 = vmul.f32 %v2352, 1.442695
        %v2386 = vpow.pop %v2385
        %v2387 = vmul.f32 %v2353, 1.442695
        %v2388 = vpow.pop %v2387
        %v2389 = vmul.f32 %v2354, 1.442695
        %v2390 = vpow.pop %v2389
        %v2391 = vmul.f32 %v2355, 1.442695
        %v2392 = vpow.pop %v2391
        %v2393 = vmul.f32 %v2356, 1.442695
        %v2394 = vpow.pop %v2393
        %v2395 = vmul.f32 %v2357, 1.442695
        %v2396 = vpow.pop %v2395
        %v2397 = vmul.f32 %v2358, 1.442695
        %v2398 = vpow.pop %v2397
        %v2399 = vmul.f32 %v2359, 1.442695
        %v2400 = vpow.pop %v2399
        %v2401 = vmul.f32 %v2360, 1.442695
        %v2402 = vpow.pop %v2401
        %v2403 = vmul.f32 %v2361, 1.442695
        %v2404 = vpow.pop %v2403
        %v2405 = vmul.f32 %v2362, 1.442695
        %v2406 = vpow.pop %v2405
        %v2407 = vmul.f32 %v2363, 1.442695
        %v2408 = vpow.pop %v2407
        %v2409 = vmul.f32 %v2364, 1.442695
        %v2410 = vpow.pop %v2409
        %v2411 = vmul.f32 %v2365, 1.442695
        %v2412 = vpow.pop %v2411
        %v2413 = vmul.f32 %v2366, 1.442695
        %v2414 = vpow.pop %v2413
        %v2415 = vmul.f32 %v2367, 1.442695
        %v2416 = vpow.pop %v2415
        %v2417 = vmul.f32 %v2368, 1.442695
        %v2418 = vpow.pop %v2417
        %v2419 = vmul.f32 %v2369, 1.442695
        %v2420 = vpow.pop %v2419
        %v2421 = vmul.f32 %v2370, 1.442695
        %v2422 = vpow.pop %v2421
        %v2423 = vmul.f32 %v2371, 1.442695
        %v2424 = vpow.pop %v2423
        %v2425 = vmul.f32 %v2372, 1.442695
        %v2426 = vpow.pop %v2425
        %v2427 = vmul.f32 %v2373, 1.442695
        %v2428 = vpow.pop %v2427
        %v2429 = vmul.f32 %v2374, 1.442695
        %v2430 = vpow.pop %v2429
        %v2431 = vmul.f32 %v2375, 1.442695
        %v2432 = vpow.pop %v2431
        %v2433 = vmul.f32 %v2376, 1.442695
        %v2434 = vpow.pop %v2433
        %v2435 = vmul.f32 %v2377, 1.442695
        %v2436 = vpow.pop %v2435
        %v2437 = vmul.f32 %v2378, 1.442695
        %v2438 = vpow.pop %v2437
        %v2439 = vmul.f32 %v2379, 1.442695
        %v2440 = vpow.pop %v2439
        %v2441 = vmul.f32 %v2380, 1.442695
        %v2442 = vpow.pop %v2441
        %v2443 = vmul.f32 %v2381, 1.442695
        %v2444 = vpow.pop %v2443
        %v2445 = vmul.f32 %v2382, 1.442695
        %v2446 = vpow.pop %v2445
        %v2447 = vadd.f32 %v2384, 1.0
        %v2448 = vadd.f32 %v2386, 1.0
        %v2449 = vadd.f32 %v2388, 1.0
        %v2450 = vadd.f32 %v2390, 1.0
        %v2451 = vadd.f32 %v2392, 1.0
        %v2452 = vadd.f32 %v2394, 1.0
        %v2453 = vadd.f32 %v2396, 1.0
        %v2454 = vadd.f32 %v2398, 1.0
        %v2455 = vadd.f32 %v2400, 1.0
        %v2456 = vadd.f32 %v2402, 1.0
        %v2457 = vadd.f32 %v2404, 1.0
        %v2458 = vadd.f32 %v2406, 1.0
        %v2459 = vadd.f32 %v2408, 1.0
        %v2460 = vadd.f32 %v2410, 1.0
        %v2461 = vadd.f32 %v2412, 1.0
        %v2462 = vadd.f32 %v2414, 1.0
        %v2463 = vadd.f32 %v2416, 1.0
        %v2464 = vadd.f32 %v2418, 1.0
        %v2465 = vadd.f32 %v2420, 1.0
        %v2466 = vadd.f32 %v2422, 1.0
        %v2467 = vadd.f32 %v2424, 1.0
        %v2468 = vadd.f32 %v2426, 1.0
        %v2469 = vadd.f32 %v2428, 1.0
        %v2470 = vadd.f32 %v2430, 1.0
        %v2471 = vadd.f32 %v2432, 1.0
        %v2472 = vadd.f32 %v2434, 1.0
        %v2473 = vadd.f32 %v2436, 1.0
        %v2474 = vadd.f32 %v2438, 1.0
        %v2475 = vadd.f32 %v2440, 1.0
        %v2476 = vadd.f32 %v2442, 1.0
        %v2477 = vadd.f32 %v2444, 1.0
        %v2478 = vadd.f32 %v2446, 1.0
        %v2479 = vlog2.pop %v2447
        %v2480 = vmul.f32 %v2479, 0.6931472
        %v2481 = vlog2.pop %v2448
        %v2482 = vmul.f32 %v2481, 0.6931472
        %v2483 = vlog2.pop %v2449
        %v2484 = vmul.f32 %v2483, 0.6931472
        %v2485 = vlog2.pop %v2450
        %v2486 = vmul.f32 %v2485, 0.6931472
        %v2487 = vlog2.pop %v2451
        %v2488 = vmul.f32 %v2487, 0.6931472
        %v2489 = vlog2.pop %v2452
        %v2490 = vmul.f32 %v2489, 0.6931472
        %v2491 = vlog2.pop %v2453
        %v2492 = vmul.f32 %v2491, 0.6931472
        %v2493 = vlog2.pop %v2454
        %v2494 = vmul.f32 %v2493, 0.6931472
        %v2495 = vlog2.pop %v2455
        %v2496 = vmul.f32 %v2495, 0.6931472
        %v2497 = vlog2.pop %v2456
        %v2498 = vmul.f32 %v2497, 0.6931472
        %v2499 = vlog2.pop %v2457
        %v2500 = vmul.f32 %v2499, 0.6931472
        %v2501 = vlog2.pop %v2458
        %v2502 = vmul.f32 %v2501, 0.6931472
        %v2503 = vlog2.pop %v2459
        %v2504 = vmul.f32 %v2503, 0.6931472
        %v2505 = vlog2.pop %v2460
        %v2506 = vmul.f32 %v2505, 0.6931472
        %v2507 = vlog2.pop %v2461
        %v2508 = vmul.f32 %v2507, 0.6931472
        %v2509 = vlog2.pop %v2462
        %v2510 = vmul.f32 %v2509, 0.6931472
        %v2511 = vlog2.pop %v2463
        %v2512 = vmul.f32 %v2511, 0.6931472
        %v2513 = vlog2.pop %v2464
        %v2514 = vmul.f32 %v2513, 0.6931472
        %v2515 = vlog2.pop %v2465
        %v2516 = vmul.f32 %v2515, 0.6931472
        %v2517 = vlog2.pop %v2466
        %v2518 = vmul.f32 %v2517, 0.6931472
        %v2519 = vlog2.pop %v2467
        %v2520 = vmul.f32 %v2519, 0.6931472
        %v2521 = vlog2.pop %v2468
        %v2522 = vmul.f32 %v2521, 0.6931472
        %v2523 = vlog2.pop %v2469
        %v2524 = vmul.f32 %v2523, 0.6931472
        %v2525 = vlog2.pop %v2470
        %v2526 = vmul.f32 %v2525, 0.6931472
        %v2527 = vlog2.pop %v2471
        %v2528 = vmul.f32 %v2527, 0.6931472
        %v2529 = vlog2.pop %v2472
        %v2530 = vmul.f32 %v2529, 0.6931472
        %v2531 = vlog2.pop %v2473
        %v2532 = vmul.f32 %v2531, 0.6931472
        %v2533 = vlog2.pop %v2474
        %v2534 = vmul.f32 %v2533, 0.6931472
        %v2535 = vlog2.pop %v2475
        %v2536 = vmul.f32 %v2535, 0.6931472
        %v2537 = vlog2.pop %v2476
        %v2538 = vmul.f32 %v2537, 0.6931472
        %v2539 = vlog2.pop %v2477
        %v2540 = vmul.f32 %v2539, 0.6931472
        %v2541 = vlog2.pop %v2478
        %v2542 = vmul.f32 %v2541, 0.6931472
        %v2543 = vadd.f32 %v2287, %v2480
        %v2544 = vadd.f32 %v2288, %v2482
        %v2545 = vadd.f32 %v2289, %v2484
        %v2546 = vadd.f32 %v2290, %v2486
        %v2547 = vadd.f32 %v2291, %v2488
        %v2548 = vadd.f32 %v2292, %v2490
        %v2549 = vadd.f32 %v2293, %v2492
        %v2550 = vadd.f32 %v2294, %v2494
        %v2551 = vadd.f32 %v2295, %v2496
        %v2552 = vadd.f32 %v2296, %v2498
        %v2553 = vadd.f32 %v2297, %v2500
        %v2554 = vadd.f32 %v2298, %v2502
        %v2555 = vadd.f32 %v2299, %v2504
        %v2556 = vadd.f32 %v2300, %v2506
        %v2557 = vadd.f32 %v2301, %v2508
        %v2558 = vadd.f32 %v2302, %v2510
        %v2559 = vadd.f32 %v2303, %v2512
        %v2560 = vadd.f32 %v2304, %v2514
        %v2561 = vadd.f32 %v2305, %v2516
        %v2562 = vadd.f32 %v2306, %v2518
        %v2563 = vadd.f32 %v2307, %v2520
        %v2564 = vadd.f32 %v2308, %v2522
        %v2565 = vadd.f32 %v2309, %v2524
        %v2566 = vadd.f32 %v2310, %v2526
        %v2567 = vadd.f32 %v2311, %v2528
        %v2568 = vadd.f32 %v2312, %v2530
        %v2569 = vadd.f32 %v2313, %v2532
        %v2570 = vadd.f32 %v2314, %v2534
        %v2571 = vadd.f32 %v2315, %v2536
        %v2572 = vadd.f32 %v2316, %v2538
        %v2573 = vadd.f32 %v2317, %v2540
        %v2574 = vadd.f32 %v2318, %v2542
        %2575 = vst.msk [vmem:[#allocation6] sm:$0xff] %vm916, %v2543
        %2576 = vst.msk [vmem:[#allocation6 + $0x8] sm:$0xff] %vm916, %v2544
        %2577 = vst.msk [vmem:[#allocation6 + $0x10] sm:$0xff] %vm916, %v2545
        %2578 = vst.msk [vmem:[#allocation6 + $0x18] sm:$0xff] %vm916, %v2546
        %2579 = vst.msk [vmem:[#allocation6 + $0x20] sm:$0xff] %vm916, %v2547
        %2580 = vst.msk [vmem:[#allocation6 + $0x28] sm:$0xff] %vm916, %v2548
        %2581 = vst.msk [vmem:[#allocation6 + $0x30] sm:$0xff] %vm916, %v2549
        %2582 = vst.msk [vmem:[#allocation6 + $0x38] sm:$0xff] %vm916, %v2550
        %2583 = vst.msk [vmem:[#allocation6 + $0x40] sm:$0xff] %vm916, %v2551
        %2584 = vst.msk [vmem:[#allocation6 + $0x48] sm:$0xff] %vm916, %v2552
        %2585 = vst.msk [vmem:[#allocation6 + $0x50] sm:$0xff] %vm916, %v2553
        %2586 = vst.msk [vmem:[#allocation6 + $0x58] sm:$0xff] %vm916, %v2554
        %2587 = vst.msk [vmem:[#allocation6 + $0x60] sm:$0xff] %vm916, %v2555
        %2588 = vst.msk [vmem:[#allocation6 + $0x68] sm:$0xff] %vm916, %v2556
        %2589 = vst.msk [vmem:[#allocation6 + $0x70] sm:$0xff] %vm916, %v2557
        %2590 = vst.msk [vmem:[#allocation6 + $0x78] sm:$0xff] %vm916, %v2558
        %2591 = vst.msk [vmem:[#allocation6 + $0x80] sm:$0xff] %vm916, %v2559
        %2592 = vst.msk [vmem:[#allocation6 + $0x88] sm:$0xff] %vm916, %v2560
        %2593 = vst.msk [vmem:[#allocation6 + $0x90] sm:$0xff] %vm916, %v2561
        %2594 = vst.msk [vmem:[#allocation6 + $0x98] sm:$0xff] %vm916, %v2562
        %2595 = vst.msk [vmem:[#allocation6 + $0xa0] sm:$0xff] %vm916, %v2563
        %2596 = vst.msk [vmem:[#allocation6 + $0xa8] sm:$0xff] %vm916, %v2564
        %2597 = vst.msk [vmem:[#allocation6 + $0xb0] sm:$0xff] %vm916, %v2565
        %2598 = vst.msk [vmem:[#allocation6 + $0xb8] sm:$0xff] %vm916, %v2566
        %2599 = vst.msk [vmem:[#allocation6 + $0xc0] sm:$0xff] %vm916, %v2567
        %2600 = vst.msk [vmem:[#allocation6 + $0xc8] sm:$0xff] %vm916, %v2568
        %2601 = vst.msk [vmem:[#allocation6 + $0xd0] sm:$0xff] %vm916, %v2569
        %2602 = vst.msk [vmem:[#allocation6 + $0xd8] sm:$0xff] %vm916, %v2570
        %2603 = vst.msk [vmem:[#allocation6 + $0xe0] sm:$0xff] %vm916, %v2571
        %2604 = vst.msk [vmem:[#allocation6 + $0xe8] sm:$0xff] %vm916, %v2572
        %2605 = vst.msk [vmem:[#allocation6 + $0xf0] sm:$0xff] %vm916, %v2573
        %2606 = vst.msk [vmem:[#allocation6 + $0xf8] sm:$0xff] %vm916, %v2574
        %v2607 = vld [vmem:[%s8] sm:$0xf]
        %v2609 = vsel %vm456, %v2607, 0
        %2611 = vmatprep.subr.bf16.mxu0 0
        %2612 = vmatpush1.bf16.msra.mxu0 %v2609
        %2613 = vmatprep.subr.bf16.mxu0 0
        %2614 = vmatpush1.bf16.msra.mxu0 0
        %2615 = vmatprep.subr.bf16.mxu0 0
        %2616 = vmatpush1.bf16.msra.mxu0 0
        %2617 = vmatprep.subr.bf16.mxu0 0
        %2618 = vmatpush1.bf16.msra.mxu0 0
        %2619 = vmatprep.subr.bf16.mxu0 0
        %2620 = vmatpush1.bf16.msra.mxu0 0
        %2621 = vmatprep.subr.bf16.mxu0 0
        %2622 = vmatpush1.bf16.msra.mxu0 0
        %2623 = vmatprep.subr.bf16.mxu0 0
        %2624 = vmatpush1.bf16.msra.mxu0 0
        %2625 = vmatprep.subr.bf16.mxu0 0
        %2626 = vmatpush1.bf16.msra.mxu0 0
        %2627 = vmatprep.subr.bf16.mxu0 0
        %2628 = vmatpush1.bf16.msra.mxu0 0
        %2629 = vmatprep.subr.bf16.mxu0 0
        %2630 = vmatpush1.bf16.msra.mxu0 0
        %2631 = vmatprep.subr.bf16.mxu0 0
        %2632 = vmatpush1.bf16.msra.mxu0 0
        %2633 = vmatprep.subr.bf16.mxu0 0
        %2634 = vmatpush1.bf16.msra.mxu0 0
        %2635 = vmatprep.subr.bf16.mxu0 0
        %2636 = vmatpush1.bf16.msra.mxu0 0
        %2637 = vmatprep.subr.bf16.mxu0 0
        %2638 = vmatpush1.bf16.msra.mxu0 0
        %2639 = vmatprep.subr.bf16.mxu0 0
        %2640 = vmatpush1.bf16.msra.mxu0 0
        %2641 = vmatprep.subr.bf16.mxu0 0
        %2642 = vmatpush1.bf16.msra.mxu0 0
        %2643 = vmatprep.mubr.bf16.mxu0 0
        %2644 = vmatmul.mubr.bf16.gmra.mrb[0].mxu0 %v2076
        %v2645 = vpop.f32.mrb[0].mxu0
        %v2646 = vadd.f32 0.0, %v2645
        %v2647 = vpop.f32.mrb[0].mxu0
        %v2648 = vpop.f32.mrb[0].mxu0
        %v2649 = vadd.f32 0.0, %v2648
        %v2650 = vpop.f32.mrb[0].mxu0
        %2651 = vmatprep.mubr.bf16.mxu0 0
        %2652 = vmatmul.mubr.bf16.gmra.mrb[0].mxu0 %v2079
        %v2653 = vpop.f32.mrb[0].mxu0
        %v2654 = vadd.f32 0.0, %v2653
        %v2655 = vpop.f32.mrb[0].mxu0
        %v2656 = vpop.f32.mrb[0].mxu0
        %v2657 = vadd.f32 0.0, %v2656
        %v2658 = vpop.f32.mrb[0].mxu0
        %2659 = vmatprep.mubr.bf16.mxu0 0
        %2660 = vmatmul.mubr.bf16.gmra.mrb[0].mxu0 %v2082
        %v2661 = vpop.f32.mrb[0].mxu0
        %v2662 = vadd.f32 0.0, %v2661
        %v2663 = vpop.f32.mrb[0].mxu0
        %v2664 = vpop.f32.mrb[0].mxu0
        %v2665 = vadd.f32 0.0, %v2664
        %v2666 = vpop.f32.mrb[0].mxu0
        %2667 = vmatprep.mubr.bf16.mxu0 0
        %2668 = vmatmul.mubr.bf16.gmra.mrb[0].mxu0 %v2085
        %v2669 = vpop.f32.mrb[0].mxu0
        %v2670 = vadd.f32 0.0, %v2669
        %v2671 = vpop.f32.mrb[0].mxu0
        %v2672 = vpop.f32.mrb[0].mxu0
        %v2673 = vadd.f32 0.0, %v2672
        %v2674 = vpop.f32.mrb[0].mxu0
        %2675 = vmatprep.mubr.bf16.mxu0 0
        %2676 = vmatmul.mubr.bf16.gmra.mrb[0].mxu0 %v2088
        %v2677 = vpop.f32.mrb[0].mxu0
        %v2678 = vadd.f32 0.0, %v2677
        %v2679 = vpop.f32.mrb[0].mxu0
        %v2680 = vpop.f32.mrb[0].mxu0
        %v2681 = vadd.f32 0.0, %v2680
        %v2682 = vpop.f32.mrb[0].mxu0
        %2683 = vmatprep.mubr.bf16.mxu0 0
        %2684 = vmatmul.mubr.bf16.gmra.mrb[0].mxu0 %v2091
        %v2685 = vpop.f32.mrb[0].mxu0
        %v2686 = vadd.f32 0.0, %v2685
        %v2687 = vpop.f32.mrb[0].mxu0
        %v2688 = vpop.f32.mrb[0].mxu0
        %v2689 = vadd.f32 0.0, %v2688
        %v2690 = vpop.f32.mrb[0].mxu0
        %2691 = vmatprep.mubr.bf16.mxu0 0
        %2692 = vmatmul.mubr.bf16.gmra.mrb[0].mxu0 %v2094
        %v2693 = vpop.f32.mrb[0].mxu0
        %v2694 = vadd.f32 0.0, %v2693
        %v2695 = vpop.f32.mrb[0].mxu0
        %v2696 = vpop.f32.mrb[0].mxu0
        %v2697 = vadd.f32 0.0, %v2696
        %v2698 = vpop.f32.mrb[0].mxu0
        %2699 = vmatprep.mubr.bf16.mxu0 0
        %2700 = vmatmul.mubr.bf16.gmra.mrb[0].mxu0 %v2097
        %v2701 = vpop.f32.mrb[0].mxu0
        %v2702 = vadd.f32 0.0, %v2701
        %v2703 = vpop.f32.mrb[0].mxu0
        %v2704 = vpop.f32.mrb[0].mxu0
        %v2705 = vadd.f32 0.0, %v2704
        %v2706 = vpop.f32.mrb[0].mxu0
        %2707 = vmatprep.mubr.bf16.mxu0 0
        %2708 = vmatmul.mubr.bf16.gmra.mrb[0].mxu0 %v2100
        %v2709 = vpop.f32.mrb[0].mxu0
        %v2710 = vadd.f32 0.0, %v2709
        %v2711 = vpop.f32.mrb[0].mxu0
        %v2712 = vpop.f32.mrb[0].mxu0
        %v2713 = vadd.f32 0.0, %v2712
        %v2714 = vpop.f32.mrb[0].mxu0
        %2715 = vmatprep.mubr.bf16.mxu0 0
        %2716 = vmatmul.mubr.bf16.gmra.mrb[0].mxu0 %v2103
        %v2717 = vpop.f32.mrb[0].mxu0
        %v2718 = vadd.f32 0.0, %v2717
        %v2719 = vpop.f32.mrb[0].mxu0
        %v2720 = vpop.f32.mrb[0].mxu0
        %v2721 = vadd.f32 0.0, %v2720
        %v2722 = vpop.f32.mrb[0].mxu0
        %2723 = vmatprep.mubr.bf16.mxu0 0
        %2724 = vmatmul.mubr.bf16.gmra.mrb[0].mxu0 %v2106
        %v2725 = vpop.f32.mrb[0].mxu0
        %v2726 = vadd.f32 0.0, %v2725
        %v2727 = vpop.f32.mrb[0].mxu0
        %v2728 = vpop.f32.mrb[0].mxu0
        %v2729 = vadd.f32 0.0, %v2728
        %v2730 = vpop.f32.mrb[0].mxu0
        %2731 = vmatprep.mubr.bf16.mxu0 0
        %2732 = vmatmul.mubr.bf16.gmra.mrb[0].mxu0 %v2109
        %v2733 = vpop.f32.mrb[0].mxu0
        %v2734 = vadd.f32 0.0, %v2733
        %v2735 = vpop.f32.mrb[0].mxu0
        %v2736 = vpop.f32.mrb[0].mxu0
        %v2737 = vadd.f32 0.0, %v2736
        %v2738 = vpop.f32.mrb[0].mxu0
        %2739 = vmatprep.mubr.bf16.mxu0 0
        %2740 = vmatmul.mubr.bf16.gmra.mrb[0].mxu0 %v2112
        %v2741 = vpop.f32.mrb[0].mxu0
        %v2742 = vadd.f32 0.0, %v2741
        %v2743 = vpop.f32.mrb[0].mxu0
        %v2744 = vpop.f32.mrb[0].mxu0
        %v2745 = vadd.f32 0.0, %v2744
        %v2746 = vpop.f32.mrb[0].mxu0
        %2747 = vmatprep.mubr.bf16.mxu0 0
        %2748 = vmatmul.mubr.bf16.gmra.mrb[0].mxu0 %v2115
        %v2749 = vpop.f32.mrb[0].mxu0
        %v2750 = vadd.f32 0.0, %v2749
        %v2751 = vpop.f32.mrb[0].mxu0
        %v2752 = vpop.f32.mrb[0].mxu0
        %v2753 = vadd.f32 0.0, %v2752
        %v2754 = vpop.f32.mrb[0].mxu0
        %2755 = vmatprep.mubr.bf16.mxu0 0
        %2756 = vmatmul.mubr.bf16.gmra.mrb[0].mxu0 %v2118
        %v2757 = vpop.f32.mrb[0].mxu0
        %v2758 = vadd.f32 0.0, %v2757
        %v2759 = vpop.f32.mrb[0].mxu0
        %v2760 = vpop.f32.mrb[0].mxu0
        %v2761 = vadd.f32 0.0, %v2760
        %v2762 = vpop.f32.mrb[0].mxu0
        %2763 = vmatprep.mubr.bf16.mxu0 0
        %2764 = vmatmul.mubr.bf16.gmra.mrb[0].mxu0 %v2121
        %v2765 = vpop.f32.mrb[0].mxu0
        %v2766 = vadd.f32 0.0, %v2765
        %v2767 = vpop.f32.mrb[0].mxu0
        %v2768 = vpop.f32.mrb[0].mxu0
        %v2769 = vadd.f32 0.0, %v2768
        %v2770 = vpop.f32.mrb[0].mxu0
        %2771 = vdwg.mxu0
        %vm2772 = vcmask 261120
        %2773 = vst.msk [vmem:[#allocation7] sm:$0xff] %vm2772, %v2646
        %2774 = vst.msk [vmem:[#allocation7 + $0x8] sm:$0xff] %vm2772, %v2649
        %2775 = vst.msk [vmem:[#allocation7 + $0x10] sm:$0xff] %vm2772, %v2654
        %2776 = vst.msk [vmem:[#allocation7 + $0x18] sm:$0xff] %vm2772, %v2657
        %2777 = vst.msk [vmem:[#allocation7 + $0x20] sm:$0xff] %vm2772, %v2662
        %2778 = vst.msk [vmem:[#allocation7 + $0x28] sm:$0xff] %vm2772, %v2665
        %2779 = vst.msk [vmem:[#allocation7 + $0x30] sm:$0xff] %vm2772, %v2670
        %2780 = vst.msk [vmem:[#allocation7 + $0x38] sm:$0xff] %vm2772, %v2673
        %2781 = vst.msk [vmem:[#allocation7 + $0x40] sm:$0xff] %vm2772, %v2678
        %2782 = vst.msk [vmem:[#allocation7 + $0x48] sm:$0xff] %vm2772, %v2681
        %2783 = vst.msk [vmem:[#allocation7 + $0x50] sm:$0xff] %vm2772, %v2686
        %2784 = vst.msk [vmem:[#allocation7 + $0x58] sm:$0xff] %vm2772, %v2689
        %2785 = vst.msk [vmem:[#allocation7 + $0x60] sm:$0xff] %vm2772, %v2694
        %2786 = vst.msk [vmem:[#allocation7 + $0x68] sm:$0xff] %vm2772, %v2697
        %2787 = vst.msk [vmem:[#allocation7 + $0x70] sm:$0xff] %vm2772, %v2702
        %2788 = vst.msk [vmem:[#allocation7 + $0x78] sm:$0xff] %vm2772, %v2705
        %2789 = vst.msk [vmem:[#allocation7 + $0x80] sm:$0xff] %vm2772, %v2710
        %2790 = vst.msk [vmem:[#allocation7 + $0x88] sm:$0xff] %vm2772, %v2713
        %2791 = vst.msk [vmem:[#allocation7 + $0x90] sm:$0xff] %vm2772, %v2718
        %2792 = vst.msk [vmem:[#allocation7 + $0x98] sm:$0xff] %vm2772, %v2721
        %2793 = vst.msk [vmem:[#allocation7 + $0xa0] sm:$0xff] %vm2772, %v2726
        %2794 = vst.msk [vmem:[#allocation7 + $0xa8] sm:$0xff] %vm2772, %v2729
        %2795 = vst.msk [vmem:[#allocation7 + $0xb0] sm:$0xff] %vm2772, %v2734
        %2796 = vst.msk [vmem:[#allocation7 + $0xb8] sm:$0xff] %vm2772, %v2737
        %2797 = vst.msk [vmem:[#allocation7 + $0xc0] sm:$0xff] %vm2772, %v2742
        %2798 = vst.msk [vmem:[#allocation7 + $0xc8] sm:$0xff] %vm2772, %v2745
        %2799 = vst.msk [vmem:[#allocation7 + $0xd0] sm:$0xff] %vm2772, %v2750
        %2800 = vst.msk [vmem:[#allocation7 + $0xd8] sm:$0xff] %vm2772, %v2753
        %2801 = vst.msk [vmem:[#allocation7 + $0xe0] sm:$0xff] %vm2772, %v2758
        %2802 = vst.msk [vmem:[#allocation7 + $0xe8] sm:$0xff] %vm2772, %v2761
        %2803 = vst.msk [vmem:[#allocation7 + $0xf0] sm:$0xff] %vm2772, %v2766
        %2804 = vst.msk [vmem:[#allocation7 + $0xf8] sm:$0xff] %vm2772, %v2769
        %v2805 = vld [vmem:[%s9] sm:$0xff]
        %v2806 = vld [vmem:[%s9 + $0x8] sm:$0xff]
        %v2807 = vmul.f32 %v2805, 1.442695
        %v2808 = vpow.pop %v2807
        %v2809 = vmul.f32 %v2806, 1.442695
        %v2810 = vpow.pop %v2809
        %v2811 = vsub.f32 0.0, %v2808
        %v2812 = vsub.f32 0.0, %v2810
        %v2813 = vlaneseq
        %v2814 = vshrl.u32 %v2813, 7
        %v2815 = vlaneseq
        %v2816 = vand.u32 %v2815, 127
        %vm2817 = vcmp.eq.s32.totalorder %v2814, %v2816
        %v2818 = vsel %vm2817, 1.0, 0.0
        %v2819 = vld [vmem:[#allocation2] sm:$0xff]
        %v2820 = vld [vmem:[#allocation2 + $0x8] sm:$0xff]
        loop: start=0, step=1, limit=32
        $region73: #{tpu_custom_call.1} parent=67 // loop_pre_header
          _
        $region74: #{tpu_custom_call.1} parent=67 // loop_header
          %s2822 = sphi 0, %s2826
          %p2823 = scmp.ge.s32.totalorder %s2822, 32
          %v2827 = vphi %v2819, %v3325
          %v2828 = vphi %v2820, %v3326
        $region75: #{tpu_custom_call.1} parent=67 // loop_header_branch
          %2825 = sbr.rel (%p2823) target = $region79
        $region76: #{tpu_custom_call.1} parent=67 // loop_body
          %s2829 = smul.u32 %s2822, 8
          %s2830 = scalar_lea.vmem [#allocation6], %s2829
          %v2831 = vld [vmem:[%s2830] sm:$0xff]
          %s2832 = scalar_lea.vmem [#allocation4], %s2829
          %v2833 = vld [vmem:[%s2832] sm:$0xff]
          %v2834 = vmul.f32 %v2831, %v2833
          %s2835 = scalar_lea.vmem [#allocation7], %s2829
          %v2836 = vld [vmem:[%s2835] sm:$0xff]
          %2837 = vxpose.xlu0.b32.start [1/16] %v2836, 128
          %2838 = vxpose.xlu0.b32.cont [2/16] 0.0, 128
          %2839 = vxpose.xlu0.b32.cont [3/16] 0.0, 128
          %2840 = vxpose.xlu0.b32.cont [4/16] 0.0, 128
          %2841 = vxpose.xlu0.b32.cont [5/16] 0.0, 128
          %2842 = vxpose.xlu0.b32.cont [6/16] 0.0, 128
          %2843 = vxpose.xlu0.b32.cont [7/16] 0.0, 128
          %2844 = vxpose.xlu0.b32.cont [8/16] 0.0, 128
          %2845 = vxpose.xlu0.b32.cont [9/16] 0.0, 128
          %2846 = vxpose.xlu0.b32.cont [10/16] 0.0, 128
          %2847 = vxpose.xlu0.b32.cont [11/16] 0.0, 128
          %2848 = vxpose.xlu0.b32.cont [12/16] 0.0, 128
          %2849 = vxpose.xlu0.b32.cont [13/16] 0.0, 128
          %2850 = vxpose.xlu0.b32.cont [14/16] 0.0, 128
          %2851 = vxpose.xlu0.b32.cont [15/16] 0.0, 128
          %2852 = vxpose.xlu0.b32.end [16/16] 0.0, 128
          %v2853 = vpop.trf.xlu0
          %v2854 = vpop.trf.xlu0
          %v2855 = vpop.trf.xlu0
          %v2856 = vpop.trf.xlu0
          %v2857 = vpop.trf.xlu0
          %v2858 = vpop.trf.xlu0
          %v2859 = vpop.trf.xlu0
          %v2860 = vpop.trf.xlu0
          %v2861 = vpop.trf.xlu0
          %v2862 = vpop.trf.xlu0
          %v2863 = vpop.trf.xlu0
          %v2864 = vpop.trf.xlu0
          %v2865 = vpop.trf.xlu0
          %v2866 = vpop.trf.xlu0
          %v2867 = vpop.trf.xlu0
          %v2868 = vpop.trf.xlu0
          %v2870 = vsel %vm916, %v2853, 0
          %v2873 = vsel %vm916, %v2854, 0
          %v2876 = vsel %vm916, %v2855, 0
          %v2879 = vsel %vm916, %v2856, 0
          %2881 = vmatprep.subr.mxu0 0.0
          %2882 = vmatpush1.msra.mxu0 %v2818
          %2883 = vmatprep.subr.mxu0 0.0
          %2884 = vmatpush1.msra.mxu0 0.0
          %2885 = vmatprep.subr.mxu0 0.0
          %2886 = vmatpush1.msra.mxu0 0.0
          %2887 = vmatprep.subr.mxu0 0.0
          %2888 = vmatpush1.msra.mxu0 0.0
          %2889 = vmatprep.subr.mxu0 0.0
          %2890 = vmatpush1.msra.mxu0 0.0
          %2891 = vmatprep.subr.mxu0 0.0
          %2892 = vmatpush1.msra.mxu0 0.0
          %2893 = vmatprep.subr.mxu0 0.0
          %2894 = vmatpush1.msra.mxu0 0.0
          %2895 = vmatprep.subr.mxu0 0.0
          %2896 = vmatpush1.msra.mxu0 0.0
          %2897 = vmatprep.subr.mxu0 0.0
          %2898 = vmatpush1.msra.mxu0 0.0
          %2899 = vmatprep.subr.mxu0 0.0
          %2900 = vmatpush1.msra.mxu0 0.0
          %2901 = vmatprep.subr.mxu0 0.0
          %2902 = vmatpush1.msra.mxu0 0.0
          %2903 = vmatprep.subr.mxu0 0.0
          %2904 = vmatpush1.msra.mxu0 0.0
          %2905 = vmatprep.subr.mxu0 0.0
          %2906 = vmatpush1.msra.mxu0 0.0
          %2907 = vmatprep.subr.mxu0 0.0
          %2908 = vmatpush1.msra.mxu0 0.0
          %2909 = vmatprep.subr.mxu0 0.0
          %2910 = vmatpush1.msra.mxu0 0.0
          %2911 = vmatprep.subr.mxu0 0.0
          %2912 = vmatpush1.msra.mxu0 0.0
          %2913 = vmatprep.subr.mxu0 0.0
          %2914 = vmatpush1.msra.mxu0 0.0
          %2915 = vmatprep.subr.mxu0 0.0
          %2916 = vmatpush1.msra.mxu0 0.0
          %2917 = vmatprep.subr.mxu0 0.0
          %2918 = vmatpush1.msra.mxu0 0.0
          %2919 = vmatprep.subr.mxu0 0.0
          %2920 = vmatpush1.msra.mxu0 0.0
          %2921 = vmatprep.subr.mxu0 0.0
          %2922 = vmatpush1.msra.mxu0 0.0
          %2923 = vmatprep.subr.mxu0 0.0
          %2924 = vmatpush1.msra.mxu0 0.0
          %2925 = vmatprep.subr.mxu0 0.0
          %2926 = vmatpush1.msra.mxu0 0.0
          %2927 = vmatprep.subr.mxu0 0.0
          %2928 = vmatpush1.msra.mxu0 0.0
          %2929 = vmatprep.subr.mxu0 0.0
          %2930 = vmatpush1.msra.mxu0 0.0
          %2931 = vmatprep.subr.mxu0 0.0
          %2932 = vmatpush1.msra.mxu0 0.0
          %2933 = vmatprep.subr.mxu0 0.0
          %2934 = vmatpush1.msra.mxu0 0.0
          %2935 = vmatprep.subr.mxu0 0.0
          %2936 = vmatpush1.msra.mxu0 0.0
          %2937 = vmatprep.subr.mxu0 0.0
          %2938 = vmatpush1.msra.mxu0 0.0
          %2939 = vmatprep.subr.mxu0 0.0
          %2940 = vmatpush1.msra.mxu0 0.0
          %2941 = vmatprep.subr.mxu0 0.0
          %2942 = vmatpush1.msra.mxu0 0.0
          %2943 = vmatprep.subr.mxu0 0.0
          %2944 = vmatpush1.msra.mxu0 0.0
          %2945 = vmatprep.mubr.f32.mxu0 0.0
          %2946 = vmatmul.mubr.f32.gmra.mrb[0].mxu0 %v2870
          %v2947 = vpop.f32.mrb[0].mxu0
          %v2948 = vadd.f32 0.0, %v2947
          %v2949 = vpop.f32.mrb[0].mxu0
          %2950 = vmatprep.mubr.f32.mxu0 0.0
          %2951 = vmatmul.mubr.f32.gmra.mrb[0].mxu0 %v2873
          %v2952 = vpop.f32.mrb[0].mxu0
          %v2953 = vadd.f32 0.0, %v2952
          %v2954 = vpop.f32.mrb[0].mxu0
          %2955 = vmatprep.mubr.f32.mxu0 0.0
          %2956 = vmatmul.mubr.f32.gmra.mrb[0].mxu0 %v2876
          %v2957 = vpop.f32.mrb[0].mxu0
          %v2958 = vadd.f32 0.0, %v2957
          %v2959 = vpop.f32.mrb[0].mxu0
          %2960 = vmatprep.mubr.f32.mxu0 0.0
          %2961 = vmatmul.mubr.f32.gmra.mrb[0].mxu0 %v2879
          %v2962 = vpop.f32.mrb[0].mxu0
          %v2963 = vadd.f32 0.0, %v2962
          %v2964 = vpop.f32.mrb[0].mxu0
          %2965 = vdwg.mxu0
          %v2966 = vlaneseq
          %v2967 = vshrl.u32 %v2966, 7
          %v2968 = vsub.s32 0, %v2967
          %v2969 = vrot.slane %v2831, %v2968
          %v2970 = vmul.f32 %v2969, %v2811
          %v2971 = vmul.f32 %v2969, %v2812
          %v2972 = vmul.f32 %v2970, 1.442695
          %v2973 = vpow.pop %v2972
          %v2974 = vmul.f32 %v2971, 1.442695
          %v2975 = vpow.pop %v2974
          %v2976 = vmul.f32 %v2973, %v2827
          %v2977 = vmul.f32 %v2975, %v2828
          %2979 = vset.pattern.permute.xlu0 0
          %2980 = vperm.xlu0 %2979, %v2948
          %v2981 = vpop.permute.xlu0 %2980
          %2984 = vset.pattern.permute.xlu0 0
          %2985 = vperm.xlu0 %2984, %v2953
          %v2986 = vpop.permute.xlu0 %2985
          %v2988 = vlaneseq
          %v2989 = vshrl.u32 %v2988, 7
          %v2990 = vsub.s32 0, %v2989
          %v2991 = vrot.slane %v2834, %v2990
          %v2992 = vmul.f32 %v2981, %v2991
          %v2993 = vmul.f32 %v2986, %v2991
          %v2994 = vadd.f32 %v2976, %v2992
          %v2995 = vadd.f32 %v2977, %v2993
          %2997 = vset.pattern.permute.xlu0 0
          %2998 = vperm.xlu0 %2997, %v2958
          %v2999 = vpop.permute.xlu0 %2998
          %3002 = vset.pattern.permute.xlu0 0
          %3003 = vperm.xlu0 %3002, %v2963
          %v3004 = vpop.permute.xlu0 %3003
          %v3006 = vmul.f32 %v2999, %v2994
          %v3007 = vmul.f32 %v3004, %v2995
          %v3008 = vsel %vm916, %v3006, 0.0
          %v3009 = vsel %vm916, %v3007, 0.0
          %v3010 = vadd.f32 %v3008, %v3009
          %v3011 = vrot.slane %v3010, 4
          %v3012 = vadd.f32 %v3010, %v3011
          %v3013 = vrot.slane %v3012, 2
          %v3014 = vadd.f32 %v3012, %v3013
          %v3015 = vrot.slane %v3014, 1
          %v3016 = vadd.f32 %v3014, %v3015
          %v3017 = vlaneseq
          %v3018 = vshrl.u32 %v3017, 7
          %v3019 = vsub.s32 1, %v3018
          %v3020 = vrot.slane %v2831, %v3019
          %v3021 = vmul.f32 %v3020, %v2811
          %v3022 = vmul.f32 %v3020, %v2812
          %v3023 = vmul.f32 %v3021, 1.442695
          %v3024 = vpow.pop %v3023
          %v3025 = vmul.f32 %v3022, 1.442695
          %v3026 = vpow.pop %v3025
          %v3027 = vmul.f32 %v3024, %v2994
          %v3028 = vmul.f32 %v3026, %v2995
          %3029 = vset.pattern.permute.xlu0 1
          %3030 = vperm.xlu0 %3029, %v2948
          %v3031 = vpop.permute.xlu0 %3030
          %3033 = vset.pattern.permute.xlu0 1
          %3034 = vperm.xlu0 %3033, %v2953
          %v3035 = vpop.permute.xlu0 %3034
          %v3037 = vlaneseq
          %v3038 = vshrl.u32 %v3037, 7
          %v3039 = vsub.s32 1, %v3038
          %v3040 = vrot.slane %v2834, %v3039
          %v3041 = vmul.f32 %v3031, %v3040
          %v3042 = vmul.f32 %v3035, %v3040
          %v3043 = vadd.f32 %v3027, %v3041
          %v3044 = vadd.f32 %v3028, %v3042
          %3045 = vset.pattern.permute.xlu0 1
          %3046 = vperm.xlu0 %3045, %v2958
          %v3047 = vpop.permute.xlu0 %3046
          %3049 = vset.pattern.permute.xlu0 1
          %3050 = vperm.xlu0 %3049, %v2963
          %v3051 = vpop.permute.xlu0 %3050
          %v3053 = vmul.f32 %v3047, %v3043
          %v3054 = vmul.f32 %v3051, %v3044
          %v3055 = vsel %vm916, %v3053, 0.0
          %v3056 = vsel %vm916, %v3054, 0.0
          %v3057 = vadd.f32 %v3055, %v3056
          %v3058 = vrot.slane %v3057, 4
          %v3059 = vadd.f32 %v3057, %v3058
          %v3060 = vrot.slane %v3059, 2
          %v3061 = vadd.f32 %v3059, %v3060
          %v3062 = vrot.slane %v3061, 1
          %v3063 = vadd.f32 %v3061, %v3062
          %v3064 = vlaneseq
          %v3065 = vshrl.u32 %v3064, 7
          %v3066 = vsub.s32 2, %v3065
          %v3067 = vrot.slane %v2831, %v3066
          %v3068 = vmul.f32 %v3067, %v2811
          %v3069 = vmul.f32 %v3067, %v2812
          %v3070 = vmul.f32 %v3068, 1.442695
          %v3071 = vpow.pop %v3070
          %v3072 = vmul.f32 %v3069, 1.442695
          %v3073 = vpow.pop %v3072
          %v3074 = vmul.f32 %v3071, %v3043
          %v3075 = vmul.f32 %v3073, %v3044
          %3076 = vset.pattern.permute.xlu0 2
          %3077 = vperm.xlu0 %3076, %v2948
          %v3078 = vpop.permute.xlu0 %3077
          %3080 = vset.pattern.permute.xlu0 2
          %3081 = vperm.xlu0 %3080, %v2953
          %v3082 = vpop.permute.xlu0 %3081
          %v3084 = vlaneseq
          %v3085 = vshrl.u32 %v3084, 7
          %v3086 = vsub.s32 2, %v3085
          %v3087 = vrot.slane %v2834, %v3086
          %v3088 = vmul.f32 %v3078, %v3087
          %v3089 = vmul.f32 %v3082, %v3087
          %v3090 = vadd.f32 %v3074, %v3088
          %v3091 = vadd.f32 %v3075, %v3089
          %3092 = vset.pattern.permute.xlu0 2
          %3093 = vperm.xlu0 %3092, %v2958
          %v3094 = vpop.permute.xlu0 %3093
          %3096 = vset.pattern.permute.xlu0 2
          %3097 = vperm.xlu0 %3096, %v2963
          %v3098 = vpop.permute.xlu0 %3097
          %v3100 = vmul.f32 %v3094, %v3090
          %v3101 = vmul.f32 %v3098, %v3091
          %v3102 = vsel %vm916, %v3100, 0.0
          %v3103 = vsel %vm916, %v3101, 0.0
          %v3104 = vadd.f32 %v3102, %v3103
          %v3105 = vrot.slane %v3104, 4
          %v3106 = vadd.f32 %v3104, %v3105
          %v3107 = vrot.slane %v3106, 2
          %v3108 = vadd.f32 %v3106, %v3107
          %v3109 = vrot.slane %v3108, 1
          %v3110 = vadd.f32 %v3108, %v3109
          %v3111 = vlaneseq
          %v3112 = vshrl.u32 %v3111, 7
          %v3113 = vsub.s32 3, %v3112
          %v3114 = vrot.slane %v2831, %v3113
          %v3115 = vmul.f32 %v3114, %v2811
          %v3116 = vmul.f32 %v3114, %v2812
          %v3117 = vmul.f32 %v3115, 1.442695
          %v3118 = vpow.pop %v3117
          %v3119 = vmul.f32 %v3116, 1.442695
          %v3120 = vpow.pop %v3119
          %v3121 = vmul.f32 %v3118, %v3090
          %v3122 = vmul.f32 %v3120, %v3091
          %3123 = vset.pattern.permute.xlu0 3
          %3124 = vperm.xlu0 %3123, %v2948
          %v3125 = vpop.permute.xlu0 %3124
          %3127 = vset.pattern.permute.xlu0 3
          %3128 = vperm.xlu0 %3127, %v2953
          %v3129 = vpop.permute.xlu0 %3128
          %v3131 = vlaneseq
          %v3132 = vshrl.u32 %v3131, 7
          %v3133 = vsub.s32 3, %v3132
          %v3134 = vrot.slane %v2834, %v3133
          %v3135 = vmul.f32 %v3125, %v3134
          %v3136 = vmul.f32 %v3129, %v3134
          %v3137 = vadd.f32 %v3121, %v3135
          %v3138 = vadd.f32 %v3122, %v3136
          %3139 = vset.pattern.permute.xlu0 3
          %3140 = vperm.xlu0 %3139, %v2958
          %v3141 = vpop.permute.xlu0 %3140
          %3143 = vset.pattern.permute.xlu0 3
          %3144 = vperm.xlu0 %3143, %v2963
          %v3145 = vpop.permute.xlu0 %3144
          %v3147 = vmul.f32 %v3141, %v3137
          %v3148 = vmul.f32 %v3145, %v3138
          %v3149 = vsel %vm916, %v3147, 0.0
          %v3150 = vsel %vm916, %v3148, 0.0
          %v3151 = vadd.f32 %v3149, %v3150
          %v3152 = vrot.slane %v3151, 4
          %v3153 = vadd.f32 %v3151, %v3152
          %v3154 = vrot.slane %v3153, 2
          %v3155 = vadd.f32 %v3153, %v3154
          %v3156 = vrot.slane %v3155, 1
          %v3157 = vadd.f32 %v3155, %v3156
          %v3158 = vlaneseq
          %v3159 = vshrl.u32 %v3158, 7
          %v3160 = vsub.s32 4, %v3159
          %v3161 = vrot.slane %v2831, %v3160
          %v3162 = vmul.f32 %v3161, %v2811
          %v3163 = vmul.f32 %v3161, %v2812
          %v3164 = vmul.f32 %v3162, 1.442695
          %v3165 = vpow.pop %v3164
          %v3166 = vmul.f32 %v3163, 1.442695
          %v3167 = vpow.pop %v3166
          %v3168 = vmul.f32 %v3165, %v3137
          %v3169 = vmul.f32 %v3167, %v3138
          %3170 = vset.pattern.permute.xlu0 4
          %3171 = vperm.xlu0 %3170, %v2948
          %v3172 = vpop.permute.xlu0 %3171
          %3174 = vset.pattern.permute.xlu0 4
          %3175 = vperm.xlu0 %3174, %v2953
          %v3176 = vpop.permute.xlu0 %3175
          %v3178 = vlaneseq
          %v3179 = vshrl.u32 %v3178, 7
          %v3180 = vsub.s32 4, %v3179
          %v3181 = vrot.slane %v2834, %v3180
          %v3182 = vmul.f32 %v3172, %v3181
          %v3183 = vmul.f32 %v3176, %v3181
          %v3184 = vadd.f32 %v3168, %v3182
          %v3185 = vadd.f32 %v3169, %v3183
          %3186 = vset.pattern.permute.xlu0 4
          %3187 = vperm.xlu0 %3186, %v2958
          %v3188 = vpop.permute.xlu0 %3187
          %3190 = vset.pattern.permute.xlu0 4
          %3191 = vperm.xlu0 %3190, %v2963
          %v3192 = vpop.permute.xlu0 %3191
          %v3194 = vmul.f32 %v3188, %v3184
          %v3195 = vmul.f32 %v3192, %v3185
          %v3196 = vsel %vm916, %v3194, 0.0
          %v3197 = vsel %vm916, %v3195, 0.0
          %v3198 = vadd.f32 %v3196, %v3197
          %v3199 = vrot.slane %v3198, 4
          %v3200 = vadd.f32 %v3198, %v3199
          %v3201 = vrot.slane %v3200, 2
          %v3202 = vadd.f32 %v3200, %v3201
          %v3203 = vrot.slane %v3202, 1
          %v3204 = vadd.f32 %v3202, %v3203
          %v3205 = vlaneseq
          %v3206 = vshrl.u32 %v3205, 7
          %v3207 = vsub.s32 5, %v3206
          %v3208 = vrot.slane %v2831, %v3207
          %v3209 = vmul.f32 %v3208, %v2811
          %v3210 = vmul.f32 %v3208, %v2812
          %v3211 = vmul.f32 %v3209, 1.442695
          %v3212 = vpow.pop %v3211
          %v3213 = vmul.f32 %v3210, 1.442695
          %v3214 = vpow.pop %v3213
          %v3215 = vmul.f32 %v3212, %v3184
          %v3216 = vmul.f32 %v3214, %v3185
          %3217 = vset.pattern.permute.xlu0 5
          %3218 = vperm.xlu0 %3217, %v2948
          %v3219 = vpop.permute.xlu0 %3218
          %3221 = vset.pattern.permute.xlu0 5
          %3222 = vperm.xlu0 %3221, %v2953
          %v3223 = vpop.permute.xlu0 %3222
          %v3225 = vlaneseq
          %v3226 = vshrl.u32 %v3225, 7
          %v3227 = vsub.s32 5, %v3226
          %v3228 = vrot.slane %v2834, %v3227
          %v3229 = vmul.f32 %v3219, %v3228
          %v3230 = vmul.f32 %v3223, %v3228
          %v3231 = vadd.f32 %v3215, %v3229
          %v3232 = vadd.f32 %v3216, %v3230
          %3233 = vset.pattern.permute.xlu0 5
          %3234 = vperm.xlu0 %3233, %v2958
          %v3235 = vpop.permute.xlu0 %3234
          %3237 = vset.pattern.permute.xlu0 5
          %3238 = vperm.xlu0 %3237, %v2963
          %v3239 = vpop.permute.xlu0 %3238
          %v3241 = vmul.f32 %v3235, %v3231
          %v3242 = vmul.f32 %v3239, %v3232
          %v3243 = vsel %vm916, %v3241, 0.0
          %v3244 = vsel %vm916, %v3242, 0.0
          %v3245 = vadd.f32 %v3243, %v3244
          %v3246 = vrot.slane %v3245, 4
          %v3247 = vadd.f32 %v3245, %v3246
          %v3248 = vrot.slane %v3247, 2
          %v3249 = vadd.f32 %v3247, %v3248
          %v3250 = vrot.slane %v3249, 1
          %v3251 = vadd.f32 %v3249, %v3250
          %v3252 = vlaneseq
          %v3253 = vshrl.u32 %v3252, 7
          %v3254 = vsub.s32 6, %v3253
          %v3255 = vrot.slane %v2831, %v3254
          %v3256 = vmul.f32 %v3255, %v2811
          %v3257 = vmul.f32 %v3255, %v2812
          %v3258 = vmul.f32 %v3256, 1.442695
          %v3259 = vpow.pop %v3258
          %v3260 = vmul.f32 %v3257, 1.442695
          %v3261 = vpow.pop %v3260
          %v3262 = vmul.f32 %v3259, %v3231
          %v3263 = vmul.f32 %v3261, %v3232
          %3264 = vset.pattern.permute.xlu0 6
          %3265 = vperm.xlu0 %3264, %v2948
          %v3266 = vpop.permute.xlu0 %3265
          %3268 = vset.pattern.permute.xlu0 6
          %3269 = vperm.xlu0 %3268, %v2953
          %v3270 = vpop.permute.xlu0 %3269
          %v3272 = vlaneseq
          %v3273 = vshrl.u32 %v3272, 7
          %v3274 = vsub.s32 6, %v3273
          %v3275 = vrot.slane %v2834, %v3274
          %v3276 = vmul.f32 %v3266, %v3275
          %v3277 = vmul.f32 %v3270, %v3275
          %v3278 = vadd.f32 %v3262, %v3276
          %v3279 = vadd.f32 %v3263, %v3277
          %3280 = vset.pattern.permute.xlu0 6
          %3281 = vperm.xlu0 %3280, %v2958
          %v3282 = vpop.permute.xlu0 %3281
          %3284 = vset.pattern.permute.xlu0 6
          %3285 = vperm.xlu0 %3284, %v2963
          %v3286 = vpop.permute.xlu0 %3285
          %v3288 = vmul.f32 %v3282, %v3278
          %v3289 = vmul.f32 %v3286, %v3279
          %v3290 = vsel %vm916, %v3288, 0.0
          %v3291 = vsel %vm916, %v3289, 0.0
          %v3292 = vadd.f32 %v3290, %v3291
          %v3293 = vrot.slane %v3292, 4
          %v3294 = vadd.f32 %v3292, %v3293
          %v3295 = vrot.slane %v3294, 2
          %v3296 = vadd.f32 %v3294, %v3295
          %v3297 = vrot.slane %v3296, 1
          %v3298 = vadd.f32 %v3296, %v3297
          %v3299 = vlaneseq
          %v3300 = vshrl.u32 %v3299, 7
          %v3301 = vsub.s32 7, %v3300
          %v3302 = vrot.slane %v2831, %v3301
          %v3303 = vmul.f32 %v3302, %v2811
          %v3304 = vmul.f32 %v3302, %v2812
          %v3305 = vmul.f32 %v3303, 1.442695
          %v3306 = vpow.pop %v3305
          %v3307 = vmul.f32 %v3304, 1.442695
          %v3308 = vpow.pop %v3307
          %v3309 = vmul.f32 %v3306, %v3278
          %v3310 = vmul.f32 %v3308, %v3279
          %3311 = vset.pattern.permute.xlu0 7
          %3312 = vperm.xlu0 %3311, %v2948
          %v3313 = vpop.permute.xlu0 %3312
          %3315 = vset.pattern.permute.xlu0 7
          %3316 = vperm.xlu0 %3315, %v2953
          %v3317 = vpop.permute.xlu0 %3316
          %v3319 = vlaneseq
          %v3320 = vshrl.u32 %v3319, 7
          %v3321 = vsub.s32 7, %v3320
          %v3322 = vrot.slane %v2834, %v3321
          %v3323 = vmul.f32 %v3313, %v3322
          %v3324 = vmul.f32 %v3317, %v3322
          %v3325 = vadd.f32 %v3309, %v3323
          %v3326 = vadd.f32 %v3310, %v3324
          %3327 = vset.pattern.permute.xlu0 7
          %3328 = vperm.xlu0 %3327, %v2958
          %v3329 = vpop.permute.xlu0 %3328
          %3331 = vset.pattern.permute.xlu0 7
          %3332 = vperm.xlu0 %3331, %v2963
          %v3333 = vpop.permute.xlu0 %3332
          %v3335 = vmul.f32 %v3329, %v3325
          %v3336 = vmul.f32 %v3333, %v3326
          %v3337 = vsel %vm916, %v3335, 0.0
          %v3338 = vsel %vm916, %v3336, 0.0
          %v3339 = vadd.f32 %v3337, %v3338
          %v3340 = vrot.slane %v3339, 4
          %v3341 = vadd.f32 %v3339, %v3340
          %v3342 = vrot.slane %v3341, 2
          %v3343 = vadd.f32 %v3341, %v3342
          %v3344 = vrot.slane %v3343, 1
          %v3345 = vadd.f32 %v3343, %v3344
          %vm3346 = vcmask 1040384
          %v3347 = vsel %vm3346, %v3016, %v3063
          %v3348 = vsel %vm623, %v3347, %v3110
          %vm3349 = vcmask 1042432
          %v3350 = vsel %vm3349, %v3348, %v3157
          %v3351 = vsel %vm456, %v3350, %v3204
          %v3352 = vsel %vm1500, %v3351, %v3251
          %v3353 = vsel %vm1300, %v3352, %v3298
          %v3354 = vsel %vm1098, %v3353, %v3345
          %3355 = vst.msk [vmem:[%s2830] sm:$0xff] %vm916, %v3354
        $region77: #{tpu_custom_call.1} parent=67 // loop_footer
          %s2826 = sadd.s32 1, %s2822
        $region78: #{tpu_custom_call.1} parent=67 // loop_footer_branch
          %2821 = sbr.rel target = $region74
        $region79: #{tpu_custom_call.1} parent=67 // loop_exit
          _
        %3356 = vst.msk [vmem:[#allocation2] sm:$0xff] %vm916, %v2827
        %3357 = vst.msk [vmem:[#allocation2 + $0x8] sm:$0xff] %vm916, %v2828
        %v3358 = vld [vmem:[#allocation6] sm:$0xff]
        %v3359 = vld [vmem:[#allocation6 + $0x8] sm:$0xff]
        %v3360 = vld [vmem:[#allocation6 + $0x10] sm:$0xff]
        %v3361 = vld [vmem:[#allocation6 + $0x18] sm:$0xff]
        %v3362 = vld [vmem:[#allocation6 + $0x20] sm:$0xff]
        %v3363 = vld [vmem:[#allocation6 + $0x28] sm:$0xff]
        %v3364 = vld [vmem:[#allocation6 + $0x30] sm:$0xff]
        %v3365 = vld [vmem:[#allocation6 + $0x38] sm:$0xff]
        %v3366 = vld [vmem:[#allocation6 + $0x40] sm:$0xff]
        %v3367 = vld [vmem:[#allocation6 + $0x48] sm:$0xff]
        %v3368 = vld [vmem:[#allocation6 + $0x50] sm:$0xff]
        %v3369 = vld [vmem:[#allocation6 + $0x58] sm:$0xff]
        %v3370 = vld [vmem:[#allocation6 + $0x60] sm:$0xff]
        %v3371 = vld [vmem:[#allocation6 + $0x68] sm:$0xff]
        %v3372 = vld [vmem:[#allocation6 + $0x70] sm:$0xff]
        %v3373 = vld [vmem:[#allocation6 + $0x78] sm:$0xff]
        %v3374 = vld [vmem:[#allocation6 + $0x80] sm:$0xff]
        %v3375 = vld [vmem:[#allocation6 + $0x88] sm:$0xff]
        %v3376 = vld [vmem:[#allocation6 + $0x90] sm:$0xff]
        %v3377 = vld [vmem:[#allocation6 + $0x98] sm:$0xff]
        %v3378 = vld [vmem:[#allocation6 + $0xa0] sm:$0xff]
        %v3379 = vld [vmem:[#allocation6 + $0xa8] sm:$0xff]
        %v3380 = vld [vmem:[#allocation6 + $0xb0] sm:$0xff]
        %v3381 = vld [vmem:[#allocation6 + $0xb8] sm:$0xff]
        %v3382 = vld [vmem:[#allocation6 + $0xc0] sm:$0xff]
        %v3383 = vld [vmem:[#allocation6 + $0xc8] sm:$0xff]
        %v3384 = vld [vmem:[#allocation6 + $0xd0] sm:$0xff]
        %v3385 = vld [vmem:[#allocation6 + $0xd8] sm:$0xff]
        %v3386 = vld [vmem:[#allocation6 + $0xe0] sm:$0xff]
        %v3387 = vld [vmem:[#allocation6 + $0xe8] sm:$0xff]
        %v3388 = vld [vmem:[#allocation6 + $0xf0] sm:$0xff]
        %v3389 = vld [vmem:[#allocation6 + $0xf8] sm:$0xff]
        %v3390 = vld [vmem:[#allocation4] sm:$0xff]
        %v3391 = vld [vmem:[#allocation4 + $0x8] sm:$0xff]
        %v3392 = vld [vmem:[#allocation4 + $0x10] sm:$0xff]
        %v3393 = vld [vmem:[#allocation4 + $0x18] sm:$0xff]
        %v3394 = vld [vmem:[#allocation4 + $0x20] sm:$0xff]
        %v3395 = vld [vmem:[#allocation4 + $0x28] sm:$0xff]
        %v3396 = vld [vmem:[#allocation4 + $0x30] sm:$0xff]
        %v3397 = vld [vmem:[#allocation4 + $0x38] sm:$0xff]
        %v3398 = vld [vmem:[#allocation4 + $0x40] sm:$0xff]
        %v3399 = vld [vmem:[#allocation4 + $0x48] sm:$0xff]
        %v3400 = vld [vmem:[#allocation4 + $0x50] sm:$0xff]
        %v3401 = vld [vmem:[#allocation4 + $0x58] sm:$0xff]
        %v3402 = vld [vmem:[#allocation4 + $0x60] sm:$0xff]
        %v3403 = vld [vmem:[#allocation4 + $0x68] sm:$0xff]
        %v3404 = vld [vmem:[#allocation4 + $0x70] sm:$0xff]
        %v3405 = vld [vmem:[#allocation4 + $0x78] sm:$0xff]
        %v3406 = vld [vmem:[#allocation4 + $0x80] sm:$0xff]
        %v3407 = vld [vmem:[#allocation4 + $0x88] sm:$0xff]
        %v3408 = vld [vmem:[#allocation4 + $0x90] sm:$0xff]
        %v3409 = vld [vmem:[#allocation4 + $0x98] sm:$0xff]
        %v3410 = vld [vmem:[#allocation4 + $0xa0] sm:$0xff]
        %v3411 = vld [vmem:[#allocation4 + $0xa8] sm:$0xff]
        %v3412 = vld [vmem:[#allocation4 + $0xb0] sm:$0xff]
        %v3413 = vld [vmem:[#allocation4 + $0xb8] sm:$0xff]
        %v3414 = vld [vmem:[#allocation4 + $0xc0] sm:$0xff]
        %v3415 = vld [vmem:[#allocation4 + $0xc8] sm:$0xff]
        %v3416 = vld [vmem:[#allocation4 + $0xd0] sm:$0xff]
        %v3417 = vld [vmem:[#allocation4 + $0xd8] sm:$0xff]
        %v3418 = vld [vmem:[#allocation4 + $0xe0] sm:$0xff]
        %v3419 = vld [vmem:[#allocation4 + $0xe8] sm:$0xff]
        %v3420 = vld [vmem:[#allocation4 + $0xf0] sm:$0xff]
        %v3421 = vld [vmem:[#allocation4 + $0xf8] sm:$0xff]
        %v3422 = vld [vmem:[%s10] sm:$0x1]
        %v3424 = vlaneseq
        %v3425 = vshrl.u32 %v3424, 7
        %v3426 = vsub.s32 0, %v3425
        %v3427 = vrot.slane %v3422, %v3426
        %v3429 = vmul.f32 %v3390, %v3427
        %v3430 = vmul.f32 %v3391, %v3427
        %v3431 = vmul.f32 %v3392, %v3427
        %v3432 = vmul.f32 %v3393, %v3427
        %v3433 = vmul.f32 %v3394, %v3427
        %v3434 = vmul.f32 %v3395, %v3427
        %v3435 = vmul.f32 %v3396, %v3427
        %v3436 = vmul.f32 %v3397, %v3427
        %v3437 = vmul.f32 %v3398, %v3427
        %v3438 = vmul.f32 %v3399, %v3427
        %v3439 = vmul.f32 %v3400, %v3427
        %v3440 = vmul.f32 %v3401, %v3427
        %v3441 = vmul.f32 %v3402, %v3427
        %v3442 = vmul.f32 %v3403, %v3427
        %v3443 = vmul.f32 %v3404, %v3427
        %v3444 = vmul.f32 %v3405, %v3427
        %v3445 = vmul.f32 %v3406, %v3427
        %v3446 = vmul.f32 %v3407, %v3427
        %v3447 = vmul.f32 %v3408, %v3427
        %v3448 = vmul.f32 %v3409, %v3427
        %v3449 = vmul.f32 %v3410, %v3427
        %v3450 = vmul.f32 %v3411, %v3427
        %v3451 = vmul.f32 %v3412, %v3427
        %v3452 = vmul.f32 %v3413, %v3427
        %v3453 = vmul.f32 %v3414, %v3427
        %v3454 = vmul.f32 %v3415, %v3427
        %v3455 = vmul.f32 %v3416, %v3427
        %v3456 = vmul.f32 %v3417, %v3427
        %v3457 = vmul.f32 %v3418, %v3427
        %v3458 = vmul.f32 %v3419, %v3427
        %v3459 = vmul.f32 %v3420, %v3427
        %v3460 = vmul.f32 %v3421, %v3427
        %v3461 = vadd.f32 %v3358, %v3429
        %v3462 = vadd.f32 %v3359, %v3430
        %v3463 = vadd.f32 %v3360, %v3431
        %v3464 = vadd.f32 %v3361, %v3432
        %v3465 = vadd.f32 %v3362, %v3433
        %v3466 = vadd.f32 %v3363, %v3434
        %v3467 = vadd.f32 %v3364, %v3435
        %v3468 = vadd.f32 %v3365, %v3436
        %v3469 = vadd.f32 %v3366, %v3437
        %v3470 = vadd.f32 %v3367, %v3438
        %v3471 = vadd.f32 %v3368, %v3439
        %v3472 = vadd.f32 %v3369, %v3440
        %v3473 = vadd.f32 %v3370, %v3441
        %v3474 = vadd.f32 %v3371, %v3442
        %v3475 = vadd.f32 %v3372, %v3443
        %v3476 = vadd.f32 %v3373, %v3444
        %v3477 = vadd.f32 %v3374, %v3445
        %v3478 = vadd.f32 %v3375, %v3446
        %v3479 = vadd.f32 %v3376, %v3447
        %v3480 = vadd.f32 %v3377, %v3448
        %v3481 = vadd.f32 %v3378, %v3449
        %v3482 = vadd.f32 %v3379, %v3450
        %v3483 = vadd.f32 %v3380, %v3451
        %v3484 = vadd.f32 %v3381, %v3452
        %v3485 = vadd.f32 %v3382, %v3453
        %v3486 = vadd.f32 %v3383, %v3454
        %v3487 = vadd.f32 %v3384, %v3455
        %v3488 = vadd.f32 %v3385, %v3456
        %v3489 = vadd.f32 %v3386, %v3457
        %v3490 = vadd.f32 %v3387, %v3458
        %v3491 = vadd.f32 %v3388, %v3459
        %v3492 = vadd.f32 %v3389, %v3460
        %v3493 = vld [vmem:[#allocation5] sm:$0xff]
        %v3494 = vld [vmem:[#allocation5 + $0x8] sm:$0xff]
        %v3495 = vld [vmem:[#allocation5 + $0x10] sm:$0xff]
        %v3496 = vld [vmem:[#allocation5 + $0x18] sm:$0xff]
        %v3497 = vld [vmem:[#allocation5 + $0x20] sm:$0xff]
        %v3498 = vld [vmem:[#allocation5 + $0x28] sm:$0xff]
        %v3499 = vld [vmem:[#allocation5 + $0x30] sm:$0xff]
        %v3500 = vld [vmem:[#allocation5 + $0x38] sm:$0xff]
        %v3501 = vld [vmem:[#allocation5 + $0x40] sm:$0xff]
        %v3502 = vld [vmem:[#allocation5 + $0x48] sm:$0xff]
        %v3503 = vld [vmem:[#allocation5 + $0x50] sm:$0xff]
        %v3504 = vld [vmem:[#allocation5 + $0x58] sm:$0xff]
        %v3505 = vld [vmem:[#allocation5 + $0x60] sm:$0xff]
        %v3506 = vld [vmem:[#allocation5 + $0x68] sm:$0xff]
        %v3507 = vld [vmem:[#allocation5 + $0x70] sm:$0xff]
        %v3508 = vld [vmem:[#allocation5 + $0x78] sm:$0xff]
        %v3509 = vld [vmem:[#allocation5 + $0x80] sm:$0xff]
        %v3510 = vld [vmem:[#allocation5 + $0x88] sm:$0xff]
        %v3511 = vld [vmem:[#allocation5 + $0x90] sm:$0xff]
        %v3512 = vld [vmem:[#allocation5 + $0x98] sm:$0xff]
        %v3513 = vld [vmem:[#allocation5 + $0xa0] sm:$0xff]
        %v3514 = vld [vmem:[#allocation5 + $0xa8] sm:$0xff]
        %v3515 = vld [vmem:[#allocation5 + $0xb0] sm:$0xff]
        %v3516 = vld [vmem:[#allocation5 + $0xb8] sm:$0xff]
        %v3517 = vld [vmem:[#allocation5 + $0xc0] sm:$0xff]
        %v3518 = vld [vmem:[#allocation5 + $0xc8] sm:$0xff]
        %v3519 = vld [vmem:[#allocation5 + $0xd0] sm:$0xff]
        %v3520 = vld [vmem:[#allocation5 + $0xd8] sm:$0xff]
        %v3521 = vld [vmem:[#allocation5 + $0xe0] sm:$0xff]
        %v3522 = vld [vmem:[#allocation5 + $0xe8] sm:$0xff]
        %v3523 = vld [vmem:[#allocation5 + $0xf0] sm:$0xff]
        %v3524 = vld [vmem:[#allocation5 + $0xf8] sm:$0xff]
        %v3525 = vxor.u32 %v3493, 2147483648
        %v3526 = vxor.u32 %v3494, 2147483648
        %v3527 = vxor.u32 %v3495, 2147483648
        %v3528 = vxor.u32 %v3496, 2147483648
        %v3529 = vxor.u32 %v3497, 2147483648
        %v3530 = vxor.u32 %v3498, 2147483648
        %v3531 = vxor.u32 %v3499, 2147483648
        %v3532 = vxor.u32 %v3500, 2147483648
        %v3533 = vxor.u32 %v3501, 2147483648
        %v3534 = vxor.u32 %v3502, 2147483648
        %v3535 = vxor.u32 %v3503, 2147483648
        %v3536 = vxor.u32 %v3504, 2147483648
        %v3537 = vxor.u32 %v3505, 2147483648
        %v3538 = vxor.u32 %v3506, 2147483648
        %v3539 = vxor.u32 %v3507, 2147483648
        %v3540 = vxor.u32 %v3508, 2147483648
        %v3541 = vxor.u32 %v3509, 2147483648
        %v3542 = vxor.u32 %v3510, 2147483648
        %v3543 = vxor.u32 %v3511, 2147483648
        %v3544 = vxor.u32 %v3512, 2147483648
        %v3545 = vxor.u32 %v3513, 2147483648
        %v3546 = vxor.u32 %v3514, 2147483648
        %v3547 = vxor.u32 %v3515, 2147483648
        %v3548 = vxor.u32 %v3516, 2147483648
        %v3549 = vxor.u32 %v3517, 2147483648
        %v3550 = vxor.u32 %v3518, 2147483648
        %v3551 = vxor.u32 %v3519, 2147483648
        %v3552 = vxor.u32 %v3520, 2147483648
        %v3553 = vxor.u32 %v3521, 2147483648
        %v3554 = vxor.u32 %v3522, 2147483648
        %v3555 = vxor.u32 %v3523, 2147483648
        %v3556 = vxor.u32 %v3524, 2147483648
        %v3557 = vmul.f32 %v3525, 1.442695
        %v3558 = vpow.pop %v3557
        %v3559 = vmul.f32 %v3526, 1.442695
        %v3560 = vpow.pop %v3559
        %v3561 = vmul.f32 %v3527, 1.442695
        %v3562 = vpow.pop %v3561
        %v3563 = vmul.f32 %v3528, 1.442695
        %v3564 = vpow.pop %v3563
        %v3565 = vmul.f32 %v3529, 1.442695
        %v3566 = vpow.pop %v3565
        %v3567 = vmul.f32 %v3530, 1.442695
        %v3568 = vpow.pop %v3567
        %v3569 = vmul.f32 %v3531, 1.442695
        %v3570 = vpow.pop %v3569
        %v3571 = vmul.f32 %v3532, 1.442695
        %v3572 = vpow.pop %v3571
        %v3573 = vmul.f32 %v3533, 1.442695
        %v3574 = vpow.pop %v3573
        %v3575 = vmul.f32 %v3534, 1.442695
        %v3576 = vpow.pop %v3575
        %v3577 = vmul.f32 %v3535, 1.442695
        %v3578 = vpow.pop %v3577
        %v3579 = vmul.f32 %v3536, 1.442695
        %v3580 = vpow.pop %v3579
        %v3581 = vmul.f32 %v3537, 1.442695
        %v3582 = vpow.pop %v3581
        %v3583 = vmul.f32 %v3538, 1.442695
        %v3584 = vpow.pop %v3583
        %v3585 = vmul.f32 %v3539, 1.442695
        %v3586 = vpow.pop %v3585
        %v3587 = vmul.f32 %v3540, 1.442695
        %v3588 = vpow.pop %v3587
        %v3589 = vmul.f32 %v3541, 1.442695
        %v3590 = vpow.pop %v3589
        %v3591 = vmul.f32 %v3542, 1.442695
        %v3592 = vpow.pop %v3591
        %v3593 = vmul.f32 %v3543, 1.442695
        %v3594 = vpow.pop %v3593
        %v3595 = vmul.f32 %v3544, 1.442695
        %v3596 = vpow.pop %v3595
        %v3597 = vmul.f32 %v3545, 1.442695
        %v3598 = vpow.pop %v3597
        %v3599 = vmul.f32 %v3546, 1.442695
        %v3600 = vpow.pop %v3599
        %v3601 = vmul.f32 %v3547, 1.442695
        %v3602 = vpow.pop %v3601
        %v3603 = vmul.f32 %v3548, 1.442695
        %v3604 = vpow.pop %v3603
        %v3605 = vmul.f32 %v3549, 1.442695
        %v3606 = vpow.pop %v3605
        %v3607 = vmul.f32 %v3550, 1.442695
        %v3608 = vpow.pop %v3607
        %v3609 = vmul.f32 %v3551, 1.442695
        %v3610 = vpow.pop %v3609
        %v3611 = vmul.f32 %v3552, 1.442695
        %v3612 = vpow.pop %v3611
        %v3613 = vmul.f32 %v3553, 1.442695
        %v3614 = vpow.pop %v3613
        %v3615 = vmul.f32 %v3554, 1.442695
        %v3616 = vpow.pop %v3615
        %v3617 = vmul.f32 %v3555, 1.442695
        %v3618 = vpow.pop %v3617
        %v3619 = vmul.f32 %v3556, 1.442695
        %v3620 = vpow.pop %v3619
        %v3621 = vadd.f32 %v3558, 1.0
        %v3622 = vadd.f32 %v3560, 1.0
        %v3623 = vadd.f32 %v3562, 1.0
        %v3624 = vadd.f32 %v3564, 1.0
        %v3625 = vadd.f32 %v3566, 1.0
        %v3626 = vadd.f32 %v3568, 1.0
        %v3627 = vadd.f32 %v3570, 1.0
        %v3628 = vadd.f32 %v3572, 1.0
        %v3629 = vadd.f32 %v3574, 1.0
        %v3630 = vadd.f32 %v3576, 1.0
        %v3631 = vadd.f32 %v3578, 1.0
        %v3632 = vadd.f32 %v3580, 1.0
        %v3633 = vadd.f32 %v3582, 1.0
        %v3634 = vadd.f32 %v3584, 1.0
        %v3635 = vadd.f32 %v3586, 1.0
        %v3636 = vadd.f32 %v3588, 1.0
        %v3637 = vadd.f32 %v3590, 1.0
        %v3638 = vadd.f32 %v3592, 1.0
        %v3639 = vadd.f32 %v3594, 1.0
        %v3640 = vadd.f32 %v3596, 1.0
        %v3641 = vadd.f32 %v3598, 1.0
        %v3642 = vadd.f32 %v3600, 1.0
        %v3643 = vadd.f32 %v3602, 1.0
        %v3644 = vadd.f32 %v3604, 1.0
        %v3645 = vadd.f32 %v3606, 1.0
        %v3646 = vadd.f32 %v3608, 1.0
        %v3647 = vadd.f32 %v3610, 1.0
        %v3648 = vadd.f32 %v3612, 1.0
        %v3649 = vadd.f32 %v3614, 1.0
        %v3650 = vadd.f32 %v3616, 1.0
        %v3651 = vadd.f32 %v3618, 1.0
        %v3652 = vadd.f32 %v3620, 1.0
        %v3653 = vrcp.pop %v3621
        %v3654 = vmul.f32 1.0, %v3653
        %v3655 = vrcp.pop %v3622
        %v3656 = vmul.f32 1.0, %v3655
        %v3657 = vrcp.pop %v3623
        %v3658 = vmul.f32 1.0, %v3657
        %v3659 = vrcp.pop %v3624
        %v3660 = vmul.f32 1.0, %v3659
        %v3661 = vrcp.pop %v3625
        %v3662 = vmul.f32 1.0, %v3661
        %v3663 = vrcp.pop %v3626
        %v3664 = vmul.f32 1.0, %v3663
        %v3665 = vrcp.pop %v3627
        %v3666 = vmul.f32 1.0, %v3665
        %v3667 = vrcp.pop %v3628
        %v3668 = vmul.f32 1.0, %v3667
        %v3669 = vrcp.pop %v3629
        %v3670 = vmul.f32 1.0, %v3669
        %v3671 = vrcp.pop %v3630
        %v3672 = vmul.f32 1.0, %v3671
        %v3673 = vrcp.pop %v3631
        %v3674 = vmul.f32 1.0, %v3673
        %v3675 = vrcp.pop %v3632
        %v3676 = vmul.f32 1.0, %v3675
        %v3677 = vrcp.pop %v3633
        %v3678 = vmul.f32 1.0, %v3677
        %v3679 = vrcp.pop %v3634
        %v3680 = vmul.f32 1.0, %v3679
        %v3681 = vrcp.pop %v3635
        %v3682 = vmul.f32 1.0, %v3681
        %v3683 = vrcp.pop %v3636
        %v3684 = vmul.f32 1.0, %v3683
        %v3685 = vrcp.pop %v3637
        %v3686 = vmul.f32 1.0, %v3685
        %v3687 = vrcp.pop %v3638
        %v3688 = vmul.f32 1.0, %v3687
        %v3689 = vrcp.pop %v3639
        %v3690 = vmul.f32 1.0, %v3689
        %v3691 = vrcp.pop %v3640
        %v3692 = vmul.f32 1.0, %v3691
        %v3693 = vrcp.pop %v3641
        %v3694 = vmul.f32 1.0, %v3693
        %v3695 = vrcp.pop %v3642
        %v3696 = vmul.f32 1.0, %v3695
        %v3697 = vrcp.pop %v3643
        %v3698 = vmul.f32 1.0, %v3697
        %v3699 = vrcp.pop %v3644
        %v3700 = vmul.f32 1.0, %v3699
        %v3701 = vrcp.pop %v3645
        %v3702 = vmul.f32 1.0, %v3701
        %v3703 = vrcp.pop %v3646
        %v3704 = vmul.f32 1.0, %v3703
        %v3705 = vrcp.pop %v3647
        %v3706 = vmul.f32 1.0, %v3705
        %v3707 = vrcp.pop %v3648
        %v3708 = vmul.f32 1.0, %v3707
        %v3709 = vrcp.pop %v3649
        %v3710 = vmul.f32 1.0, %v3709
        %v3711 = vrcp.pop %v3650
        %v3712 = vmul.f32 1.0, %v3711
        %v3713 = vrcp.pop %v3651
        %v3714 = vmul.f32 1.0, %v3713
        %v3715 = vrcp.pop %v3652
        %v3716 = vmul.f32 1.0, %v3715
        %v3717 = vmul.f32 %v3493, %v3654
        %v3718 = vmul.f32 %v3494, %v3656
        %v3719 = vmul.f32 %v3495, %v3658
        %v3720 = vmul.f32 %v3496, %v3660
        %v3721 = vmul.f32 %v3497, %v3662
        %v3722 = vmul.f32 %v3498, %v3664
        %v3723 = vmul.f32 %v3499, %v3666
        %v3724 = vmul.f32 %v3500, %v3668
        %v3725 = vmul.f32 %v3501, %v3670
        %v3726 = vmul.f32 %v3502, %v3672
        %v3727 = vmul.f32 %v3503, %v3674
        %v3728 = vmul.f32 %v3504, %v3676
        %v3729 = vmul.f32 %v3505, %v3678
        %v3730 = vmul.f32 %v3506, %v3680
        %v3731 = vmul.f32 %v3507, %v3682
        %v3732 = vmul.f32 %v3508, %v3684
        %v3733 = vmul.f32 %v3509, %v3686
        %v3734 = vmul.f32 %v3510, %v3688
        %v3735 = vmul.f32 %v3511, %v3690
        %v3736 = vmul.f32 %v3512, %v3692
        %v3737 = vmul.f32 %v3513, %v3694
        %v3738 = vmul.f32 %v3514, %v3696
        %v3739 = vmul.f32 %v3515, %v3698
        %v3740 = vmul.f32 %v3516, %v3700
        %v3741 = vmul.f32 %v3517, %v3702
        %v3742 = vmul.f32 %v3518, %v3704
        %v3743 = vmul.f32 %v3519, %v3706
        %v3744 = vmul.f32 %v3520, %v3708
        %v3745 = vmul.f32 %v3521, %v3710
        %v3746 = vmul.f32 %v3522, %v3712
        %v3747 = vmul.f32 %v3523, %v3714
        %v3748 = vmul.f32 %v3524, %v3716
        %v3749 = vmul.f32 %v3461, %v3717
        %v3750 = vmul.f32 %v3462, %v3718
        %v3751 = vmul.f32 %v3463, %v3719
        %v3752 = vmul.f32 %v3464, %v3720
        %v3753 = vmul.f32 %v3465, %v3721
        %v3754 = vmul.f32 %v3466, %v3722
        %v3755 = vmul.f32 %v3467, %v3723
        %v3756 = vmul.f32 %v3468, %v3724
        %v3757 = vmul.f32 %v3469, %v3725
        %v3758 = vmul.f32 %v3470, %v3726
        %v3759 = vmul.f32 %v3471, %v3727
        %v3760 = vmul.f32 %v3472, %v3728
        %v3761 = vmul.f32 %v3473, %v3729
        %v3762 = vmul.f32 %v3474, %v3730
        %v3763 = vmul.f32 %v3475, %v3731
        %v3764 = vmul.f32 %v3476, %v3732
        %v3765 = vmul.f32 %v3477, %v3733
        %v3766 = vmul.f32 %v3478, %v3734
        %v3767 = vmul.f32 %v3479, %v3735
        %v3768 = vmul.f32 %v3480, %v3736
        %v3769 = vmul.f32 %v3481, %v3737
        %v3770 = vmul.f32 %v3482, %v3738
        %v3771 = vmul.f32 %v3483, %v3739
        %v3772 = vmul.f32 %v3484, %v3740
        %v3773 = vmul.f32 %v3485, %v3741
        %v3774 = vmul.f32 %v3486, %v3742
        %v3775 = vmul.f32 %v3487, %v3743
        %v3776 = vmul.f32 %v3488, %v3744
        %v3777 = vmul.f32 %v3489, %v3745
        %v3778 = vmul.f32 %v3490, %v3746
        %v3779 = vmul.f32 %v3491, %v3747
        %v3780 = vmul.f32 %v3492, %v3748
        %v3781 = vld [vmem:[%s11] sm:$0x3]
        %v3782 = vpack.c.bf16 %v3750, %v3749
        %v3783 = vpack.c.bf16 %v3752, %v3751
        %v3784 = vpack.c.bf16 %v3754, %v3753
        %v3785 = vpack.c.bf16 %v3756, %v3755
        %v3786 = vpack.c.bf16 %v3758, %v3757
        %v3787 = vpack.c.bf16 %v3760, %v3759
        %v3788 = vpack.c.bf16 %v3762, %v3761
        %v3789 = vpack.c.bf16 %v3764, %v3763
        %v3790 = vpack.c.bf16 %v3766, %v3765
        %v3791 = vpack.c.bf16 %v3768, %v3767
        %v3792 = vpack.c.bf16 %v3770, %v3769
        %v3793 = vpack.c.bf16 %v3772, %v3771
        %v3794 = vpack.c.bf16 %v3774, %v3773
        %v3795 = vpack.c.bf16 %v3776, %v3775
        %v3796 = vpack.c.bf16 %v3778, %v3777
        %v3797 = vpack.c.bf16 %v3780, %v3779
        %v3799 = vsel %vm916, %v3781, 0
        %v3802 = vsel %vm916, %v3782, 0
        %v3805 = vsel %vm916, %v3783, 0
        %v3808 = vsel %vm916, %v3784, 0
        %v3811 = vsel %vm916, %v3785, 0
        %v3814 = vsel %vm916, %v3786, 0
        %v3817 = vsel %vm916, %v3787, 0
        %v3820 = vsel %vm916, %v3788, 0
        %v3823 = vsel %vm916, %v3789, 0
        %v3826 = vsel %vm916, %v3790, 0
        %v3829 = vsel %vm916, %v3791, 0
        %v3832 = vsel %vm916, %v3792, 0
        %v3835 = vsel %vm916, %v3793, 0
        %v3838 = vsel %vm916, %v3794, 0
        %v3841 = vsel %vm916, %v3795, 0
        %v3844 = vsel %vm916, %v3796, 0
        %v3847 = vsel %vm916, %v3797, 0
        %3849 = vmatprep.subr.bf16.mxu0 0
        %3850 = vmatpush1.bf16.xpose.msra.mxu0 %v3802
        %3851 = vmatprep.subr.bf16.mxu0 0
        %3852 = vmatpush1.bf16.xpose.msra.mxu0 %v3805
        %3853 = vmatprep.subr.bf16.mxu0 0
        %3854 = vmatpush1.bf16.xpose.msra.mxu0 %v3808
        %3855 = vmatprep.subr.bf16.mxu0 0
        %3856 = vmatpush1.bf16.xpose.msra.mxu0 %v3811
        %3857 = vmatprep.subr.bf16.mxu0 0
        %3858 = vmatpush1.bf16.xpose.msra.mxu0 %v3814
        %3859 = vmatprep.subr.bf16.mxu0 0
        %3860 = vmatpush1.bf16.xpose.msra.mxu0 %v3817
        %3861 = vmatprep.subr.bf16.mxu0 0
        %3862 = vmatpush1.bf16.xpose.msra.mxu0 %v3820
        %3863 = vmatprep.subr.bf16.mxu0 0
        %3864 = vmatpush1.bf16.xpose.msra.mxu0 %v3823
        %3865 = vmatprep.subr.bf16.mxu0 0
        %3866 = vmatpush1.bf16.xpose.msra.mxu0 %v3826
        %3867 = vmatprep.subr.bf16.mxu0 0
        %3868 = vmatpush1.bf16.xpose.msra.mxu0 %v3829
        %3869 = vmatprep.subr.bf16.mxu0 0
        %3870 = vmatpush1.bf16.xpose.msra.mxu0 %v3832
        %3871 = vmatprep.subr.bf16.mxu0 0
        %3872 = vmatpush1.bf16.xpose.msra.mxu0 %v3835
        %3873 = vmatprep.subr.bf16.mxu0 0
        %3874 = vmatpush1.bf16.xpose.msra.mxu0 %v3838
        %3875 = vmatprep.subr.bf16.mxu0 0
        %3876 = vmatpush1.bf16.xpose.msra.mxu0 %v3841
        %3877 = vmatprep.subr.bf16.mxu0 0
        %3878 = vmatpush1.bf16.xpose.msra.mxu0 %v3844
        %3879 = vmatprep.subr.bf16.mxu0 0
        %3880 = vmatpush1.bf16.xpose.msra.mxu0 %v3847
        %3881 = vmatprep.mubr.bf16.mxu0 0
        %3882 = vmatmul.mubr.bf16.gmra.mrb[0].mxu0 %v3799
        %v3883 = vpop.f32.mrb[0].mxu0
        %v3884 = vadd.f32 0.0, %v3883
        %v3885 = vpop.f32.mrb[0].mxu0
        %v3886 = vadd.f32 0.0, %v3885
        %v3887 = vpop.f32.mrb[0].mxu0
        %v3888 = vpop.f32.mrb[0].mxu0
        %3889 = vdwg.mxu0
        %v3892 = vcombine.low %v3884, %v3886
        %3894 = vst [vmem:[%s431] sm:$0xff] %v3892
        %s3895 = sand.u32 %s307, 1
        %s3896 = scalar_lea.sflag [#allocation9], %s3895
        %s3897 = sand.u32 %s307, 1
        %s3898 = smul.addr %s3897, 8
        %s3899 = scalar_lea.vmem [#allocation8], %s3898
        // Predicated region
        $region80: #{tpu_custom_call.1} parent=67 // pred_check
          %p3900 = pneg %p317
        $region81: #{tpu_custom_call.1} parent=67 // pred_check_branch
          %3902 = sbr.rel (%p3900) target = $region83
        $region82: #{tpu_custom_call.1} parent=67 // pred_region
          %s3903 = smul.u32 2, %s31
          %s3905 = ssub.s32 128, 128
          %3906 = vsyncadd %s3896, %s3905
          %s3907 = smul.addr %s30, 2
          %s3908 = sadd.s32 %s3903, %s3907
          %s3909 = smul.addr %s3908, 64
          %s3910 = scalar_lea.hbm %s12, %s3909
          %s3912 = sshll.u32 %s3899, 4
          %s3913 = int_to_ptr.vmem [resolvable:$true] %s3912
          %3915 = dma.vmem_to_hbm [thread:$0]  %s3913, 128, %s3910, %s3896
        $region83: #{tpu_custom_call.1} parent=67 // pred_fallthru
          _
      $region68: #{tpu_custom_call.1} parent=5 // pred_fallthru
        _
      %p3916 = scmp.le.s32.totalorder 2, %s21
      // Predicated region
      $region84: #{tpu_custom_call.1} parent=5 // pred_check
        %p3917 = pneg %p3916
      $region85: #{tpu_custom_call.1} parent=5 // pred_check_branch
        %3919 = sbr.rel (%p3917) target = $region87
      $region86: #{tpu_custom_call.1} parent=5 // pred_region
        %s3920 = ssub.s32 %s21, 2
        // Predicated region
        $region88: #{tpu_custom_call.1} parent=86 // pred_check
          %p3921 = pneg %p323
        $region89: #{tpu_custom_call.1} parent=86 // pred_check_branch
          %3923 = sbr.rel (%p3921) target = $region91
        $region90: #{tpu_custom_call.1} parent=86 // pred_region
          %s3924 = sand.u32 %s308, 1
          %s3925 = scalar_lea.sflag [#allocation9], %s3924
          %s3926 = sand.u32 %s308, 1
          %s3927 = smul.addr %s3926, 8
          %s3928 = scalar_lea.vmem [#allocation8], %s3927
          %3929 = dma.done %s3925, 128
        $region91: #{tpu_custom_call.1} parent=86 // pred_fallthru
          _
      $region87: #{tpu_custom_call.1} parent=5 // pred_fallthru
        _
    $region6: #{tpu_custom_call.1} parent=1 // loop_footer
      %s25 = sadd.s32 1, %s21
    $region7: #{tpu_custom_call.1} parent=1 // loop_footer_branch
      %20 = sbr.rel target = $region3
    $region8: #{tpu_custom_call.1} parent=1 // loop_exit
      _
    %3930 = vsyncpa [#allocation9], 1
    %s3931 = scalar_lea.sflag [#allocation9], 1
    %3932 = vsyncpa %s3931, 1

</llo_original>
